<compile_context>
chip_gen: v7x
topology: tpu7x:2x2x1
jax: 0.10.0
libtpu: 0.0.40
codegen_flags: <defaults>
</compile_context>

<pallas_src>
import jax
import jax.numpy as jnp
from jax.experimental import pallas as pl
from jax.experimental.pallas import tpu as pltpu


GATE_BLOCK = 128  # per-gate lane block (>= hidden_dim, multiple of 128)


# ----------------------------- Pallas kernel --------------------------------
def _lstm_kernel(x_ref, wx0_ref, b0_ref, wh0_ref, w1_ref, b1_ref,
                 wlin_ref, blin_ref, out_ref):
    GB = GATE_BLOCK
    seq = x_ref.shape[0]

    # Hoisted layer-0 input projection for every timestep (one MXU call,
    # bias already folded into b0).
    xproj = (jnp.dot(x_ref[...], wx0_ref[...], preferred_element_type=jnp.float32)
             + b0_ref[...])                                   # [seq, 4*GB]

    # Weights live in VMEM for the whole call; load once (hoisted out of loop).
    wh0 = wh0_ref[...]                                        # [GB,   4*GB]
    w1 = w1_ref[...]                                          # [2*GB, 4*GB]
    b1 = b1_ref[...]                                          # [1,    4*GB]

    def apply_gates(g, c):
        # Each slice is a full 128-lane block -> unmasked full-vreg EUP/VPU ops.
        i = jax.nn.sigmoid(g[:, 0 * GB:1 * GB])
        f = jax.nn.sigmoid(g[:, 1 * GB:2 * GB])
        gg = jnp.tanh(g[:, 2 * GB:3 * GB])
        o = jax.nn.sigmoid(g[:, 3 * GB:4 * GB])
        c_new = f * c + i * gg
        h_new = o * jnp.tanh(c_new)
        return h_new, c_new

    zeros = jnp.zeros((1, GB), jnp.float32)                   # zero hidden_cell
    h0, c0, h1, c1 = zeros, zeros, zeros, zeros

    # seq is a trace-time constant: fully unroll the recurrence so the scheduler
    # can overlap work from adjacent timesteps; xproj[t] becomes a static slice.
    for t in range(seq):
        # Layer 0: only the recurrent matmul is on the per-step critical path.
        g0 = xproj[t:t + 1, :] + jnp.dot(h0, wh0,
                                         preferred_element_type=jnp.float32)
        h0, c0 = apply_gates(g0, c0)

        # Layer 1: ih/hh matmuls fused via K-concatenation with stacked weights.
        inp1 = jnp.concatenate([h0, h1], axis=1)              # [1, 2*GB]
        g1 = jnp.dot(inp1, w1, preferred_element_type=jnp.float32) + b1
        h1, c1 = apply_gates(g1, c1)

    # Final linear on the last timestep of the top layer.
    out_ref[...] = (jnp.dot(h1, wlin_ref[...], preferred_element_type=jnp.float32)
                    + blin_ref[...])


# ------------------------------ host wrapper ---------------------------------
def lstm_forward(x, packed_params):
    """x: [seq_len, input_dim] float32 -> [output_dim] float32."""
    assert x.shape[0] >= 1, "sequence length must be >= 1"
    (wx0p, b0p, wh0p, w1p, b1p, wlinp, blin) = packed_params
    output_dim = wlinp.shape[1]

    vmem_spec = pl.BlockSpec(memory_space=pltpu.MemorySpace.VMEM)
    out = pl.pallas_call(
        _lstm_kernel,
        out_shape=jax.ShapeDtypeStruct((1, output_dim), jnp.float32),
        in_specs=[vmem_spec] * 8,
        out_specs=vmem_spec,
    )(x, wx0p, b0p, wh0p, w1p, b1p, wlinp, blin)
    return out[0]                                    # matches PyTorch `out[-1]`


# --------------------------- parameter construction --------------------------
def make_params(key, input_dim, hidden_dim, output_dim):
    """Deterministic init mirroring PyTorch's U(-1/sqrt(H), 1/sqrt(H)).

    Logical (unpadded) layout: gate weights are [in_features, 4*H], gate order
    (i, f, g, o); b_ih + b_hh are fused into a single [1, 4*H] bias.
    """
    H = hidden_dim
    k = 1.0 / jnp.sqrt(jnp.float32(H))
    keys = jax.random.split(key, 11)

    def u(kk, shape):
        return jax.random.uniform(kk, shape, jnp.float32, -k, k)

    wih0 = u(keys[0], (input_dim, 4 * H))
    whh0 = u(keys[1], (H, 4 * H))
    b0 = u(keys[2], (1, 4 * H)) + u(keys[3], (1, 4 * H))
    wih1 = u(keys[4], (H, 4 * H))
    whh1 = u(keys[5], (H, 4 * H))
    b1 = u(keys[6], (1, 4 * H)) + u(keys[7], (1, 4 * H))
    wlin = u(keys[8], (H, output_dim))
    blin = u(keys[9], (1, output_dim))
    return (wih0, whh0, b0, wih1, whh1, b1, wlin, blin)


def _pad_gates(w, H, GB=GATE_BLOCK):
    """[K, 4*H] (gate order i,f,g,o) -> [K, 4*GB] with gate k in cols [k*GB, k*GB+H)."""
    K = w.shape[0]
    wp = jnp.zeros((K, 4 * GB), jnp.float32)
    for g in range(4):
        wp = wp.at[:, g * GB:g * GB + H].set(w[:, g * H:(g + 1) * H])
    return wp


def pack_params(params, hidden_dim, GB=GATE_BLOCK):
    """Host-side repacking into the kernel layout.

    * gates zero-padded to their own 128-lane block,
    * layer-0 recurrent weight row-padded to GB rows (h0 carried as [1, GB]),
    * layer-1 ih/hh weights K-stacked into a single [2*GB, 4*GB] matrix,
    * final linear row-padded to GB rows.
    """
    (wih0, whh0, b0, wih1, whh1, b1, wlin, blin) = params
    H = hidden_dim
    assert H <= GB, "hidden_dim must fit in one gate lane-block"

    wx0p = _pad_gates(wih0, H, GB)                                     # [in, 4*GB]
    b0p = _pad_gates(b0, H, GB)                                        # [1,  4*GB]

    wh0p = jnp.zeros((GB, 4 * GB), jnp.float32)
    wh0p = wh0p.at[:H, :].set(_pad_gates(whh0, H, GB))                 # [GB, 4*GB]

    w1p = jnp.zeros((2 * GB, 4 * GB), jnp.float32)
    w1p = w1p.at[:H, :].set(_pad_gates(wih1, H, GB))                   # rows for h0
    w1p = w1p.at[GB:GB + H, :].set(_pad_gates(whh1, H, GB))            # rows for h1
    b1p = _pad_gates(b1, H, GB)                                        # [1, 4*GB]

    wlinp = jnp.zeros((GB, wlin.shape[1]), jnp.float32)
    wlinp = wlinp.at[:H, :].set(wlin)                                  # [GB, out]

    return (wx0p, b0p, wh0p, w1p, b1p, wlinp, blin)


# ------------------------------ pure-JAX reference ---------------------------
def lstm_reference(x, params):
    (wih0, whh0, b0, wih1, whh1, b1, wlin, blin) = params
    H = whh0.shape[0]

    def cell(x_t, h, c, wih, whh, b):
        g = x_t @ wih + h @ whh + b
        i = jax.nn.sigmoid(g[:, 0 * H:1 * H])
        f = jax.nn.sigmoid(g[:, 1 * H:2 * H])
        gg = jnp.tanh(g[:, 2 * H:3 * H])
        o = jax.nn.sigmoid(g[:, 3 * H:4 * H])
        c = f * c + i * gg
        h = o * jnp.tanh(c)
        return h, c

    h0 = c0 = h1 = c1 = jnp.zeros((1, H), jnp.float32)
    for t in range(x.shape[0]):
        x_t = x[t:t + 1, :]
        h0, c0 = cell(x_t, h0, c0, wih0, whh0, b0)
        h1, c1 = cell(h0, h1, c1, wih1, whh1, b1)
    return (h1 @ wlin + blin)[0]


# ---------------------------------- main --------------------------------------
if __name__ == "__main__":
    SEQ, INPUT_DIM, HIDDEN_DIM, OUTPUT_DIM = 8, 4, 32, 1

    root = jax.random.PRNGKey(0)
    k_x, k_p = jax.random.split(root)
    x = jax.random.normal(k_x, (SEQ, INPUT_DIM), jnp.float32)
    params = make_params(k_p, INPUT_DIM, HIDDEN_DIM, OUTPUT_DIM)
    packed = pack_params(params, HIDDEN_DIM)

    out = jax.block_until_ready(lstm_forward(x, packed))
    ref = lstm_reference(x, params)
    assert out.shape == (OUTPUT_DIM,)
    assert jnp.allclose(out, ref, atol=1e-5, rtol=1e-5), (out, ref)
    print("KERNEL_OK")
</pallas_src>

<mosaic_0001>
module attributes {stable_mosaic.version = 11 : i64} {
  func.func @_lstm_kernel(%arg0: memref<8x4xf32, #tpu.memory_space<vmem>>, %arg1: memref<4x512xf32, #tpu.memory_space<vmem>>, %arg2: memref<1x512xf32, #tpu.memory_space<vmem>>, %arg3: memref<128x512xf32, #tpu.memory_space<vmem>>, %arg4: memref<256x512xf32, #tpu.memory_space<vmem>>, %arg5: memref<1x512xf32, #tpu.memory_space<vmem>>, %arg6: memref<128x1xf32, #tpu.memory_space<vmem>>, %arg7: memref<1x1xf32, #tpu.memory_space<vmem>>, %arg8: memref<1x1xf32, #tpu.memory_space<vmem>>) attributes {dimension_semantics = [], scalar_prefetch = 0 : i64, scratch_operands = 0 : i64, tpu.core_type = #tpu.core_type<tc>} {
    %c0 = arith.constant 0 : index
    %c0_0 = arith.constant 0 : index
    %0 = vector.load %arg0[%c0, %c0_0] : memref<8x4xf32, #tpu.memory_space<vmem>>, vector<8x4xf32>
    %c0_1 = arith.constant 0 : index
    %c0_2 = arith.constant 0 : index
    %1 = vector.load %arg1[%c0_1, %c0_2] : memref<4x512xf32, #tpu.memory_space<vmem>>, vector<4x512xf32>
    %cst = arith.constant dense<0.000000e+00> : vector<8x512xf32>
    %2 = tpu.matmul %0, %1, %cst {dimension_numbers = #tpu.dot_dimension_numbers<[1], [0], [0], [1], [0, 0, 1, 1], [], []>} : vector<8x4xf32>, vector<4x512xf32>, vector<8x512xf32> -> vector<8x512xf32>
    %c0_3 = arith.constant 0 : index
    %c0_4 = arith.constant 0 : index
    %3 = vector.load %arg2[%c0_3, %c0_4] : memref<1x512xf32, #tpu.memory_space<vmem>>, vector<1x512xf32>
    %4 = vector.broadcast %3 : vector<1x512xf32> to vector<8x512xf32>
    %5 = arith.addf %2, %4 : vector<8x512xf32>
    %c0_5 = arith.constant 0 : index
    %c0_6 = arith.constant 0 : index
    %6 = vector.load %arg3[%c0_5, %c0_6] : memref<128x512xf32, #tpu.memory_space<vmem>>, vector<128x512xf32>
    %c0_7 = arith.constant 0 : index
    %c0_8 = arith.constant 0 : index
    %7 = vector.load %arg4[%c0_7, %c0_8] : memref<256x512xf32, #tpu.memory_space<vmem>>, vector<256x512xf32>
    %c0_9 = arith.constant 0 : index
    %c0_10 = arith.constant 0 : index
    %8 = vector.load %arg5[%c0_9, %c0_10] : memref<1x512xf32, #tpu.memory_space<vmem>>, vector<1x512xf32>
    %cst_11 = arith.constant 0.000000e+00 : f32
    %9 = vector.broadcast %cst_11 : f32 to vector<1x128xf32>
    %10 = vector.extract_strided_slice %5 {offsets = [0, 0], sizes = [1, 512], strides = [1, 1]} : vector<8x512xf32> to vector<1x512xf32>
    %cst_12 = arith.constant dense<0.000000e+00> : vector<1x512xf32>
    %11 = tpu.matmul %9, %6, %cst_12 {dimension_numbers = #tpu.dot_dimension_numbers<[1], [0], [0], [1], [0, 0, 1, 1], [], []>} : vector<1x128xf32>, vector<128x512xf32>, vector<1x512xf32> -> vector<1x512xf32>
    %12 = arith.addf %10, %11 : vector<1x512xf32>
    %13 = vector.extract_strided_slice %12 {offsets = [0, 0], sizes = [1, 128], strides = [1, 1]} : vector<1x512xf32> to vector<1x128xf32>
    %14 = arith.negf %13 : vector<1x128xf32>
    %15 = math.exp %14 : vector<1x128xf32>
    %cst_13 = arith.constant 1.000000e+00 : f32
    %16 = vector.broadcast %cst_13 : f32 to vector<1x128xf32>
    %17 = arith.addf %16, %15 : vector<1x128xf32>
    %18 = arith.divf %16, %17 : vector<1x128xf32>
    %19 = vector.extract_strided_slice %12 {offsets = [0, 128], sizes = [1, 128], strides = [1, 1]} : vector<1x512xf32> to vector<1x128xf32>
    %20 = arith.negf %19 : vector<1x128xf32>
    %21 = math.exp %20 : vector<1x128xf32>
    %cst_14 = arith.constant 1.000000e+00 : f32
    %22 = vector.broadcast %cst_14 : f32 to vector<1x128xf32>
    %23 = arith.addf %22, %21 : vector<1x128xf32>
    %24 = arith.divf %22, %23 : vector<1x128xf32>
    %25 = vector.extract_strided_slice %12 {offsets = [0, 256], sizes = [1, 128], strides = [1, 1]} : vector<1x512xf32> to vector<1x128xf32>
    %26 = math.tanh %25 : vector<1x128xf32>
    %27 = vector.extract_strided_slice %12 {offsets = [0, 384], sizes = [1, 128], strides = [1, 1]} : vector<1x512xf32> to vector<1x128xf32>
    %28 = arith.negf %27 : vector<1x128xf32>
    %29 = math.exp %28 : vector<1x128xf32>
    %cst_15 = arith.constant 1.000000e+00 : f32
    %30 = vector.broadcast %cst_15 : f32 to vector<1x128xf32>
    %31 = arith.addf %30, %29 : vector<1x128xf32>
    %32 = arith.divf %30, %31 : vector<1x128xf32>
    %33 = arith.mulf %24, %9 : vector<1x128xf32>
    %34 = arith.mulf %18, %26 : vector<1x128xf32>
    %35 = arith.addf %33, %34 : vector<1x128xf32>
    %36 = math.tanh %35 : vector<1x128xf32>
    %37 = arith.mulf %32, %36 : vector<1x128xf32>
    %38 = tpu.concatenate %37, %9 in 1 : vector<1x128xf32>, vector<1x128xf32> -> vector<1x256xf32>
    %cst_16 = arith.constant dense<0.000000e+00> : vector<1x512xf32>
    %39 = tpu.matmul %38, %7, %cst_16 {dimension_numbers = #tpu.dot_dimension_numbers<[1], [0], [0], [1], [0, 0, 1, 1], [], []>} : vector<1x256xf32>, vector<256x512xf32>, vector<1x512xf32> -> vector<1x512xf32>
    %40 = arith.addf %39, %8 : vector<1x512xf32>
    %41 = vector.extract_strided_slice %40 {offsets = [0, 0], sizes = [1, 128], strides = [1, 1]} : vector<1x512xf32> to vector<1x128xf32>
    %42 = arith.negf %41 : vector<1x128xf32>
    %43 = math.exp %42 : vector<1x128xf32>
    %cst_17 = arith.constant 1.000000e+00 : f32
    %44 = vector.broadcast %cst_17 : f32 to vector<1x128xf32>
    %45 = arith.addf %44, %43 : vector<1x128xf32>
    %46 = arith.divf %44, %45 : vector<1x128xf32>
    %47 = vector.extract_strided_slice %40 {offsets = [0, 128], sizes = [1, 128], strides = [1, 1]} : vector<1x512xf32> to vector<1x128xf32>
    %48 = arith.negf %47 : vector<1x128xf32>
    %49 = math.exp %48 : vector<1x128xf32>
    %cst_18 = arith.constant 1.000000e+00 : f32
    %50 = vector.broadcast %cst_18 : f32 to vector<1x128xf32>
    %51 = arith.addf %50, %49 : vector<1x128xf32>
    %52 = arith.divf %50, %51 : vector<1x128xf32>
    %53 = vector.extract_strided_slice %40 {offsets = [0, 256], sizes = [1, 128], strides = [1, 1]} : vector<1x512xf32> to vector<1x128xf32>
    %54 = math.tanh %53 : vector<1x128xf32>
    %55 = vector.extract_strided_slice %40 {offsets = [0, 384], sizes = [1, 128], strides = [1, 1]} : vector<1x512xf32> to vector<1x128xf32>
    %56 = arith.negf %55 : vector<1x128xf32>
    %57 = math.exp %56 : vector<1x128xf32>
    %cst_19 = arith.constant 1.000000e+00 : f32
    %58 = vector.broadcast %cst_19 : f32 to vector<1x128xf32>
    %59 = arith.addf %58, %57 : vector<1x128xf32>
    %60 = arith.divf %58, %59 : vector<1x128xf32>
    %61 = arith.mulf %52, %9 : vector<1x128xf32>
    %62 = arith.mulf %46, %54 : vector<1x128xf32>
    %63 = arith.addf %61, %62 : vector<1x128xf32>
    %64 = math.tanh %63 : vector<1x128xf32>
    %65 = arith.mulf %60, %64 : vector<1x128xf32>
    %66 = vector.extract_strided_slice %5 {offsets = [1, 0], sizes = [1, 512], strides = [1, 1]} : vector<8x512xf32> to vector<1x512xf32>
    %cst_20 = arith.constant dense<0.000000e+00> : vector<1x512xf32>
    %67 = tpu.matmul %37, %6, %cst_20 {dimension_numbers = #tpu.dot_dimension_numbers<[1], [0], [0], [1], [0, 0, 1, 1], [], []>} : vector<1x128xf32>, vector<128x512xf32>, vector<1x512xf32> -> vector<1x512xf32>
    %68 = arith.addf %66, %67 : vector<1x512xf32>
    %69 = vector.extract_strided_slice %68 {offsets = [0, 0], sizes = [1, 128], strides = [1, 1]} : vector<1x512xf32> to vector<1x128xf32>
    %70 = arith.negf %69 : vector<1x128xf32>
    %71 = math.exp %70 : vector<1x128xf32>
    %cst_21 = arith.constant 1.000000e+00 : f32
    %72 = vector.broadcast %cst_21 : f32 to vector<1x128xf32>
    %73 = arith.addf %72, %71 : vector<1x128xf32>
    %74 = arith.divf %72, %73 : vector<1x128xf32>
    %75 = vector.extract_strided_slice %68 {offsets = [0, 128], sizes = [1, 128], strides = [1, 1]} : vector<1x512xf32> to vector<1x128xf32>
    %76 = arith.negf %75 : vector<1x128xf32>
    %77 = math.exp %76 : vector<1x128xf32>
    %cst_22 = arith.constant 1.000000e+00 : f32
    %78 = vector.broadcast %cst_22 : f32 to vector<1x128xf32>
    %79 = arith.addf %78, %77 : vector<1x128xf32>
    %80 = arith.divf %78, %79 : vector<1x128xf32>
    %81 = vector.extract_strided_slice %68 {offsets = [0, 256], sizes = [1, 128], strides = [1, 1]} : vector<1x512xf32> to vector<1x128xf32>
    %82 = math.tanh %81 : vector<1x128xf32>
    %83 = vector.extract_strided_slice %68 {offsets = [0, 384], sizes = [1, 128], strides = [1, 1]} : vector<1x512xf32> to vector<1x128xf32>
    %84 = arith.negf %83 : vector<1x128xf32>
    %85 = math.exp %84 : vector<1x128xf32>
    %cst_23 = arith.constant 1.000000e+00 : f32
    %86 = vector.broadcast %cst_23 : f32 to vector<1x128xf32>
    %87 = arith.addf %86, %85 : vector<1x128xf32>
    %88 = arith.divf %86, %87 : vector<1x128xf32>
    %89 = arith.mulf %80, %35 : vector<1x128xf32>
    %90 = arith.mulf %74, %82 : vector<1x128xf32>
    %91 = arith.addf %89, %90 : vector<1x128xf32>
    %92 = math.tanh %91 : vector<1x128xf32>
    %93 = arith.mulf %88, %92 : vector<1x128xf32>
    %94 = tpu.concatenate %93, %65 in 1 : vector<1x128xf32>, vector<1x128xf32> -> vector<1x256xf32>
    %cst_24 = arith.constant dense<0.000000e+00> : vector<1x512xf32>
    %95 = tpu.matmul %94, %7, %cst_24 {dimension_numbers = #tpu.dot_dimension_numbers<[1], [0], [0], [1], [0, 0, 1, 1], [], []>} : vector<1x256xf32>, vector<256x512xf32>, vector<1x512xf32> -> vector<1x512xf32>
    %96 = arith.addf %95, %8 : vector<1x512xf32>
    %97 = vector.extract_strided_slice %96 {offsets = [0, 0], sizes = [1, 128], strides = [1, 1]} : vector<1x512xf32> to vector<1x128xf32>
    %98 = arith.negf %97 : vector<1x128xf32>
    %99 = math.exp %98 : vector<1x128xf32>
    %cst_25 = arith.constant 1.000000e+00 : f32
    %100 = vector.broadcast %cst_25 : f32 to vector<1x128xf32>
    %101 = arith.addf %100, %99 : vector<1x128xf32>
    %102 = arith.divf %100, %101 : vector<1x128xf32>
    %103 = vector.extract_strided_slice %96 {offsets = [0, 128], sizes = [1, 128], strides = [1, 1]} : vector<1x512xf32> to vector<1x128xf32>
    %104 = arith.negf %103 : vector<1x128xf32>
    %105 = math.exp %104 : vector<1x128xf32>
    %cst_26 = arith.constant 1.000000e+00 : f32
    %106 = vector.broadcast %cst_26 : f32 to vector<1x128xf32>
    %107 = arith.addf %106, %105 : vector<1x128xf32>
    %108 = arith.divf %106, %107 : vector<1x128xf32>
    %109 = vector.extract_strided_slice %96 {offsets = [0, 256], sizes = [1, 128], strides = [1, 1]} : vector<1x512xf32> to vector<1x128xf32>
    %110 = math.tanh %109 : vector<1x128xf32>
    %111 = vector.extract_strided_slice %96 {offsets = [0, 384], sizes = [1, 128], strides = [1, 1]} : vector<1x512xf32> to vector<1x128xf32>
    %112 = arith.negf %111 : vector<1x128xf32>
    %113 = math.exp %112 : vector<1x128xf32>
    %cst_27 = arith.constant 1.000000e+00 : f32
    %114 = vector.broadcast %cst_27 : f32 to vector<1x128xf32>
    %115 = arith.addf %114, %113 : vector<1x128xf32>
    %116 = arith.divf %114, %115 : vector<1x128xf32>
    %117 = arith.mulf %108, %63 : vector<1x128xf32>
    %118 = arith.mulf %102, %110 : vector<1x128xf32>
    %119 = arith.addf %117, %118 : vector<1x128xf32>
    %120 = math.tanh %119 : vector<1x128xf32>
    %121 = arith.mulf %116, %120 : vector<1x128xf32>
    %122 = vector.extract_strided_slice %5 {offsets = [2, 0], sizes = [1, 512], strides = [1, 1]} : vector<8x512xf32> to vector<1x512xf32>
    %cst_28 = arith.constant dense<0.000000e+00> : vector<1x512xf32>
    %123 = tpu.matmul %93, %6, %cst_28 {dimension_numbers = #tpu.dot_dimension_numbers<[1], [0], [0], [1], [0, 0, 1, 1], [], []>} : vector<1x128xf32>, vector<128x512xf32>, vector<1x512xf32> -> vector<1x512xf32>
    %124 = arith.addf %122, %123 : vector<1x512xf32>
    %125 = vector.extract_strided_slice %124 {offsets = [0, 0], sizes = [1, 128], strides = [1, 1]} : vector<1x512xf32> to vector<1x128xf32>
    %126 = arith.negf %125 : vector<1x128xf32>
    %127 = math.exp %126 : vector<1x128xf32>
    %cst_29 = arith.constant 1.000000e+00 : f32
    %128 = vector.broadcast %cst_29 : f32 to vector<1x128xf32>
    %129 = arith.addf %128, %127 : vector<1x128xf32>
    %130 = arith.divf %128, %129 : vector<1x128xf32>
    %131 = vector.extract_strided_slice %124 {offsets = [0, 128], sizes = [1, 128], strides = [1, 1]} : vector<1x512xf32> to vector<1x128xf32>
    %132 = arith.negf %131 : vector<1x128xf32>
    %133 = math.exp %132 : vector<1x128xf32>
    %cst_30 = arith.constant 1.000000e+00 : f32
    %134 = vector.broadcast %cst_30 : f32 to vector<1x128xf32>
    %135 = arith.addf %134, %133 : vector<1x128xf32>
    %136 = arith.divf %134, %135 : vector<1x128xf32>
    %137 = vector.extract_strided_slice %124 {offsets = [0, 256], sizes = [1, 128], strides = [1, 1]} : vector<1x512xf32> to vector<1x128xf32>
    %138 = math.tanh %137 : vector<1x128xf32>
    %139 = vector.extract_strided_slice %124 {offsets = [0, 384], sizes = [1, 128], strides = [1, 1]} : vector<1x512xf32> to vector<1x128xf32>
    %140 = arith.negf %139 : vector<1x128xf32>
    %141 = math.exp %140 : vector<1x128xf32>
    %cst_31 = arith.constant 1.000000e+00 : f32
    %142 = vector.broadcast %cst_31 : f32 to vector<1x128xf32>
    %143 = arith.addf %142, %141 : vector<1x128xf32>
    %144 = arith.divf %142, %143 : vector<1x128xf32>
    %145 = arith.mulf %136, %91 : vector<1x128xf32>
    %146 = arith.mulf %130, %138 : vector<1x128xf32>
    %147 = arith.addf %145, %146 : vector<1x128xf32>
    %148 = math.tanh %147 : vector<1x128xf32>
    %149 = arith.mulf %144, %148 : vector<1x128xf32>
    %150 = tpu.concatenate %149, %121 in 1 : vector<1x128xf32>, vector<1x128xf32> -> vector<1x256xf32>
    %cst_32 = arith.constant dense<0.000000e+00> : vector<1x512xf32>
    %151 = tpu.matmul %150, %7, %cst_32 {dimension_numbers = #tpu.dot_dimension_numbers<[1], [0], [0], [1], [0, 0, 1, 1], [], []>} : vector<1x256xf32>, vector<256x512xf32>, vector<1x512xf32> -> vector<1x512xf32>
    %152 = arith.addf %151, %8 : vector<1x512xf32>
    %153 = vector.extract_strided_slice %152 {offsets = [0, 0], sizes = [1, 128], strides = [1, 1]} : vector<1x512xf32> to vector<1x128xf32>
    %154 = arith.negf %153 : vector<1x128xf32>
    %155 = math.exp %154 : vector<1x128xf32>
    %cst_33 = arith.constant 1.000000e+00 : f32
    %156 = vector.broadcast %cst_33 : f32 to vector<1x128xf32>
    %157 = arith.addf %156, %155 : vector<1x128xf32>
    %158 = arith.divf %156, %157 : vector<1x128xf32>
    %159 = vector.extract_strided_slice %152 {offsets = [0, 128], sizes = [1, 128], strides = [1, 1]} : vector<1x512xf32> to vector<1x128xf32>
    %160 = arith.negf %159 : vector<1x128xf32>
    %161 = math.exp %160 : vector<1x128xf32>
    %cst_34 = arith.constant 1.000000e+00 : f32
    %162 = vector.broadcast %cst_34 : f32 to vector<1x128xf32>
    %163 = arith.addf %162, %161 : vector<1x128xf32>
    %164 = arith.divf %162, %163 : vector<1x128xf32>
    %165 = vector.extract_strided_slice %152 {offsets = [0, 256], sizes = [1, 128], strides = [1, 1]} : vector<1x512xf32> to vector<1x128xf32>
    %166 = math.tanh %165 : vector<1x128xf32>
    %167 = vector.extract_strided_slice %152 {offsets = [0, 384], sizes = [1, 128], strides = [1, 1]} : vector<1x512xf32> to vector<1x128xf32>
    %168 = arith.negf %167 : vector<1x128xf32>
    %169 = math.exp %168 : vector<1x128xf32>
    %cst_35 = arith.constant 1.000000e+00 : f32
    %170 = vector.broadcast %cst_35 : f32 to vector<1x128xf32>
    %171 = arith.addf %170, %169 : vector<1x128xf32>
    %172 = arith.divf %170, %171 : vector<1x128xf32>
    %173 = arith.mulf %164, %119 : vector<1x128xf32>
    %174 = arith.mulf %158, %166 : vector<1x128xf32>
    %175 = arith.addf %173, %174 : vector<1x128xf32>
    %176 = math.tanh %175 : vector<1x128xf32>
    %177 = arith.mulf %172, %176 : vector<1x128xf32>
    %178 = vector.extract_strided_slice %5 {offsets = [3, 0], sizes = [1, 512], strides = [1, 1]} : vector<8x512xf32> to vector<1x512xf32>
    %cst_36 = arith.constant dense<0.000000e+00> : vector<1x512xf32>
    %179 = tpu.matmul %149, %6, %cst_36 {dimension_numbers = #tpu.dot_dimension_numbers<[1], [0], [0], [1], [0, 0, 1, 1], [], []>} : vector<1x128xf32>, vector<128x512xf32>, vector<1x512xf32> -> vector<1x512xf32>
    %180 = arith.addf %178, %179 : vector<1x512xf32>
    %181 = vector.extract_strided_slice %180 {offsets = [0, 0], sizes = [1, 128], strides = [1, 1]} : vector<1x512xf32> to vector<1x128xf32>
    %182 = arith.negf %181 : vector<1x128xf32>
    %183 = math.exp %182 : vector<1x128xf32>
    %cst_37 = arith.constant 1.000000e+00 : f32
    %184 = vector.broadcast %cst_37 : f32 to vector<1x128xf32>
    %185 = arith.addf %184, %183 : vector<1x128xf32>
    %186 = arith.divf %184, %185 : vector<1x128xf32>
    %187 = vector.extract_strided_slice %180 {offsets = [0, 128], sizes = [1, 128], strides = [1, 1]} : vector<1x512xf32> to vector<1x128xf32>
    %188 = arith.negf %187 : vector<1x128xf32>
    %189 = math.exp %188 : vector<1x128xf32>
    %cst_38 = arith.constant 1.000000e+00 : f32
    %190 = vector.broadcast %cst_38 : f32 to vector<1x128xf32>
    %191 = arith.addf %190, %189 : vector<1x128xf32>
    %192 = arith.divf %190, %191 : vector<1x128xf32>
    %193 = vector.extract_strided_slice %180 {offsets = [0, 256], sizes = [1, 128], strides = [1, 1]} : vector<1x512xf32> to vector<1x128xf32>
    %194 = math.tanh %193 : vector<1x128xf32>
    %195 = vector.extract_strided_slice %180 {offsets = [0, 384], sizes = [1, 128], strides = [1, 1]} : vector<1x512xf32> to vector<1x128xf32>
    %196 = arith.negf %195 : vector<1x128xf32>
    %197 = math.exp %196 : vector<1x128xf32>
    %cst_39 = arith.constant 1.000000e+00 : f32
    %198 = vector.broadcast %cst_39 : f32 to vector<1x128xf32>
    %199 = arith.addf %198, %197 : vector<1x128xf32>
    %200 = arith.divf %198, %199 : vector<1x128xf32>
    %201 = arith.mulf %192, %147 : vector<1x128xf32>
    %202 = arith.mulf %186, %194 : vector<1x128xf32>
    %203 = arith.addf %201, %202 : vector<1x128xf32>
    %204 = math.tanh %203 : vector<1x128xf32>
    %205 = arith.mulf %200, %204 : vector<1x128xf32>
    %206 = tpu.concatenate %205, %177 in 1 : vector<1x128xf32>, vector<1x128xf32> -> vector<1x256xf32>
    %cst_40 = arith.constant dense<0.000000e+00> : vector<1x512xf32>
    %207 = tpu.matmul %206, %7, %cst_40 {dimension_numbers = #tpu.dot_dimension_numbers<[1], [0], [0], [1], [0, 0, 1, 1], [], []>} : vector<1x256xf32>, vector<256x512xf32>, vector<1x512xf32> -> vector<1x512xf32>
    %208 = arith.addf %207, %8 : vector<1x512xf32>
    %209 = vector.extract_strided_slice %208 {offsets = [0, 0], sizes = [1, 128], strides = [1, 1]} : vector<1x512xf32> to vector<1x128xf32>
    %210 = arith.negf %209 : vector<1x128xf32>
    %211 = math.exp %210 : vector<1x128xf32>
    %cst_41 = arith.constant 1.000000e+00 : f32
    %212 = vector.broadcast %cst_41 : f32 to vector<1x128xf32>
    %213 = arith.addf %212, %211 : vector<1x128xf32>
    %214 = arith.divf %212, %213 : vector<1x128xf32>
    %215 = vector.extract_strided_slice %208 {offsets = [0, 128], sizes = [1, 128], strides = [1, 1]} : vector<1x512xf32> to vector<1x128xf32>
    %216 = arith.negf %215 : vector<1x128xf32>
    %217 = math.exp %216 : vector<1x128xf32>
    %cst_42 = arith.constant 1.000000e+00 : f32
    %218 = vector.broadcast %cst_42 : f32 to vector<1x128xf32>
    %219 = arith.addf %218, %217 : vector<1x128xf32>
    %220 = arith.divf %218, %219 : vector<1x128xf32>
    %221 = vector.extract_strided_slice %208 {offsets = [0, 256], sizes = [1, 128], strides = [1, 1]} : vector<1x512xf32> to vector<1x128xf32>
    %222 = math.tanh %221 : vector<1x128xf32>
    %223 = vector.extract_strided_slice %208 {offsets = [0, 384], sizes = [1, 128], strides = [1, 1]} : vector<1x512xf32> to vector<1x128xf32>
    %224 = arith.negf %223 : vector<1x128xf32>
    %225 = math.exp %224 : vector<1x128xf32>
    %cst_43 = arith.constant 1.000000e+00 : f32
    %226 = vector.broadcast %cst_43 : f32 to vector<1x128xf32>
    %227 = arith.addf %226, %225 : vector<1x128xf32>
    %228 = arith.divf %226, %227 : vector<1x128xf32>
    %229 = arith.mulf %220, %175 : vector<1x128xf32>
    %230 = arith.mulf %214, %222 : vector<1x128xf32>
    %231 = arith.addf %229, %230 : vector<1x128xf32>
    %232 = math.tanh %231 : vector<1x128xf32>
    %233 = arith.mulf %228, %232 : vector<1x128xf32>
    %234 = vector.extract_strided_slice %5 {offsets = [4, 0], sizes = [1, 512], strides = [1, 1]} : vector<8x512xf32> to vector<1x512xf32>
    %cst_44 = arith.constant dense<0.000000e+00> : vector<1x512xf32>
    %235 = tpu.matmul %205, %6, %cst_44 {dimension_numbers = #tpu.dot_dimension_numbers<[1], [0], [0], [1], [0, 0, 1, 1], [], []>} : vector<1x128xf32>, vector<128x512xf32>, vector<1x512xf32> -> vector<1x512xf32>
    %236 = arith.addf %234, %235 : vector<1x512xf32>
    %237 = vector.extract_strided_slice %236 {offsets = [0, 0], sizes = [1, 128], strides = [1, 1]} : vector<1x512xf32> to vector<1x128xf32>
    %238 = arith.negf %237 : vector<1x128xf32>
    %239 = math.exp %238 : vector<1x128xf32>
    %cst_45 = arith.constant 1.000000e+00 : f32
    %240 = vector.broadcast %cst_45 : f32 to vector<1x128xf32>
    %241 = arith.addf %240, %239 : vector<1x128xf32>
    %242 = arith.divf %240, %241 : vector<1x128xf32>
    %243 = vector.extract_strided_slice %236 {offsets = [0, 128], sizes = [1, 128], strides = [1, 1]} : vector<1x512xf32> to vector<1x128xf32>
    %244 = arith.negf %243 : vector<1x128xf32>
    %245 = math.exp %244 : vector<1x128xf32>
    %cst_46 = arith.constant 1.000000e+00 : f32
    %246 = vector.broadcast %cst_46 : f32 to vector<1x128xf32>
    %247 = arith.addf %246, %245 : vector<1x128xf32>
    %248 = arith.divf %246, %247 : vector<1x128xf32>
    %249 = vector.extract_strided_slice %236 {offsets = [0, 256], sizes = [1, 128], strides = [1, 1]} : vector<1x512xf32> to vector<1x128xf32>
    %250 = math.tanh %249 : vector<1x128xf32>
    %251 = vector.extract_strided_slice %236 {offsets = [0, 384], sizes = [1, 128], strides = [1, 1]} : vector<1x512xf32> to vector<1x128xf32>
    %252 = arith.negf %251 : vector<1x128xf32>
    %253 = math.exp %252 : vector<1x128xf32>
    %cst_47 = arith.constant 1.000000e+00 : f32
    %254 = vector.broadcast %cst_47 : f32 to vector<1x128xf32>
    %255 = arith.addf %254, %253 : vector<1x128xf32>
    %256 = arith.divf %254, %255 : vector<1x128xf32>
    %257 = arith.mulf %248, %203 : vector<1x128xf32>
    %258 = arith.mulf %242, %250 : vector<1x128xf32>
    %259 = arith.addf %257, %258 : vector<1x128xf32>
    %260 = math.tanh %259 : vector<1x128xf32>
    %261 = arith.mulf %256, %260 : vector<1x128xf32>
    %262 = tpu.concatenate %261, %233 in 1 : vector<1x128xf32>, vector<1x128xf32> -> vector<1x256xf32>
    %cst_48 = arith.constant dense<0.000000e+00> : vector<1x512xf32>
    %263 = tpu.matmul %262, %7, %cst_48 {dimension_numbers = #tpu.dot_dimension_numbers<[1], [0], [0], [1], [0, 0, 1, 1], [], []>} : vector<1x256xf32>, vector<256x512xf32>, vector<1x512xf32> -> vector<1x512xf32>
    %264 = arith.addf %263, %8 : vector<1x512xf32>
    %265 = vector.extract_strided_slice %264 {offsets = [0, 0], sizes = [1, 128], strides = [1, 1]} : vector<1x512xf32> to vector<1x128xf32>
    %266 = arith.negf %265 : vector<1x128xf32>
    %267 = math.exp %266 : vector<1x128xf32>
    %cst_49 = arith.constant 1.000000e+00 : f32
    %268 = vector.broadcast %cst_49 : f32 to vector<1x128xf32>
    %269 = arith.addf %268, %267 : vector<1x128xf32>
    %270 = arith.divf %268, %269 : vector<1x128xf32>
    %271 = vector.extract_strided_slice %264 {offsets = [0, 128], sizes = [1, 128], strides = [1, 1]} : vector<1x512xf32> to vector<1x128xf32>
    %272 = arith.negf %271 : vector<1x128xf32>
    %273 = math.exp %272 : vector<1x128xf32>
    %cst_50 = arith.constant 1.000000e+00 : f32
    %274 = vector.broadcast %cst_50 : f32 to vector<1x128xf32>
    %275 = arith.addf %274, %273 : vector<1x128xf32>
    %276 = arith.divf %274, %275 : vector<1x128xf32>
    %277 = vector.extract_strided_slice %264 {offsets = [0, 256], sizes = [1, 128], strides = [1, 1]} : vector<1x512xf32> to vector<1x128xf32>
    %278 = math.tanh %277 : vector<1x128xf32>
    %279 = vector.extract_strided_slice %264 {offsets = [0, 384], sizes = [1, 128], strides = [1, 1]} : vector<1x512xf32> to vector<1x128xf32>
    %280 = arith.negf %279 : vector<1x128xf32>
    %281 = math.exp %280 : vector<1x128xf32>
    %cst_51 = arith.constant 1.000000e+00 : f32
    %282 = vector.broadcast %cst_51 : f32 to vector<1x128xf32>
    %283 = arith.addf %282, %281 : vector<1x128xf32>
    %284 = arith.divf %282, %283 : vector<1x128xf32>
    %285 = arith.mulf %276, %231 : vector<1x128xf32>
    %286 = arith.mulf %270, %278 : vector<1x128xf32>
    %287 = arith.addf %285, %286 : vector<1x128xf32>
    %288 = math.tanh %287 : vector<1x128xf32>
    %289 = arith.mulf %284, %288 : vector<1x128xf32>
    %290 = vector.extract_strided_slice %5 {offsets = [5, 0], sizes = [1, 512], strides = [1, 1]} : vector<8x512xf32> to vector<1x512xf32>
    %cst_52 = arith.constant dense<0.000000e+00> : vector<1x512xf32>
    %291 = tpu.matmul %261, %6, %cst_52 {dimension_numbers = #tpu.dot_dimension_numbers<[1], [0], [0], [1], [0, 0, 1, 1], [], []>} : vector<1x128xf32>, vector<128x512xf32>, vector<1x512xf32> -> vector<1x512xf32>
    %292 = arith.addf %290, %291 : vector<1x512xf32>
    %293 = vector.extract_strided_slice %292 {offsets = [0, 0], sizes = [1, 128], strides = [1, 1]} : vector<1x512xf32> to vector<1x128xf32>
    %294 = arith.negf %293 : vector<1x128xf32>
    %295 = math.exp %294 : vector<1x128xf32>
    %cst_53 = arith.constant 1.000000e+00 : f32
    %296 = vector.broadcast %cst_53 : f32 to vector<1x128xf32>
    %297 = arith.addf %296, %295 : vector<1x128xf32>
    %298 = arith.divf %296, %297 : vector<1x128xf32>
    %299 = vector.extract_strided_slice %292 {offsets = [0, 128], sizes = [1, 128], strides = [1, 1]} : vector<1x512xf32> to vector<1x128xf32>
    %300 = arith.negf %299 : vector<1x128xf32>
    %301 = math.exp %300 : vector<1x128xf32>
    %cst_54 = arith.constant 1.000000e+00 : f32
    %302 = vector.broadcast %cst_54 : f32 to vector<1x128xf32>
    %303 = arith.addf %302, %301 : vector<1x128xf32>
    %304 = arith.divf %302, %303 : vector<1x128xf32>
    %305 = vector.extract_strided_slice %292 {offsets = [0, 256], sizes = [1, 128], strides = [1, 1]} : vector<1x512xf32> to vector<1x128xf32>
    %306 = math.tanh %305 : vector<1x128xf32>
    %307 = vector.extract_strided_slice %292 {offsets = [0, 384], sizes = [1, 128], strides = [1, 1]} : vector<1x512xf32> to vector<1x128xf32>
    %308 = arith.negf %307 : vector<1x128xf32>
    %309 = math.exp %308 : vector<1x128xf32>
    %cst_55 = arith.constant 1.000000e+00 : f32
    %310 = vector.broadcast %cst_55 : f32 to vector<1x128xf32>
    %311 = arith.addf %310, %309 : vector<1x128xf32>
    %312 = arith.divf %310, %311 : vector<1x128xf32>
    %313 = arith.mulf %304, %259 : vector<1x128xf32>
    %314 = arith.mulf %298, %306 : vector<1x128xf32>
    %315 = arith.addf %313, %314 : vector<1x128xf32>
    %316 = math.tanh %315 : vector<1x128xf32>
    %317 = arith.mulf %312, %316 : vector<1x128xf32>
    %318 = tpu.concatenate %317, %289 in 1 : vector<1x128xf32>, vector<1x128xf32> -> vector<1x256xf32>
    %cst_56 = arith.constant dense<0.000000e+00> : vector<1x512xf32>
    %319 = tpu.matmul %318, %7, %cst_56 {dimension_numbers = #tpu.dot_dimension_numbers<[1], [0], [0], [1], [0, 0, 1, 1], [], []>} : vector<1x256xf32>, vector<256x512xf32>, vector<1x512xf32> -> vector<1x512xf32>
    %320 = arith.addf %319, %8 : vector<1x512xf32>
    %321 = vector.extract_strided_slice %320 {offsets = [0, 0], sizes = [1, 128], strides = [1, 1]} : vector<1x512xf32> to vector<1x128xf32>
    %322 = arith.negf %321 : vector<1x128xf32>
    %323 = math.exp %322 : vector<1x128xf32>
    %cst_57 = arith.constant 1.000000e+00 : f32
    %324 = vector.broadcast %cst_57 : f32 to vector<1x128xf32>
    %325 = arith.addf %324, %323 : vector<1x128xf32>
    %326 = arith.divf %324, %325 : vector<1x128xf32>
    %327 = vector.extract_strided_slice %320 {offsets = [0, 128], sizes = [1, 128], strides = [1, 1]} : vector<1x512xf32> to vector<1x128xf32>
    %328 = arith.negf %327 : vector<1x128xf32>
    %329 = math.exp %328 : vector<1x128xf32>
    %cst_58 = arith.constant 1.000000e+00 : f32
    %330 = vector.broadcast %cst_58 : f32 to vector<1x128xf32>
    %331 = arith.addf %330, %329 : vector<1x128xf32>
    %332 = arith.divf %330, %331 : vector<1x128xf32>
    %333 = vector.extract_strided_slice %320 {offsets = [0, 256], sizes = [1, 128], strides = [1, 1]} : vector<1x512xf32> to vector<1x128xf32>
    %334 = math.tanh %333 : vector<1x128xf32>
    %335 = vector.extract_strided_slice %320 {offsets = [0, 384], sizes = [1, 128], strides = [1, 1]} : vector<1x512xf32> to vector<1x128xf32>
    %336 = arith.negf %335 : vector<1x128xf32>
    %337 = math.exp %336 : vector<1x128xf32>
    %cst_59 = arith.constant 1.000000e+00 : f32
    %338 = vector.broadcast %cst_59 : f32 to vector<1x128xf32>
    %339 = arith.addf %338, %337 : vector<1x128xf32>
    %340 = arith.divf %338, %339 : vector<1x128xf32>
    %341 = arith.mulf %332, %287 : vector<1x128xf32>
    %342 = arith.mulf %326, %334 : vector<1x128xf32>
    %343 = arith.addf %341, %342 : vector<1x128xf32>
    %344 = math.tanh %343 : vector<1x128xf32>
    %345 = arith.mulf %340, %344 : vector<1x128xf32>
    %346 = vector.extract_strided_slice %5 {offsets = [6, 0], sizes = [1, 512], strides = [1, 1]} : vector<8x512xf32> to vector<1x512xf32>
    %cst_60 = arith.constant dense<0.000000e+00> : vector<1x512xf32>
    %347 = tpu.matmul %317, %6, %cst_60 {dimension_numbers = #tpu.dot_dimension_numbers<[1], [0], [0], [1], [0, 0, 1, 1], [], []>} : vector<1x128xf32>, vector<128x512xf32>, vector<1x512xf32> -> vector<1x512xf32>
    %348 = arith.addf %346, %347 : vector<1x512xf32>
    %349 = vector.extract_strided_slice %348 {offsets = [0, 0], sizes = [1, 128], strides = [1, 1]} : vector<1x512xf32> to vector<1x128xf32>
    %350 = arith.negf %349 : vector<1x128xf32>
    %351 = math.exp %350 : vector<1x128xf32>
    %cst_61 = arith.constant 1.000000e+00 : f32
    %352 = vector.broadcast %cst_61 : f32 to vector<1x128xf32>
    %353 = arith.addf %352, %351 : vector<1x128xf32>
    %354 = arith.divf %352, %353 : vector<1x128xf32>
    %355 = vector.extract_strided_slice %348 {offsets = [0, 128], sizes = [1, 128], strides = [1, 1]} : vector<1x512xf32> to vector<1x128xf32>
    %356 = arith.negf %355 : vector<1x128xf32>
    %357 = math.exp %356 : vector<1x128xf32>
    %cst_62 = arith.constant 1.000000e+00 : f32
    %358 = vector.broadcast %cst_62 : f32 to vector<1x128xf32>
    %359 = arith.addf %358, %357 : vector<1x128xf32>
    %360 = arith.divf %358, %359 : vector<1x128xf32>
    %361 = vector.extract_strided_slice %348 {offsets = [0, 256], sizes = [1, 128], strides = [1, 1]} : vector<1x512xf32> to vector<1x128xf32>
    %362 = math.tanh %361 : vector<1x128xf32>
    %363 = vector.extract_strided_slice %348 {offsets = [0, 384], sizes = [1, 128], strides = [1, 1]} : vector<1x512xf32> to vector<1x128xf32>
    %364 = arith.negf %363 : vector<1x128xf32>
    %365 = math.exp %364 : vector<1x128xf32>
    %cst_63 = arith.constant 1.000000e+00 : f32
    %366 = vector.broadcast %cst_63 : f32 to vector<1x128xf32>
    %367 = arith.addf %366, %365 : vector<1x128xf32>
    %368 = arith.divf %366, %367 : vector<1x128xf32>
    %369 = arith.mulf %360, %315 : vector<1x128xf32>
    %370 = arith.mulf %354, %362 : vector<1x128xf32>
    %371 = arith.addf %369, %370 : vector<1x128xf32>
    %372 = math.tanh %371 : vector<1x128xf32>
    %373 = arith.mulf %368, %372 : vector<1x128xf32>
    %374 = tpu.concatenate %373, %345 in 1 : vector<1x128xf32>, vector<1x128xf32> -> vector<1x256xf32>
    %cst_64 = arith.constant dense<0.000000e+00> : vector<1x512xf32>
    %375 = tpu.matmul %374, %7, %cst_64 {dimension_numbers = #tpu.dot_dimension_numbers<[1], [0], [0], [1], [0, 0, 1, 1], [], []>} : vector<1x256xf32>, vector<256x512xf32>, vector<1x512xf32> -> vector<1x512xf32>
    %376 = arith.addf %375, %8 : vector<1x512xf32>
    %377 = vector.extract_strided_slice %376 {offsets = [0, 0], sizes = [1, 128], strides = [1, 1]} : vector<1x512xf32> to vector<1x128xf32>
    %378 = arith.negf %377 : vector<1x128xf32>
    %379 = math.exp %378 : vector<1x128xf32>
    %cst_65 = arith.constant 1.000000e+00 : f32
    %380 = vector.broadcast %cst_65 : f32 to vector<1x128xf32>
    %381 = arith.addf %380, %379 : vector<1x128xf32>
    %382 = arith.divf %380, %381 : vector<1x128xf32>
    %383 = vector.extract_strided_slice %376 {offsets = [0, 128], sizes = [1, 128], strides = [1, 1]} : vector<1x512xf32> to vector<1x128xf32>
    %384 = arith.negf %383 : vector<1x128xf32>
    %385 = math.exp %384 : vector<1x128xf32>
    %cst_66 = arith.constant 1.000000e+00 : f32
    %386 = vector.broadcast %cst_66 : f32 to vector<1x128xf32>
    %387 = arith.addf %386, %385 : vector<1x128xf32>
    %388 = arith.divf %386, %387 : vector<1x128xf32>
    %389 = vector.extract_strided_slice %376 {offsets = [0, 256], sizes = [1, 128], strides = [1, 1]} : vector<1x512xf32> to vector<1x128xf32>
    %390 = math.tanh %389 : vector<1x128xf32>
    %391 = vector.extract_strided_slice %376 {offsets = [0, 384], sizes = [1, 128], strides = [1, 1]} : vector<1x512xf32> to vector<1x128xf32>
    %392 = arith.negf %391 : vector<1x128xf32>
    %393 = math.exp %392 : vector<1x128xf32>
    %cst_67 = arith.constant 1.000000e+00 : f32
    %394 = vector.broadcast %cst_67 : f32 to vector<1x128xf32>
    %395 = arith.addf %394, %393 : vector<1x128xf32>
    %396 = arith.divf %394, %395 : vector<1x128xf32>
    %397 = arith.mulf %388, %343 : vector<1x128xf32>
    %398 = arith.mulf %382, %390 : vector<1x128xf32>
    %399 = arith.addf %397, %398 : vector<1x128xf32>
    %400 = math.tanh %399 : vector<1x128xf32>
    %401 = arith.mulf %396, %400 : vector<1x128xf32>
    %402 = vector.extract_strided_slice %5 {offsets = [7, 0], sizes = [1, 512], strides = [1, 1]} : vector<8x512xf32> to vector<1x512xf32>
    %cst_68 = arith.constant dense<0.000000e+00> : vector<1x512xf32>
    %403 = tpu.matmul %373, %6, %cst_68 {dimension_numbers = #tpu.dot_dimension_numbers<[1], [0], [0], [1], [0, 0, 1, 1], [], []>} : vector<1x128xf32>, vector<128x512xf32>, vector<1x512xf32> -> vector<1x512xf32>
    %404 = arith.addf %402, %403 : vector<1x512xf32>
    %405 = vector.extract_strided_slice %404 {offsets = [0, 0], sizes = [1, 128], strides = [1, 1]} : vector<1x512xf32> to vector<1x128xf32>
    %406 = arith.negf %405 : vector<1x128xf32>
    %407 = math.exp %406 : vector<1x128xf32>
    %cst_69 = arith.constant 1.000000e+00 : f32
    %408 = vector.broadcast %cst_69 : f32 to vector<1x128xf32>
    %409 = arith.addf %408, %407 : vector<1x128xf32>
    %410 = arith.divf %408, %409 : vector<1x128xf32>
    %411 = vector.extract_strided_slice %404 {offsets = [0, 128], sizes = [1, 128], strides = [1, 1]} : vector<1x512xf32> to vector<1x128xf32>
    %412 = arith.negf %411 : vector<1x128xf32>
    %413 = math.exp %412 : vector<1x128xf32>
    %cst_70 = arith.constant 1.000000e+00 : f32
    %414 = vector.broadcast %cst_70 : f32 to vector<1x128xf32>
    %415 = arith.addf %414, %413 : vector<1x128xf32>
    %416 = arith.divf %414, %415 : vector<1x128xf32>
    %417 = vector.extract_strided_slice %404 {offsets = [0, 256], sizes = [1, 128], strides = [1, 1]} : vector<1x512xf32> to vector<1x128xf32>
    %418 = math.tanh %417 : vector<1x128xf32>
    %419 = vector.extract_strided_slice %404 {offsets = [0, 384], sizes = [1, 128], strides = [1, 1]} : vector<1x512xf32> to vector<1x128xf32>
    %420 = arith.negf %419 : vector<1x128xf32>
    %421 = math.exp %420 : vector<1x128xf32>
    %cst_71 = arith.constant 1.000000e+00 : f32
    %422 = vector.broadcast %cst_71 : f32 to vector<1x128xf32>
    %423 = arith.addf %422, %421 : vector<1x128xf32>
    %424 = arith.divf %422, %423 : vector<1x128xf32>
    %425 = arith.mulf %416, %371 : vector<1x128xf32>
    %426 = arith.mulf %410, %418 : vector<1x128xf32>
    %427 = arith.addf %425, %426 : vector<1x128xf32>
    %428 = math.tanh %427 : vector<1x128xf32>
    %429 = arith.mulf %424, %428 : vector<1x128xf32>
    %430 = tpu.concatenate %429, %401 in 1 : vector<1x128xf32>, vector<1x128xf32> -> vector<1x256xf32>
    %cst_72 = arith.constant dense<0.000000e+00> : vector<1x512xf32>
    %431 = tpu.matmul %430, %7, %cst_72 {dimension_numbers = #tpu.dot_dimension_numbers<[1], [0], [0], [1], [0, 0, 1, 1], [], []>} : vector<1x256xf32>, vector<256x512xf32>, vector<1x512xf32> -> vector<1x512xf32>
    %432 = arith.addf %431, %8 : vector<1x512xf32>
    %433 = vector.extract_strided_slice %432 {offsets = [0, 0], sizes = [1, 128], strides = [1, 1]} : vector<1x512xf32> to vector<1x128xf32>
    %434 = arith.negf %433 : vector<1x128xf32>
    %435 = math.exp %434 : vector<1x128xf32>
    %cst_73 = arith.constant 1.000000e+00 : f32
    %436 = vector.broadcast %cst_73 : f32 to vector<1x128xf32>
    %437 = arith.addf %436, %435 : vector<1x128xf32>
    %438 = arith.divf %436, %437 : vector<1x128xf32>
    %439 = vector.extract_strided_slice %432 {offsets = [0, 128], sizes = [1, 128], strides = [1, 1]} : vector<1x512xf32> to vector<1x128xf32>
    %440 = arith.negf %439 : vector<1x128xf32>
    %441 = math.exp %440 : vector<1x128xf32>
    %cst_74 = arith.constant 1.000000e+00 : f32
    %442 = vector.broadcast %cst_74 : f32 to vector<1x128xf32>
    %443 = arith.addf %442, %441 : vector<1x128xf32>
    %444 = arith.divf %442, %443 : vector<1x128xf32>
    %445 = vector.extract_strided_slice %432 {offsets = [0, 256], sizes = [1, 128], strides = [1, 1]} : vector<1x512xf32> to vector<1x128xf32>
    %446 = math.tanh %445 : vector<1x128xf32>
    %447 = vector.extract_strided_slice %432 {offsets = [0, 384], sizes = [1, 128], strides = [1, 1]} : vector<1x512xf32> to vector<1x128xf32>
    %448 = arith.negf %447 : vector<1x128xf32>
    %449 = math.exp %448 : vector<1x128xf32>
    %cst_75 = arith.constant 1.000000e+00 : f32
    %450 = vector.broadcast %cst_75 : f32 to vector<1x128xf32>
    %451 = arith.addf %450, %449 : vector<1x128xf32>
    %452 = arith.divf %450, %451 : vector<1x128xf32>
    %453 = arith.mulf %444, %399 : vector<1x128xf32>
    %454 = arith.mulf %438, %446 : vector<1x128xf32>
    %455 = arith.addf %453, %454 : vector<1x128xf32>
    %456 = math.tanh %455 : vector<1x128xf32>
    %457 = arith.mulf %452, %456 : vector<1x128xf32>
    %c0_76 = arith.constant 0 : index
    %c0_77 = arith.constant 0 : index
    %458 = vector.load %arg6[%c0_76, %c0_77] : memref<128x1xf32, #tpu.memory_space<vmem>>, vector<128x1xf32>
    %cst_78 = arith.constant dense<0.000000e+00> : vector<1x1xf32>
    %459 = tpu.matmul %457, %458, %cst_78 {dimension_numbers = #tpu.dot_dimension_numbers<[1], [0], [0], [1], [0, 0, 1, 1], [], []>} : vector<1x128xf32>, vector<128x1xf32>, vector<1x1xf32> -> vector<1x1xf32>
    %c0_79 = arith.constant 0 : index
    %c0_80 = arith.constant 0 : index
    %460 = vector.load %arg7[%c0_79, %c0_80] : memref<1x1xf32, #tpu.memory_space<vmem>>, vector<1x1xf32>
    %461 = arith.addf %459, %460 : vector<1x1xf32>
    %c0_81 = arith.constant 0 : index
    %c0_82 = arith.constant 0 : index
    %462 = vector.load %arg8[%c0_81, %c0_82] : memref<1x1xf32, #tpu.memory_space<vmem>>, vector<1x1xf32>
    tpu.vector_store %arg8[%c0_81, %c0_82], %461 {strides = array<i32>} : memref<1x1xf32, #tpu.memory_space<vmem>>, vector<1x1xf32>,
    return
  }
}

</mosaic_0001>

<llo_original>
// kernel: tpu_custom_call.1
$region0: #{tpu_custom_call.1}
  #allocation0 [shape = 'u32[]', space=smem, size = 0x4, offset = 0x4, fixed_abs, tag = 'smem constant byte address 0x4 - core index']
  #allocation1 [shape = 'u32[144,128]{1,0:T(1,128)}', space=vmem, size = 0x12000, scoped, tag = 'internal scratch']
  #allocation2 [shape = 'f32[1,1]{1,0:T(1,128)S(1)}', space=vmem, size = 0x200, scoped, tag = 'scoped memory for tpu_custom_call.1']
  %s0 = inlined_call_operand.vmem [shape: f32[8,4], index: 0, kind: input, shape index: {}]
  %s1 = inlined_call_operand.vmem [shape: f32[4,512], index: 1, kind: input, shape index: {}]
  %s2 = inlined_call_operand.vmem [shape: f32[1,512], index: 2, kind: input, shape index: {}]
  %s3 = inlined_call_operand.hbm [shape: f32[128,512], index: 3, kind: input, shape index: {}]
  %s4 = inlined_call_operand.hbm [shape: f32[256,512], index: 4, kind: input, shape index: {}]
  %s5 = inlined_call_operand.vmem [shape: f32[1,512], index: 5, kind: input, shape index: {}]
  %s6 = inlined_call_operand.vmem [shape: f32[128,1], index: 6, kind: input, shape index: {}]
  %s7 = inlined_call_operand.<no memory space> [shape: f32[1,1], index: 7, kind: input, shape index: {}]
  %s8 = inlined_call_operand.hbm [shape: f32[1,1], index: 8, kind: output, shape index: {}]
  %s9 = sld [smem:[#allocation0]]
  $region50: #{tpu_custom_call.1} parent=0
    _
  %s11 = ssub.s32 1, %s9
  %s12 = scalar_select 0, %s11, %s9
  %v13 = vstv %s7
  %14 = vst [vmem:[#allocation2] sm:$0x1] %v13
  $region1: #{tpu_custom_call.1} parent=0
    #allocation3 [shape = 'u8[262144]{0}', space=vmem, size = 0x40000, scoped, tag = 'input window, operand 3, single buffered']
    #allocation4 [shape = 's32[1]{0}', space=sflag, size = 0x4, scoped, tag = 'scoped memory for tpu_custom_call.1']
    #allocation5 [shape = 's32[1]{0}', space=sflag, size = 0x4, scoped, tag = 'scoped memory for tpu_custom_call.1']
    #allocation6 [shape = 'u8[524288]{0}', space=vmem, size = 0x80000, scoped, tag = 'input window, operand 4, single buffered']
    #allocation7 [shape = 's32[1]{0}', space=sflag, size = 0x4, scoped, tag = 'scoped memory for tpu_custom_call.1']
    #allocation8 [shape = 'u8[512]{0}', space=vmem, size = 0x400, scoped, tag = 'output window, operand 0, single buffered']
    %15 = vsyncpa [#allocation4], 0
    %16 = vsyncpa [#allocation7], 0
    %17 = vsyncpa [#allocation5], 0
    // Predicated region
    $region2: #{tpu_custom_call.1} parent=1 // pred_check
      _
    $region3: #{tpu_custom_call.1} parent=1 // pred_check_branch
      %19 = sbr.rel (0) target = $region5
    $region4: #{tpu_custom_call.1} parent=1 // pred_region
      _
    $region5: #{tpu_custom_call.1} parent=1 // pred_fallthru
      _
    // Predicated region
    $region6: #{tpu_custom_call.1} parent=1 // pred_check
      _
    $region7: #{tpu_custom_call.1} parent=1 // pred_check_branch
      %21 = sbr.rel (0) target = $region9
    $region8: #{tpu_custom_call.1} parent=1 // pred_region
      _
    $region9: #{tpu_custom_call.1} parent=1 // pred_fallthru
      _
    // Predicated region
    $region10: #{tpu_custom_call.1} parent=1 // pred_check
      _
    $region11: #{tpu_custom_call.1} parent=1 // pred_check_branch
      %23 = sbr.rel (0) target = $region13
    $region12: #{tpu_custom_call.1} parent=1 // pred_region
      _
    $region13: #{tpu_custom_call.1} parent=1 // pred_fallthru
      _
    // Predicated region
    $region14: #{tpu_custom_call.1} parent=1 // pred_check
      _
    $region15: #{tpu_custom_call.1} parent=1 // pred_check_branch
      %25 = sbr.rel (0) target = $region17
    $region16: #{tpu_custom_call.1} parent=1 // pred_region
      %s27 = ssub.s32 8192, 8192
      %28 = vsyncadd [#allocation4], %s27
      %s29 = sshll.u32 [#allocation3], 4
      %s30 = int_to_ptr.vmem [resolvable:$true] %s29
      %35 = dma.hbm_to_vmem [thread:$0]  %s3, 8192, %s30, [#allocation4], 512, 512, 32
    $region17: #{tpu_custom_call.1} parent=1 // pred_fallthru
      _
    // Predicated region
    $region18: #{tpu_custom_call.1} parent=1 // pred_check
      _
    $region19: #{tpu_custom_call.1} parent=1 // pred_check_branch
      %37 = sbr.rel (0) target = $region21
    $region20: #{tpu_custom_call.1} parent=1 // pred_region
      %s39 = ssub.s32 16384, 16384
      %40 = vsyncadd [#allocation7], %s39
      %s41 = sshll.u32 [#allocation6], 4
      %s42 = int_to_ptr.vmem [resolvable:$true] %s41
      %47 = dma.hbm_to_vmem [thread:$0]  %s4, 16384, %s42, [#allocation7], 512, 512, 32
    $region21: #{tpu_custom_call.1} parent=1 // pred_fallthru
      _
    // Predicated region
    $region22: #{tpu_custom_call.1} parent=1 // pred_check
      _
    $region23: #{tpu_custom_call.1} parent=1 // pred_check_branch
      %49 = sbr.rel (0) target = $region25
    $region24: #{tpu_custom_call.1} parent=1 // pred_region
      _
    $region25: #{tpu_custom_call.1} parent=1 // pred_fallthru
      _
    // Predicated region
    $region26: #{tpu_custom_call.1} parent=1 // pred_check
      _
    $region27: #{tpu_custom_call.1} parent=1 // pred_check_branch
      %51 = sbr.rel (0) target = $region29
    $region28: #{tpu_custom_call.1} parent=1 // pred_region
      _
    $region29: #{tpu_custom_call.1} parent=1 // pred_fallthru
      _
    // Predicated region
    $region30: #{tpu_custom_call.1} parent=1 // pred_check
      _
    $region31: #{tpu_custom_call.1} parent=1 // pred_check_branch
      %53 = sbr.rel (0) target = $region33
    $region32: #{tpu_custom_call.1} parent=1 // pred_region
      _
    $region33: #{tpu_custom_call.1} parent=1 // pred_fallthru
      _
    // Predicated region
    $region34: #{tpu_custom_call.1} parent=1 // pred_check
      _
    $region35: #{tpu_custom_call.1} parent=1 // pred_check_branch
      %55 = sbr.rel (0) target = $region37
    $region36: #{tpu_custom_call.1} parent=1 // pred_region
      %56 = dma.done [#allocation4], 8192
    $region37: #{tpu_custom_call.1} parent=1 // pred_fallthru
      _
    // Predicated region
    $region38: #{tpu_custom_call.1} parent=1 // pred_check
      _
    $region39: #{tpu_custom_call.1} parent=1 // pred_check_branch
      %58 = sbr.rel (0) target = $region41
    $region40: #{tpu_custom_call.1} parent=1 // pred_region
      %59 = dma.done [#allocation7], 16384
    $region41: #{tpu_custom_call.1} parent=1 // pred_fallthru
      _
    %v60 = vld [vmem:[%s0] sm:$0xff]
    %v61 = vld [vmem:[%s1] sm:$0xff]
    %v62 = vld [vmem:[%s1 + $0x8] sm:$0xff]
    %v63 = vld [vmem:[%s2] sm:$0xf]
    %v65 = vlaneseq
    %v66 = vshrl.u32 %v65, 7
    %v67 = vsub.s32 0, %v66
    %v68 = vrot.slane %v63, %v67
    %v69 = vlaneseq
    %v70 = vshrl.u32 %v69, 7
    %v71 = vsub.s32 1, %v70
    %v72 = vrot.slane %v63, %v71
    %v73 = vlaneseq
    %v74 = vshrl.u32 %v73, 7
    %v75 = vsub.s32 2, %v74
    %v76 = vrot.slane %v63, %v75
    %v77 = vlaneseq
    %v78 = vshrl.u32 %v77, 7
    %v79 = vsub.s32 3, %v78
    %v80 = vrot.slane %v63, %v79
    %v87 = vcombine.high %v61, %v61
    %v88 = vcombine.high %v62, %v62
    %vm89 = vcmask 31744
    %v91 = vsel %vm89, %v60, 0
    %vm93 = vcmask 1043456
    %v94 = vsel %vm93, %v61, 0
    %v96 = vsel %vm93, %v87, 0
    %v98 = vsel %vm93, %v62, 0
    %v100 = vsel %vm93, %v88, 0
    %102 = vmatprep.subr.mxu0 %v96
    %103 = vmatpush1.msra.mxu0 %v94
    %104 = vmatprep.subr.mxu0 0.0
    %105 = vmatpush1.msra.mxu0 0.0
    %106 = vmatprep.subr.mxu0 0.0
    %107 = vmatpush1.msra.mxu0 0.0
    %108 = vmatprep.subr.mxu0 0.0
    %109 = vmatpush1.msra.mxu0 0.0
    %110 = vmatprep.subr.mxu0 0.0
    %111 = vmatpush1.msra.mxu0 0.0
    %112 = vmatprep.subr.mxu0 0.0
    %113 = vmatpush1.msra.mxu0 0.0
    %114 = vmatprep.subr.mxu0 0.0
    %115 = vmatpush1.msra.mxu0 0.0
    %116 = vmatprep.subr.mxu0 0.0
    %117 = vmatpush1.msra.mxu0 0.0
    %118 = vmatprep.subr.mxu0 0.0
    %119 = vmatpush1.msra.mxu0 0.0
    %120 = vmatprep.subr.mxu0 0.0
    %121 = vmatpush1.msra.mxu0 0.0
    %122 = vmatprep.subr.mxu0 0.0
    %123 = vmatpush1.msra.mxu0 0.0
    %124 = vmatprep.subr.mxu0 0.0
    %125 = vmatpush1.msra.mxu0 0.0
    %126 = vmatprep.subr.mxu0 0.0
    %127 = vmatpush1.msra.mxu0 0.0
    %128 = vmatprep.subr.mxu0 0.0
    %129 = vmatpush1.msra.mxu0 0.0
    %130 = vmatprep.subr.mxu0 0.0
    %131 = vmatpush1.msra.mxu0 0.0
    %132 = vmatprep.subr.mxu0 0.0
    %133 = vmatpush1.msra.mxu0 0.0
    %134 = vmatprep.subr.mxu0 0.0
    %135 = vmatpush1.msra.mxu0 0.0
    %136 = vmatprep.subr.mxu0 0.0
    %137 = vmatpush1.msra.mxu0 0.0
    %138 = vmatprep.subr.mxu0 0.0
    %139 = vmatpush1.msra.mxu0 0.0
    %140 = vmatprep.subr.mxu0 0.0
    %141 = vmatpush1.msra.mxu0 0.0
    %142 = vmatprep.subr.mxu0 0.0
    %143 = vmatpush1.msra.mxu0 0.0
    %144 = vmatprep.subr.mxu0 0.0
    %145 = vmatpush1.msra.mxu0 0.0
    %146 = vmatprep.subr.mxu0 0.0
    %147 = vmatpush1.msra.mxu0 0.0
    %148 = vmatprep.subr.mxu0 0.0
    %149 = vmatpush1.msra.mxu0 0.0
    %150 = vmatprep.subr.mxu0 0.0
    %151 = vmatpush1.msra.mxu0 0.0
    %152 = vmatprep.subr.mxu0 0.0
    %153 = vmatpush1.msra.mxu0 0.0
    %154 = vmatprep.subr.mxu0 0.0
    %155 = vmatpush1.msra.mxu0 0.0
    %156 = vmatprep.subr.mxu0 0.0
    %157 = vmatpush1.msra.mxu0 0.0
    %158 = vmatprep.subr.mxu0 0.0
    %159 = vmatpush1.msra.mxu0 0.0
    %160 = vmatprep.subr.mxu0 0.0
    %161 = vmatpush1.msra.mxu0 0.0
    %162 = vmatprep.subr.mxu0 0.0
    %163 = vmatpush1.msra.mxu0 0.0
    %164 = vmatprep.subr.mxu0 0.0
    %165 = vmatpush1.msra.mxu0 0.0
    %166 = vmatprep.mubr.f32.mxu0 0.0
    %167 = vmatmul.mubr.f32.gmra.mrb[0].mxu0 %v91
    %v168 = vpop.f32.mrb[0].mxu0
    %v169 = vadd.f32 %v68, %v168
    %v170 = vpop.f32.mrb[0].mxu0
    %v171 = vadd.f32 %v72, %v170
    %172 = vdwg.mxu0
    %173 = vmatprep.subr.mxu0 %v100
    %174 = vmatpush1.msra.mxu0 %v98
    %175 = vmatprep.subr.mxu0 0.0
    %176 = vmatpush1.msra.mxu0 0.0
    %177 = vmatprep.subr.mxu0 0.0
    %178 = vmatpush1.msra.mxu0 0.0
    %179 = vmatprep.subr.mxu0 0.0
    %180 = vmatpush1.msra.mxu0 0.0
    %181 = vmatprep.subr.mxu0 0.0
    %182 = vmatpush1.msra.mxu0 0.0
    %183 = vmatprep.subr.mxu0 0.0
    %184 = vmatpush1.msra.mxu0 0.0
    %185 = vmatprep.subr.mxu0 0.0
    %186 = vmatpush1.msra.mxu0 0.0
    %187 = vmatprep.subr.mxu0 0.0
    %188 = vmatpush1.msra.mxu0 0.0
    %189 = vmatprep.subr.mxu0 0.0
    %190 = vmatpush1.msra.mxu0 0.0
    %191 = vmatprep.subr.mxu0 0.0
    %192 = vmatpush1.msra.mxu0 0.0
    %193 = vmatprep.subr.mxu0 0.0
    %194 = vmatpush1.msra.mxu0 0.0
    %195 = vmatprep.subr.mxu0 0.0
    %196 = vmatpush1.msra.mxu0 0.0
    %197 = vmatprep.subr.mxu0 0.0
    %198 = vmatpush1.msra.mxu0 0.0
    %199 = vmatprep.subr.mxu0 0.0
    %200 = vmatpush1.msra.mxu0 0.0
    %201 = vmatprep.subr.mxu0 0.0
    %202 = vmatpush1.msra.mxu0 0.0
    %203 = vmatprep.subr.mxu0 0.0
    %204 = vmatpush1.msra.mxu0 0.0
    %205 = vmatprep.subr.mxu0 0.0
    %206 = vmatpush1.msra.mxu0 0.0
    %207 = vmatprep.subr.mxu0 0.0
    %208 = vmatpush1.msra.mxu0 0.0
    %209 = vmatprep.subr.mxu0 0.0
    %210 = vmatpush1.msra.mxu0 0.0
    %211 = vmatprep.subr.mxu0 0.0
    %212 = vmatpush1.msra.mxu0 0.0
    %213 = vmatprep.subr.mxu0 0.0
    %214 = vmatpush1.msra.mxu0 0.0
    %215 = vmatprep.subr.mxu0 0.0
    %216 = vmatpush1.msra.mxu0 0.0
    %217 = vmatprep.subr.mxu0 0.0
    %218 = vmatpush1.msra.mxu0 0.0
    %219 = vmatprep.subr.mxu0 0.0
    %220 = vmatpush1.msra.mxu0 0.0
    %221 = vmatprep.subr.mxu0 0.0
    %222 = vmatpush1.msra.mxu0 0.0
    %223 = vmatprep.subr.mxu0 0.0
    %224 = vmatpush1.msra.mxu0 0.0
    %225 = vmatprep.subr.mxu0 0.0
    %226 = vmatpush1.msra.mxu0 0.0
    %227 = vmatprep.subr.mxu0 0.0
    %228 = vmatpush1.msra.mxu0 0.0
    %229 = vmatprep.subr.mxu0 0.0
    %230 = vmatpush1.msra.mxu0 0.0
    %231 = vmatprep.subr.mxu0 0.0
    %232 = vmatpush1.msra.mxu0 0.0
    %233 = vmatprep.subr.mxu0 0.0
    %234 = vmatpush1.msra.mxu0 0.0
    %235 = vmatprep.subr.mxu0 0.0
    %236 = vmatpush1.msra.mxu0 0.0
    %237 = vmatprep.mubr.f32.mxu0 0.0
    %238 = vmatmul.mubr.f32.gmra.mrb[0].mxu0 %v91
    %v239 = vpop.f32.mrb[0].mxu0
    %v240 = vadd.f32 %v76, %v239
    %v241 = vpop.f32.mrb[0].mxu0
    %v242 = vadd.f32 %v80, %v241
    %243 = vdwg.mxu0
    %v244 = vld [vmem:[#allocation3] sm:$0xff]
    %v245 = vld [vmem:[#allocation3 + $0x8] sm:$0xff]
    %v246 = vld [vmem:[#allocation3 + $0x10] sm:$0xff]
    %v247 = vld [vmem:[#allocation3 + $0x18] sm:$0xff]
    %v248 = vld [vmem:[#allocation3 + $0x20] sm:$0xff]
    %v249 = vld [vmem:[#allocation3 + $0x28] sm:$0xff]
    %v250 = vld [vmem:[#allocation3 + $0x30] sm:$0xff]
    %v251 = vld [vmem:[#allocation3 + $0x38] sm:$0xff]
    %v252 = vld [vmem:[#allocation3 + $0x40] sm:$0xff]
    %v253 = vld [vmem:[#allocation3 + $0x48] sm:$0xff]
    %v254 = vld [vmem:[#allocation3 + $0x50] sm:$0xff]
    %v255 = vld [vmem:[#allocation3 + $0x58] sm:$0xff]
    %v256 = vld [vmem:[#allocation3 + $0x60] sm:$0xff]
    %v257 = vld [vmem:[#allocation3 + $0x68] sm:$0xff]
    %v258 = vld [vmem:[#allocation3 + $0x70] sm:$0xff]
    %v259 = vld [vmem:[#allocation3 + $0x78] sm:$0xff]
    %v260 = vld [vmem:[#allocation3 + $0x80] sm:$0xff]
    %v261 = vld [vmem:[#allocation3 + $0x88] sm:$0xff]
    %v262 = vld [vmem:[#allocation3 + $0x90] sm:$0xff]
    %v263 = vld [vmem:[#allocation3 + $0x98] sm:$0xff]
    %v264 = vld [vmem:[#allocation3 + $0xa0] sm:$0xff]
    %v265 = vld [vmem:[#allocation3 + $0xa8] sm:$0xff]
    %v266 = vld [vmem:[#allocation3 + $0xb0] sm:$0xff]
    %v267 = vld [vmem:[#allocation3 + $0xb8] sm:$0xff]
    %v268 = vld [vmem:[#allocation3 + $0xc0] sm:$0xff]
    %v269 = vld [vmem:[#allocation3 + $0xc8] sm:$0xff]
    %v270 = vld [vmem:[#allocation3 + $0xd0] sm:$0xff]
    %v271 = vld [vmem:[#allocation3 + $0xd8] sm:$0xff]
    %v272 = vld [vmem:[#allocation3 + $0xe0] sm:$0xff]
    %v273 = vld [vmem:[#allocation3 + $0xe8] sm:$0xff]
    %v274 = vld [vmem:[#allocation3 + $0xf0] sm:$0xff]
    %v275 = vld [vmem:[#allocation3 + $0xf8] sm:$0xff]
    %v276 = vld [vmem:[#allocation3 + $0x100] sm:$0xff]
    %v277 = vld [vmem:[#allocation3 + $0x108] sm:$0xff]
    %v278 = vld [vmem:[#allocation3 + $0x110] sm:$0xff]
    %v279 = vld [vmem:[#allocation3 + $0x118] sm:$0xff]
    %v280 = vld [vmem:[#allocation3 + $0x120] sm:$0xff]
    %v281 = vld [vmem:[#allocation3 + $0x128] sm:$0xff]
    %v282 = vld [vmem:[#allocation3 + $0x130] sm:$0xff]
    %v283 = vld [vmem:[#allocation3 + $0x138] sm:$0xff]
    %v284 = vld [vmem:[#allocation3 + $0x140] sm:$0xff]
    %v285 = vld [vmem:[#allocation3 + $0x148] sm:$0xff]
    %v286 = vld [vmem:[#allocation3 + $0x150] sm:$0xff]
    %v287 = vld [vmem:[#allocation3 + $0x158] sm:$0xff]
    %v288 = vld [vmem:[#allocation3 + $0x160] sm:$0xff]
    %v289 = vld [vmem:[#allocation3 + $0x168] sm:$0xff]
    %v290 = vld [vmem:[#allocation3 + $0x170] sm:$0xff]
    %v291 = vld [vmem:[#allocation3 + $0x178] sm:$0xff]
    %v292 = vld [vmem:[#allocation3 + $0x180] sm:$0xff]
    %v293 = vld [vmem:[#allocation3 + $0x188] sm:$0xff]
    %v294 = vld [vmem:[#allocation3 + $0x190] sm:$0xff]
    %v295 = vld [vmem:[#allocation3 + $0x198] sm:$0xff]
    %v296 = vld [vmem:[#allocation3 + $0x1a0] sm:$0xff]
    %v297 = vld [vmem:[#allocation3 + $0x1a8] sm:$0xff]
    %v298 = vld [vmem:[#allocation3 + $0x1b0] sm:$0xff]
    %v299 = vld [vmem:[#allocation3 + $0x1b8] sm:$0xff]
    %v300 = vld [vmem:[#allocation3 + $0x1c0] sm:$0xff]
    %v301 = vld [vmem:[#allocation3 + $0x1c8] sm:$0xff]
    %v302 = vld [vmem:[#allocation3 + $0x1d0] sm:$0xff]
    %v303 = vld [vmem:[#allocation3 + $0x1d8] sm:$0xff]
    %v304 = vld [vmem:[#allocation3 + $0x1e0] sm:$0xff]
    %v305 = vld [vmem:[#allocation3 + $0x1e8] sm:$0xff]
    %v306 = vld [vmem:[#allocation3 + $0x1f0] sm:$0xff]
    %v307 = vld [vmem:[#allocation3 + $0x1f8] sm:$0xff]
    %v308 = vld [vmem:[#allocation6] sm:$0xff]
    %v309 = vld [vmem:[#allocation6 + $0x8] sm:$0xff]
    %v310 = vld [vmem:[#allocation6 + $0x10] sm:$0xff]
    %v311 = vld [vmem:[#allocation6 + $0x18] sm:$0xff]
    %v312 = vld [vmem:[#allocation6 + $0x20] sm:$0xff]
    %v313 = vld [vmem:[#allocation6 + $0x28] sm:$0xff]
    %v314 = vld [vmem:[#allocation6 + $0x30] sm:$0xff]
    %v315 = vld [vmem:[#allocation6 + $0x38] sm:$0xff]
    %v316 = vld [vmem:[#allocation6 + $0x40] sm:$0xff]
    %v317 = vld [vmem:[#allocation6 + $0x48] sm:$0xff]
    %v318 = vld [vmem:[#allocation6 + $0x50] sm:$0xff]
    %v319 = vld [vmem:[#allocation6 + $0x58] sm:$0xff]
    %v320 = vld [vmem:[#allocation6 + $0x60] sm:$0xff]
    %v321 = vld [vmem:[#allocation6 + $0x68] sm:$0xff]
    %v322 = vld [vmem:[#allocation6 + $0x70] sm:$0xff]
    %v323 = vld [vmem:[#allocation6 + $0x78] sm:$0xff]
    %v324 = vld [vmem:[#allocation6 + $0x80] sm:$0xff]
    %v325 = vld [vmem:[#allocation6 + $0x88] sm:$0xff]
    %v326 = vld [vmem:[#allocation6 + $0x90] sm:$0xff]
    %v327 = vld [vmem:[#allocation6 + $0x98] sm:$0xff]
    %v328 = vld [vmem:[#allocation6 + $0xa0] sm:$0xff]
    %v329 = vld [vmem:[#allocation6 + $0xa8] sm:$0xff]
    %v330 = vld [vmem:[#allocation6 + $0xb0] sm:$0xff]
    %v331 = vld [vmem:[#allocation6 + $0xb8] sm:$0xff]
    %v332 = vld [vmem:[#allocation6 + $0xc0] sm:$0xff]
    %v333 = vld [vmem:[#allocation6 + $0xc8] sm:$0xff]
    %v334 = vld [vmem:[#allocation6 + $0xd0] sm:$0xff]
    %v335 = vld [vmem:[#allocation6 + $0xd8] sm:$0xff]
    %v336 = vld [vmem:[#allocation6 + $0xe0] sm:$0xff]
    %v337 = vld [vmem:[#allocation6 + $0xe8] sm:$0xff]
    %v338 = vld [vmem:[#allocation6 + $0xf0] sm:$0xff]
    %v339 = vld [vmem:[#allocation6 + $0xf8] sm:$0xff]
    %v340 = vld [vmem:[#allocation6 + $0x100] sm:$0xff]
    %v341 = vld [vmem:[#allocation6 + $0x108] sm:$0xff]
    %v342 = vld [vmem:[#allocation6 + $0x110] sm:$0xff]
    %v343 = vld [vmem:[#allocation6 + $0x118] sm:$0xff]
    %v344 = vld [vmem:[#allocation6 + $0x120] sm:$0xff]
    %v345 = vld [vmem:[#allocation6 + $0x128] sm:$0xff]
    %v346 = vld [vmem:[#allocation6 + $0x130] sm:$0xff]
    %v347 = vld [vmem:[#allocation6 + $0x138] sm:$0xff]
    %v348 = vld [vmem:[#allocation6 + $0x140] sm:$0xff]
    %v349 = vld [vmem:[#allocation6 + $0x148] sm:$0xff]
    %v350 = vld [vmem:[#allocation6 + $0x150] sm:$0xff]
    %v351 = vld [vmem:[#allocation6 + $0x158] sm:$0xff]
    %v352 = vld [vmem:[#allocation6 + $0x160] sm:$0xff]
    %v353 = vld [vmem:[#allocation6 + $0x168] sm:$0xff]
    %v354 = vld [vmem:[#allocation6 + $0x170] sm:$0xff]
    %v355 = vld [vmem:[#allocation6 + $0x178] sm:$0xff]
    %v356 = vld [vmem:[#allocation6 + $0x180] sm:$0xff]
    %v357 = vld [vmem:[#allocation6 + $0x188] sm:$0xff]
    %v358 = vld [vmem:[#allocation6 + $0x190] sm:$0xff]
    %v359 = vld [vmem:[#allocation6 + $0x198] sm:$0xff]
    %v360 = vld [vmem:[#allocation6 + $0x1a0] sm:$0xff]
    %v361 = vld [vmem:[#allocation6 + $0x1a8] sm:$0xff]
    %v362 = vld [vmem:[#allocation6 + $0x1b0] sm:$0xff]
    %v363 = vld [vmem:[#allocation6 + $0x1b8] sm:$0xff]
    %v364 = vld [vmem:[#allocation6 + $0x1c0] sm:$0xff]
    %v365 = vld [vmem:[#allocation6 + $0x1c8] sm:$0xff]
    %v366 = vld [vmem:[#allocation6 + $0x1d0] sm:$0xff]
    %v367 = vld [vmem:[#allocation6 + $0x1d8] sm:$0xff]
    %v368 = vld [vmem:[#allocation6 + $0x1e0] sm:$0xff]
    %v369 = vld [vmem:[#allocation6 + $0x1e8] sm:$0xff]
    %v370 = vld [vmem:[#allocation6 + $0x1f0] sm:$0xff]
    %v371 = vld [vmem:[#allocation6 + $0x1f8] sm:$0xff]
    %v372 = vld [vmem:[#allocation6 + $0x200] sm:$0xff]
    %v373 = vld [vmem:[#allocation6 + $0x208] sm:$0xff]
    %v374 = vld [vmem:[#allocation6 + $0x210] sm:$0xff]
    %v375 = vld [vmem:[#allocation6 + $0x218] sm:$0xff]
    %v376 = vld [vmem:[#allocation6 + $0x220] sm:$0xff]
    %v377 = vld [vmem:[#allocation6 + $0x228] sm:$0xff]
    %v378 = vld [vmem:[#allocation6 + $0x230] sm:$0xff]
    %v379 = vld [vmem:[#allocation6 + $0x238] sm:$0xff]
    %v380 = vld [vmem:[#allocation6 + $0x240] sm:$0xff]
    %v381 = vld [vmem:[#allocation6 + $0x248] sm:$0xff]
    %v382 = vld [vmem:[#allocation6 + $0x250] sm:$0xff]
    %v383 = vld [vmem:[#allocation6 + $0x258] sm:$0xff]
    %v384 = vld [vmem:[#allocation6 + $0x260] sm:$0xff]
    %v385 = vld [vmem:[#allocation6 + $0x268] sm:$0xff]
    %v386 = vld [vmem:[#allocation6 + $0x270] sm:$0xff]
    %v387 = vld [vmem:[#allocation6 + $0x278] sm:$0xff]
    %v388 = vld [vmem:[#allocation6 + $0x280] sm:$0xff]
    %v389 = vld [vmem:[#allocation6 + $0x288] sm:$0xff]
    %v390 = vld [vmem:[#allocation6 + $0x290] sm:$0xff]
    %v391 = vld [vmem:[#allocation6 + $0x298] sm:$0xff]
    %v392 = vld [vmem:[#allocation6 + $0x2a0] sm:$0xff]
    %v393 = vld [vmem:[#allocation6 + $0x2a8] sm:$0xff]
    %v394 = vld [vmem:[#allocation6 + $0x2b0] sm:$0xff]
    %v395 = vld [vmem:[#allocation6 + $0x2b8] sm:$0xff]
    %v396 = vld [vmem:[#allocation6 + $0x2c0] sm:$0xff]
    %v397 = vld [vmem:[#allocation6 + $0x2c8] sm:$0xff]
    %v398 = vld [vmem:[#allocation6 + $0x2d0] sm:$0xff]
    %v399 = vld [vmem:[#allocation6 + $0x2d8] sm:$0xff]
    %v400 = vld [vmem:[#allocation6 + $0x2e0] sm:$0xff]
    %v401 = vld [vmem:[#allocation6 + $0x2e8] sm:$0xff]
    %v402 = vld [vmem:[#allocation6 + $0x2f0] sm:$0xff]
    %v403 = vld [vmem:[#allocation6 + $0x2f8] sm:$0xff]
    %v404 = vld [vmem:[#allocation6 + $0x300] sm:$0xff]
    %v405 = vld [vmem:[#allocation6 + $0x308] sm:$0xff]
    %v406 = vld [vmem:[#allocation6 + $0x310] sm:$0xff]
    %v407 = vld [vmem:[#allocation6 + $0x318] sm:$0xff]
    %v408 = vld [vmem:[#allocation6 + $0x320] sm:$0xff]
    %v409 = vld [vmem:[#allocation6 + $0x328] sm:$0xff]
    %v410 = vld [vmem:[#allocation6 + $0x330] sm:$0xff]
    %v411 = vld [vmem:[#allocation6 + $0x338] sm:$0xff]
    %v412 = vld [vmem:[#allocation6 + $0x340] sm:$0xff]
    %v413 = vld [vmem:[#allocation6 + $0x348] sm:$0xff]
    %v414 = vld [vmem:[#allocation6 + $0x350] sm:$0xff]
    %v415 = vld [vmem:[#allocation6 + $0x358] sm:$0xff]
    %v416 = vld [vmem:[#allocation6 + $0x360] sm:$0xff]
    %v417 = vld [vmem:[#allocation6 + $0x368] sm:$0xff]
    %v418 = vld [vmem:[#allocation6 + $0x370] sm:$0xff]
    %v419 = vld [vmem:[#allocation6 + $0x378] sm:$0xff]
    %v420 = vld [vmem:[#allocation6 + $0x380] sm:$0xff]
    %v421 = vld [vmem:[#allocation6 + $0x388] sm:$0xff]
    %v422 = vld [vmem:[#allocation6 + $0x390] sm:$0xff]
    %v423 = vld [vmem:[#allocation6 + $0x398] sm:$0xff]
    %v424 = vld [vmem:[#allocation6 + $0x3a0] sm:$0xff]
    %v425 = vld [vmem:[#allocation6 + $0x3a8] sm:$0xff]
    %v426 = vld [vmem:[#allocation6 + $0x3b0] sm:$0xff]
    %v427 = vld [vmem:[#allocation6 + $0x3b8] sm:$0xff]
    %v428 = vld [vmem:[#allocation6 + $0x3c0] sm:$0xff]
    %v429 = vld [vmem:[#allocation6 + $0x3c8] sm:$0xff]
    %v430 = vld [vmem:[#allocation6 + $0x3d0] sm:$0xff]
    %v431 = vld [vmem:[#allocation6 + $0x3d8] sm:$0xff]
    %v432 = vld [vmem:[#allocation6 + $0x3e0] sm:$0xff]
    %v433 = vld [vmem:[#allocation6 + $0x3e8] sm:$0xff]
    %v434 = vld [vmem:[#allocation6 + $0x3f0] sm:$0xff]
    %v435 = vld [vmem:[#allocation6 + $0x3f8] sm:$0xff]
    %v436 = vld [vmem:[%s5] sm:$0xf]
    %437 = vmatprep.subr.mxu0 %v245
    %438 = vmatpush1.msra.mxu0 %v244
    %439 = vmatprep.subr.mxu0 %v249
    %440 = vmatpush1.msra.mxu0 %v248
    %441 = vmatprep.subr.mxu0 %v253
    %442 = vmatpush1.msra.mxu0 %v252
    %443 = vmatprep.subr.mxu0 %v257
    %444 = vmatpush1.msra.mxu0 %v256
    %445 = vmatprep.subr.mxu0 %v261
    %446 = vmatpush1.msra.mxu0 %v260
    %447 = vmatprep.subr.mxu0 %v265
    %448 = vmatpush1.msra.mxu0 %v264
    %449 = vmatprep.subr.mxu0 %v269
    %450 = vmatpush1.msra.mxu0 %v268
    %451 = vmatprep.subr.mxu0 %v273
    %452 = vmatpush1.msra.mxu0 %v272
    %453 = vmatprep.subr.mxu0 %v277
    %454 = vmatpush1.msra.mxu0 %v276
    %455 = vmatprep.subr.mxu0 %v281
    %456 = vmatpush1.msra.mxu0 %v280
    %457 = vmatprep.subr.mxu0 %v285
    %458 = vmatpush1.msra.mxu0 %v284
    %459 = vmatprep.subr.mxu0 %v289
    %460 = vmatpush1.msra.mxu0 %v288
    %461 = vmatprep.subr.mxu0 %v293
    %462 = vmatpush1.msra.mxu0 %v292
    %463 = vmatprep.subr.mxu0 %v297
    %464 = vmatpush1.msra.mxu0 %v296
    %465 = vmatprep.subr.mxu0 %v301
    %466 = vmatpush1.msra.mxu0 %v300
    %467 = vmatprep.subr.mxu0 %v305
    %468 = vmatpush1.msra.mxu0 %v304
    %469 = vmatprep.subr.mxu0 0.0
    %470 = vmatpush1.msra.mxu0 0.0
    %471 = vmatprep.subr.mxu0 0.0
    %472 = vmatpush1.msra.mxu0 0.0
    %473 = vmatprep.subr.mxu0 0.0
    %474 = vmatpush1.msra.mxu0 0.0
    %475 = vmatprep.subr.mxu0 0.0
    %476 = vmatpush1.msra.mxu0 0.0
    %477 = vmatprep.subr.mxu0 0.0
    %478 = vmatpush1.msra.mxu0 0.0
    %479 = vmatprep.subr.mxu0 0.0
    %480 = vmatpush1.msra.mxu0 0.0
    %481 = vmatprep.subr.mxu0 0.0
    %482 = vmatpush1.msra.mxu0 0.0
    %483 = vmatprep.subr.mxu0 0.0
    %484 = vmatpush1.msra.mxu0 0.0
    %485 = vmatprep.subr.mxu0 0.0
    %486 = vmatpush1.msra.mxu0 0.0
    %487 = vmatprep.subr.mxu0 0.0
    %488 = vmatpush1.msra.mxu0 0.0
    %489 = vmatprep.subr.mxu0 0.0
    %490 = vmatpush1.msra.mxu0 0.0
    %491 = vmatprep.subr.mxu0 0.0
    %492 = vmatpush1.msra.mxu0 0.0
    %493 = vmatprep.subr.mxu0 0.0
    %494 = vmatpush1.msra.mxu0 0.0
    %495 = vmatprep.subr.mxu0 0.0
    %496 = vmatpush1.msra.mxu0 0.0
    %497 = vmatprep.subr.mxu0 0.0
    %498 = vmatpush1.msra.mxu0 0.0
    %499 = vmatprep.subr.mxu0 0.0
    %500 = vmatpush1.msra.mxu0 0.0
    %501 = vmatprep.mubr.f32.mxu0 0.0
    %502 = vmatmul.mubr.f32.gmra.mrb[0].mxu0 0.0
    %v503 = vpop.f32.mrb[0].mxu0
    %v504 = vadd.f32 0.0, %v503
    %v505 = vpop.f32.mrb[0].mxu0
    %v506 = vadd.f32 0.0, %v505
    %507 = vdwg.mxu0
    %508 = vmatprep.subr.mxu0 %v247
    %509 = vmatpush1.msra.mxu0 %v246
    %510 = vmatprep.subr.mxu0 %v251
    %511 = vmatpush1.msra.mxu0 %v250
    %512 = vmatprep.subr.mxu0 %v255
    %513 = vmatpush1.msra.mxu0 %v254
    %514 = vmatprep.subr.mxu0 %v259
    %515 = vmatpush1.msra.mxu0 %v258
    %516 = vmatprep.subr.mxu0 %v263
    %517 = vmatpush1.msra.mxu0 %v262
    %518 = vmatprep.subr.mxu0 %v267
    %519 = vmatpush1.msra.mxu0 %v266
    %520 = vmatprep.subr.mxu0 %v271
    %521 = vmatpush1.msra.mxu0 %v270
    %522 = vmatprep.subr.mxu0 %v275
    %523 = vmatpush1.msra.mxu0 %v274
    %524 = vmatprep.subr.mxu0 %v279
    %525 = vmatpush1.msra.mxu0 %v278
    %526 = vmatprep.subr.mxu0 %v283
    %527 = vmatpush1.msra.mxu0 %v282
    %528 = vmatprep.subr.mxu0 %v287
    %529 = vmatpush1.msra.mxu0 %v286
    %530 = vmatprep.subr.mxu0 %v291
    %531 = vmatpush1.msra.mxu0 %v290
    %532 = vmatprep.subr.mxu0 %v295
    %533 = vmatpush1.msra.mxu0 %v294
    %534 = vmatprep.subr.mxu0 %v299
    %535 = vmatpush1.msra.mxu0 %v298
    %536 = vmatprep.subr.mxu0 %v303
    %537 = vmatpush1.msra.mxu0 %v302
    %538 = vmatprep.subr.mxu0 %v307
    %539 = vmatpush1.msra.mxu0 %v306
    %540 = vmatprep.subr.mxu0 0.0
    %541 = vmatpush1.msra.mxu0 0.0
    %542 = vmatprep.subr.mxu0 0.0
    %543 = vmatpush1.msra.mxu0 0.0
    %544 = vmatprep.subr.mxu0 0.0
    %545 = vmatpush1.msra.mxu0 0.0
    %546 = vmatprep.subr.mxu0 0.0
    %547 = vmatpush1.msra.mxu0 0.0
    %548 = vmatprep.subr.mxu0 0.0
    %549 = vmatpush1.msra.mxu0 0.0
    %550 = vmatprep.subr.mxu0 0.0
    %551 = vmatpush1.msra.mxu0 0.0
    %552 = vmatprep.subr.mxu0 0.0
    %553 = vmatpush1.msra.mxu0 0.0
    %554 = vmatprep.subr.mxu0 0.0
    %555 = vmatpush1.msra.mxu0 0.0
    %556 = vmatprep.subr.mxu0 0.0
    %557 = vmatpush1.msra.mxu0 0.0
    %558 = vmatprep.subr.mxu0 0.0
    %559 = vmatpush1.msra.mxu0 0.0
    %560 = vmatprep.subr.mxu0 0.0
    %561 = vmatpush1.msra.mxu0 0.0
    %562 = vmatprep.subr.mxu0 0.0
    %563 = vmatpush1.msra.mxu0 0.0
    %564 = vmatprep.subr.mxu0 0.0
    %565 = vmatpush1.msra.mxu0 0.0
    %566 = vmatprep.subr.mxu0 0.0
    %567 = vmatpush1.msra.mxu0 0.0
    %568 = vmatprep.subr.mxu0 0.0
    %569 = vmatpush1.msra.mxu0 0.0
    %570 = vmatprep.subr.mxu0 0.0
    %571 = vmatpush1.msra.mxu0 0.0
    %572 = vmatprep.mubr.f32.mxu0 0.0
    %573 = vmatmul.mubr.f32.gmra.mrb[0].mxu0 0.0
    %v574 = vpop.f32.mrb[0].mxu0
    %v575 = vadd.f32 0.0, %v574
    %v576 = vpop.f32.mrb[0].mxu0
    %v577 = vadd.f32 0.0, %v576
    %578 = vdwg.mxu0
    %v579 = vadd.f32 %v169, %v504
    %v580 = vadd.f32 %v171, %v506
    %v581 = vadd.f32 %v240, %v575
    %v582 = vadd.f32 %v242, %v577
    %v583 = vxor.u32 %v579, 2147483648
    %v584 = vmul.f32 %v583, 1.442695
    %v585 = vpow.pop %v584
    %v586 = vadd.f32 %v585, 1.0
    %v587 = vrcp.pop %v586
    %v588 = vmul.f32 1.0, %v587
    %v589 = vxor.u32 %v580, 2147483648
    %v590 = vmul.f32 %v589, 1.442695
    %v591 = vpow.pop %v590
    %v592 = vadd.f32 %v591, 1.0
    %v593 = vrcp.pop %v592
    %v594 = vmul.f32 1.0, %v593
    %v595 = vtanh.pop %v581
    %v596 = vxor.u32 %v582, 2147483648
    %v597 = vmul.f32 %v596, 1.442695
    %v598 = vpow.pop %v597
    %v599 = vadd.f32 %v598, 1.0
    %v600 = vrcp.pop %v599
    %v601 = vmul.f32 1.0, %v600
    %v602 = vmul.f32 %v594, 0.0
    %v603 = vmul.f32 %v588, %v595
    %v604 = vadd.f32 %v602, %v603
    %v605 = vtanh.pop %v604
    %v606 = vmul.f32 %v601, %v605
    %v608 = vlaneseq
    %v609 = vshrl.u32 %v608, 7
    %v610 = vsub.s32 0, %v609
    %v611 = vrot.slane %v436, %v610
    %v612 = vlaneseq
    %v613 = vshrl.u32 %v612, 7
    %v614 = vsub.s32 1, %v613
    %v615 = vrot.slane %v436, %v614
    %v616 = vlaneseq
    %v617 = vshrl.u32 %v616, 7
    %v618 = vsub.s32 2, %v617
    %v619 = vrot.slane %v436, %v618
    %v620 = vlaneseq
    %v621 = vshrl.u32 %v620, 7
    %v622 = vsub.s32 3, %v621
    %v623 = vrot.slane %v436, %v622
    %628 = vmatprep.subr.mxu0 %v309
    %629 = vmatpush1.msra.mxu0 %v308
    %630 = vmatprep.subr.mxu0 %v313
    %631 = vmatpush1.msra.mxu0 %v312
    %632 = vmatprep.subr.mxu0 %v317
    %633 = vmatpush1.msra.mxu0 %v316
    %634 = vmatprep.subr.mxu0 %v321
    %635 = vmatpush1.msra.mxu0 %v320
    %636 = vmatprep.subr.mxu0 %v325
    %637 = vmatpush1.msra.mxu0 %v324
    %638 = vmatprep.subr.mxu0 %v329
    %639 = vmatpush1.msra.mxu0 %v328
    %640 = vmatprep.subr.mxu0 %v333
    %641 = vmatpush1.msra.mxu0 %v332
    %642 = vmatprep.subr.mxu0 %v337
    %643 = vmatpush1.msra.mxu0 %v336
    %644 = vmatprep.subr.mxu0 %v341
    %645 = vmatpush1.msra.mxu0 %v340
    %646 = vmatprep.subr.mxu0 %v345
    %647 = vmatpush1.msra.mxu0 %v344
    %648 = vmatprep.subr.mxu0 %v349
    %649 = vmatpush1.msra.mxu0 %v348
    %650 = vmatprep.subr.mxu0 %v353
    %651 = vmatpush1.msra.mxu0 %v352
    %652 = vmatprep.subr.mxu0 %v357
    %653 = vmatpush1.msra.mxu0 %v356
    %654 = vmatprep.subr.mxu0 %v361
    %655 = vmatpush1.msra.mxu0 %v360
    %656 = vmatprep.subr.mxu0 %v365
    %657 = vmatpush1.msra.mxu0 %v364
    %658 = vmatprep.subr.mxu0 %v369
    %659 = vmatpush1.msra.mxu0 %v368
    %660 = vmatprep.subr.mxu0 %v373
    %661 = vmatpush1.msra.mxu0 %v372
    %662 = vmatprep.subr.mxu0 %v377
    %663 = vmatpush1.msra.mxu0 %v376
    %664 = vmatprep.subr.mxu0 %v381
    %665 = vmatpush1.msra.mxu0 %v380
    %666 = vmatprep.subr.mxu0 %v385
    %667 = vmatpush1.msra.mxu0 %v384
    %668 = vmatprep.subr.mxu0 %v389
    %669 = vmatpush1.msra.mxu0 %v388
    %670 = vmatprep.subr.mxu0 %v393
    %671 = vmatpush1.msra.mxu0 %v392
    %672 = vmatprep.subr.mxu0 %v397
    %673 = vmatpush1.msra.mxu0 %v396
    %674 = vmatprep.subr.mxu0 %v401
    %675 = vmatpush1.msra.mxu0 %v400
    %676 = vmatprep.subr.mxu0 %v405
    %677 = vmatpush1.msra.mxu0 %v404
    %678 = vmatprep.subr.mxu0 %v409
    %679 = vmatpush1.msra.mxu0 %v408
    %680 = vmatprep.subr.mxu0 %v413
    %681 = vmatpush1.msra.mxu0 %v412
    %682 = vmatprep.subr.mxu0 %v417
    %683 = vmatpush1.msra.mxu0 %v416
    %684 = vmatprep.subr.mxu0 %v421
    %685 = vmatpush1.msra.mxu0 %v420
    %686 = vmatprep.subr.mxu0 %v425
    %687 = vmatpush1.msra.mxu0 %v424
    %688 = vmatprep.subr.mxu0 %v429
    %689 = vmatpush1.msra.mxu0 %v428
    %690 = vmatprep.subr.mxu0 %v433
    %691 = vmatpush1.msra.mxu0 %v432
    %692 = vmatprep.mubr.f32.mxu0 0.0
    %693 = vmatmul.mubr.f32.gmra.mrb[0].mxu0 %v606
    %v694 = vpop.f32.mrb[0].mxu0
    %v695 = vadd.f32 %v611, %v694
    %v696 = vpop.f32.mrb[0].mxu0
    %v697 = vadd.f32 %v615, %v696
    %698 = vdwg.mxu0
    %699 = vmatprep.subr.mxu0 %v311
    %700 = vmatpush1.msra.mxu0 %v310
    %701 = vmatprep.subr.mxu0 %v315
    %702 = vmatpush1.msra.mxu0 %v314
    %703 = vmatprep.subr.mxu0 %v319
    %704 = vmatpush1.msra.mxu0 %v318
    %705 = vmatprep.subr.mxu0 %v323
    %706 = vmatpush1.msra.mxu0 %v322
    %707 = vmatprep.subr.mxu0 %v327
    %708 = vmatpush1.msra.mxu0 %v326
    %709 = vmatprep.subr.mxu0 %v331
    %710 = vmatpush1.msra.mxu0 %v330
    %711 = vmatprep.subr.mxu0 %v335
    %712 = vmatpush1.msra.mxu0 %v334
    %713 = vmatprep.subr.mxu0 %v339
    %714 = vmatpush1.msra.mxu0 %v338
    %715 = vmatprep.subr.mxu0 %v343
    %716 = vmatpush1.msra.mxu0 %v342
    %717 = vmatprep.subr.mxu0 %v347
    %718 = vmatpush1.msra.mxu0 %v346
    %719 = vmatprep.subr.mxu0 %v351
    %720 = vmatpush1.msra.mxu0 %v350
    %721 = vmatprep.subr.mxu0 %v355
    %722 = vmatpush1.msra.mxu0 %v354
    %723 = vmatprep.subr.mxu0 %v359
    %724 = vmatpush1.msra.mxu0 %v358
    %725 = vmatprep.subr.mxu0 %v363
    %726 = vmatpush1.msra.mxu0 %v362
    %727 = vmatprep.subr.mxu0 %v367
    %728 = vmatpush1.msra.mxu0 %v366
    %729 = vmatprep.subr.mxu0 %v371
    %730 = vmatpush1.msra.mxu0 %v370
    %731 = vmatprep.subr.mxu0 %v375
    %732 = vmatpush1.msra.mxu0 %v374
    %733 = vmatprep.subr.mxu0 %v379
    %734 = vmatpush1.msra.mxu0 %v378
    %735 = vmatprep.subr.mxu0 %v383
    %736 = vmatpush1.msra.mxu0 %v382
    %737 = vmatprep.subr.mxu0 %v387
    %738 = vmatpush1.msra.mxu0 %v386
    %739 = vmatprep.subr.mxu0 %v391
    %740 = vmatpush1.msra.mxu0 %v390
    %741 = vmatprep.subr.mxu0 %v395
    %742 = vmatpush1.msra.mxu0 %v394
    %743 = vmatprep.subr.mxu0 %v399
    %744 = vmatpush1.msra.mxu0 %v398
    %745 = vmatprep.subr.mxu0 %v403
    %746 = vmatpush1.msra.mxu0 %v402
    %747 = vmatprep.subr.mxu0 %v407
    %748 = vmatpush1.msra.mxu0 %v406
    %749 = vmatprep.subr.mxu0 %v411
    %750 = vmatpush1.msra.mxu0 %v410
    %751 = vmatprep.subr.mxu0 %v415
    %752 = vmatpush1.msra.mxu0 %v414
    %753 = vmatprep.subr.mxu0 %v419
    %754 = vmatpush1.msra.mxu0 %v418
    %755 = vmatprep.subr.mxu0 %v423
    %756 = vmatpush1.msra.mxu0 %v422
    %757 = vmatprep.subr.mxu0 %v427
    %758 = vmatpush1.msra.mxu0 %v426
    %759 = vmatprep.subr.mxu0 %v431
    %760 = vmatpush1.msra.mxu0 %v430
    %761 = vmatprep.subr.mxu0 %v435
    %762 = vmatpush1.msra.mxu0 %v434
    %763 = vmatprep.mubr.f32.mxu0 0.0
    %764 = vmatmul.mubr.f32.gmra.mrb[0].mxu0 %v606
    %v765 = vpop.f32.mrb[0].mxu0
    %v766 = vadd.f32 %v619, %v765
    %v767 = vpop.f32.mrb[0].mxu0
    %v768 = vadd.f32 %v623, %v767
    %769 = vdwg.mxu0
    %v770 = vxor.u32 %v695, 2147483648
    %v771 = vmul.f32 %v770, 1.442695
    %v772 = vpow.pop %v771
    %v773 = vadd.f32 %v772, 1.0
    %v774 = vrcp.pop %v773
    %v775 = vmul.f32 1.0, %v774
    %v776 = vxor.u32 %v697, 2147483648
    %v777 = vmul.f32 %v776, 1.442695
    %v778 = vpow.pop %v777
    %v779 = vadd.f32 %v778, 1.0
    %v780 = vrcp.pop %v779
    %v781 = vmul.f32 1.0, %v780
    %v782 = vtanh.pop %v766
    %v783 = vxor.u32 %v768, 2147483648
    %v784 = vmul.f32 %v783, 1.442695
    %v785 = vpow.pop %v784
    %v786 = vadd.f32 %v785, 1.0
    %v787 = vrcp.pop %v786
    %v788 = vmul.f32 1.0, %v787
    %v789 = vmul.f32 %v781, 0.0
    %v790 = vmul.f32 %v775, %v782
    %v791 = vadd.f32 %v789, %v790
    %v792 = vtanh.pop %v791
    %v793 = vmul.f32 %v788, %v792
    %794 = vmatprep.subr.mxu0 %v245
    %795 = vmatpush1.msra.mxu0 %v244
    %796 = vmatprep.subr.mxu0 %v249
    %797 = vmatpush1.msra.mxu0 %v248
    %798 = vmatprep.subr.mxu0 %v253
    %799 = vmatpush1.msra.mxu0 %v252
    %800 = vmatprep.subr.mxu0 %v257
    %801 = vmatpush1.msra.mxu0 %v256
    %802 = vmatprep.subr.mxu0 %v261
    %803 = vmatpush1.msra.mxu0 %v260
    %804 = vmatprep.subr.mxu0 %v265
    %805 = vmatpush1.msra.mxu0 %v264
    %806 = vmatprep.subr.mxu0 %v269
    %807 = vmatpush1.msra.mxu0 %v268
    %808 = vmatprep.subr.mxu0 %v273
    %809 = vmatpush1.msra.mxu0 %v272
    %810 = vmatprep.subr.mxu0 %v277
    %811 = vmatpush1.msra.mxu0 %v276
    %812 = vmatprep.subr.mxu0 %v281
    %813 = vmatpush1.msra.mxu0 %v280
    %814 = vmatprep.subr.mxu0 %v285
    %815 = vmatpush1.msra.mxu0 %v284
    %816 = vmatprep.subr.mxu0 %v289
    %817 = vmatpush1.msra.mxu0 %v288
    %818 = vmatprep.subr.mxu0 %v293
    %819 = vmatpush1.msra.mxu0 %v292
    %820 = vmatprep.subr.mxu0 %v297
    %821 = vmatpush1.msra.mxu0 %v296
    %822 = vmatprep.subr.mxu0 %v301
    %823 = vmatpush1.msra.mxu0 %v300
    %824 = vmatprep.subr.mxu0 %v305
    %825 = vmatpush1.msra.mxu0 %v304
    %826 = vmatprep.subr.mxu0 0.0
    %827 = vmatpush1.msra.mxu0 0.0
    %828 = vmatprep.subr.mxu0 0.0
    %829 = vmatpush1.msra.mxu0 0.0
    %830 = vmatprep.subr.mxu0 0.0
    %831 = vmatpush1.msra.mxu0 0.0
    %832 = vmatprep.subr.mxu0 0.0
    %833 = vmatpush1.msra.mxu0 0.0
    %834 = vmatprep.subr.mxu0 0.0
    %835 = vmatpush1.msra.mxu0 0.0
    %836 = vmatprep.subr.mxu0 0.0
    %837 = vmatpush1.msra.mxu0 0.0
    %838 = vmatprep.subr.mxu0 0.0
    %839 = vmatpush1.msra.mxu0 0.0
    %840 = vmatprep.subr.mxu0 0.0
    %841 = vmatpush1.msra.mxu0 0.0
    %842 = vmatprep.subr.mxu0 0.0
    %843 = vmatpush1.msra.mxu0 0.0
    %844 = vmatprep.subr.mxu0 0.0
    %845 = vmatpush1.msra.mxu0 0.0
    %846 = vmatprep.subr.mxu0 0.0
    %847 = vmatpush1.msra.mxu0 0.0
    %848 = vmatprep.subr.mxu0 0.0
    %849 = vmatpush1.msra.mxu0 0.0
    %850 = vmatprep.subr.mxu0 0.0
    %851 = vmatpush1.msra.mxu0 0.0
    %852 = vmatprep.subr.mxu0 0.0
    %853 = vmatpush1.msra.mxu0 0.0
    %854 = vmatprep.subr.mxu0 0.0
    %855 = vmatpush1.msra.mxu0 0.0
    %856 = vmatprep.subr.mxu0 0.0
    %857 = vmatpush1.msra.mxu0 0.0
    %858 = vmatprep.mubr.f32.mxu0 0.0
    %859 = vmatmul.mubr.f32.gmra.mrb[0].mxu0 %v606
    %v860 = vpop.f32.mrb[0].mxu0
    %v861 = vadd.f32 0.0, %v860
    %v862 = vpop.f32.mrb[0].mxu0
    %v863 = vadd.f32 0.0, %v862
    %864 = vdwg.mxu0
    %865 = vmatprep.subr.mxu0 %v247
    %866 = vmatpush1.msra.mxu0 %v246
    %867 = vmatprep.subr.mxu0 %v251
    %868 = vmatpush1.msra.mxu0 %v250
    %869 = vmatprep.subr.mxu0 %v255
    %870 = vmatpush1.msra.mxu0 %v254
    %871 = vmatprep.subr.mxu0 %v259
    %872 = vmatpush1.msra.mxu0 %v258
    %873 = vmatprep.subr.mxu0 %v263
    %874 = vmatpush1.msra.mxu0 %v262
    %875 = vmatprep.subr.mxu0 %v267
    %876 = vmatpush1.msra.mxu0 %v266
    %877 = vmatprep.subr.mxu0 %v271
    %878 = vmatpush1.msra.mxu0 %v270
    %879 = vmatprep.subr.mxu0 %v275
    %880 = vmatpush1.msra.mxu0 %v274
    %881 = vmatprep.subr.mxu0 %v279
    %882 = vmatpush1.msra.mxu0 %v278
    %883 = vmatprep.subr.mxu0 %v283
    %884 = vmatpush1.msra.mxu0 %v282
    %885 = vmatprep.subr.mxu0 %v287
    %886 = vmatpush1.msra.mxu0 %v286
    %887 = vmatprep.subr.mxu0 %v291
    %888 = vmatpush1.msra.mxu0 %v290
    %889 = vmatprep.subr.mxu0 %v295
    %890 = vmatpush1.msra.mxu0 %v294
    %891 = vmatprep.subr.mxu0 %v299
    %892 = vmatpush1.msra.mxu0 %v298
    %893 = vmatprep.subr.mxu0 %v303
    %894 = vmatpush1.msra.mxu0 %v302
    %895 = vmatprep.subr.mxu0 %v307
    %896 = vmatpush1.msra.mxu0 %v306
    %897 = vmatprep.subr.mxu0 0.0
    %898 = vmatpush1.msra.mxu0 0.0
    %899 = vmatprep.subr.mxu0 0.0
    %900 = vmatpush1.msra.mxu0 0.0
    %901 = vmatprep.subr.mxu0 0.0
    %902 = vmatpush1.msra.mxu0 0.0
    %903 = vmatprep.subr.mxu0 0.0
    %904 = vmatpush1.msra.mxu0 0.0
    %905 = vmatprep.subr.mxu0 0.0
    %906 = vmatpush1.msra.mxu0 0.0
    %907 = vmatprep.subr.mxu0 0.0
    %908 = vmatpush1.msra.mxu0 0.0
    %909 = vmatprep.subr.mxu0 0.0
    %910 = vmatpush1.msra.mxu0 0.0
    %911 = vmatprep.subr.mxu0 0.0
    %912 = vmatpush1.msra.mxu0 0.0
    %913 = vmatprep.subr.mxu0 0.0
    %914 = vmatpush1.msra.mxu0 0.0
    %915 = vmatprep.subr.mxu0 0.0
    %916 = vmatpush1.msra.mxu0 0.0
    %917 = vmatprep.subr.mxu0 0.0
    %918 = vmatpush1.msra.mxu0 0.0
    %919 = vmatprep.subr.mxu0 0.0
    %920 = vmatpush1.msra.mxu0 0.0
    %921 = vmatprep.subr.mxu0 0.0
    %922 = vmatpush1.msra.mxu0 0.0
    %923 = vmatprep.subr.mxu0 0.0
    %924 = vmatpush1.msra.mxu0 0.0
    %925 = vmatprep.subr.mxu0 0.0
    %926 = vmatpush1.msra.mxu0 0.0
    %927 = vmatprep.subr.mxu0 0.0
    %928 = vmatpush1.msra.mxu0 0.0
    %929 = vmatprep.mubr.f32.mxu0 0.0
    %930 = vmatmul.mubr.f32.gmra.mrb[0].mxu0 %v606
    %v931 = vpop.f32.mrb[0].mxu0
    %v932 = vadd.f32 0.0, %v931
    %v933 = vpop.f32.mrb[0].mxu0
    %v934 = vadd.f32 0.0, %v933
    %935 = vdwg.mxu0
    %v940 = vrot.slane %v861, 7
    %v941 = vrot.slane %v863, 7
    %v942 = vrot.slane %v932, 7
    %v943 = vrot.slane %v934, 7
    %v948 = vadd.f32 %v169, %v940
    %v949 = vadd.f32 %v171, %v941
    %v950 = vadd.f32 %v240, %v942
    %v951 = vadd.f32 %v242, %v943
    %v952 = vxor.u32 %v948, 2147483648
    %v953 = vmul.f32 %v952, 1.442695
    %v954 = vpow.pop %v953
    %v955 = vadd.f32 %v954, 1.0
    %v956 = vrcp.pop %v955
    %v957 = vmul.f32 1.0, %v956
    %v958 = vxor.u32 %v949, 2147483648
    %v959 = vmul.f32 %v958, 1.442695
    %v960 = vpow.pop %v959
    %v961 = vadd.f32 %v960, 1.0
    %v962 = vrcp.pop %v961
    %v963 = vmul.f32 1.0, %v962
    %v964 = vtanh.pop %v950
    %v965 = vxor.u32 %v951, 2147483648
    %v966 = vmul.f32 %v965, 1.442695
    %v967 = vpow.pop %v966
    %v968 = vadd.f32 %v967, 1.0
    %v969 = vrcp.pop %v968
    %v970 = vmul.f32 1.0, %v969
    %v972 = vrot.slane %v604, 7
    %v974 = vmul.f32 %v963, %v972
    %v975 = vmul.f32 %v957, %v964
    %v976 = vadd.f32 %v974, %v975
    %v977 = vtanh.pop %v976
    %v978 = vmul.f32 %v970, %v977
    %v980 = vrot.slane %v793, 7
    %v982 = vrot.slane %v978, 1
    %v983 = vrot.slane %v980, 1
    %986 = vmatprep.subr.mxu0 %v309
    %987 = vmatpush1.msra.mxu0 %v308
    %988 = vmatprep.subr.mxu0 %v313
    %989 = vmatpush1.msra.mxu0 %v312
    %990 = vmatprep.subr.mxu0 %v317
    %991 = vmatpush1.msra.mxu0 %v316
    %992 = vmatprep.subr.mxu0 %v321
    %993 = vmatpush1.msra.mxu0 %v320
    %994 = vmatprep.subr.mxu0 %v325
    %995 = vmatpush1.msra.mxu0 %v324
    %996 = vmatprep.subr.mxu0 %v329
    %997 = vmatpush1.msra.mxu0 %v328
    %998 = vmatprep.subr.mxu0 %v333
    %999 = vmatpush1.msra.mxu0 %v332
    %1000 = vmatprep.subr.mxu0 %v337
    %1001 = vmatpush1.msra.mxu0 %v336
    %1002 = vmatprep.subr.mxu0 %v341
    %1003 = vmatpush1.msra.mxu0 %v340
    %1004 = vmatprep.subr.mxu0 %v345
    %1005 = vmatpush1.msra.mxu0 %v344
    %1006 = vmatprep.subr.mxu0 %v349
    %1007 = vmatpush1.msra.mxu0 %v348
    %1008 = vmatprep.subr.mxu0 %v353
    %1009 = vmatpush1.msra.mxu0 %v352
    %1010 = vmatprep.subr.mxu0 %v357
    %1011 = vmatpush1.msra.mxu0 %v356
    %1012 = vmatprep.subr.mxu0 %v361
    %1013 = vmatpush1.msra.mxu0 %v360
    %1014 = vmatprep.subr.mxu0 %v365
    %1015 = vmatpush1.msra.mxu0 %v364
    %1016 = vmatprep.subr.mxu0 %v369
    %1017 = vmatpush1.msra.mxu0 %v368
    %1018 = vmatprep.subr.mxu0 %v373
    %1019 = vmatpush1.msra.mxu0 %v372
    %1020 = vmatprep.subr.mxu0 %v377
    %1021 = vmatpush1.msra.mxu0 %v376
    %1022 = vmatprep.subr.mxu0 %v381
    %1023 = vmatpush1.msra.mxu0 %v380
    %1024 = vmatprep.subr.mxu0 %v385
    %1025 = vmatpush1.msra.mxu0 %v384
    %1026 = vmatprep.subr.mxu0 %v389
    %1027 = vmatpush1.msra.mxu0 %v388
    %1028 = vmatprep.subr.mxu0 %v393
    %1029 = vmatpush1.msra.mxu0 %v392
    %1030 = vmatprep.subr.mxu0 %v397
    %1031 = vmatpush1.msra.mxu0 %v396
    %1032 = vmatprep.subr.mxu0 %v401
    %1033 = vmatpush1.msra.mxu0 %v400
    %1034 = vmatprep.subr.mxu0 %v405
    %1035 = vmatpush1.msra.mxu0 %v404
    %1036 = vmatprep.subr.mxu0 %v409
    %1037 = vmatpush1.msra.mxu0 %v408
    %1038 = vmatprep.subr.mxu0 %v413
    %1039 = vmatpush1.msra.mxu0 %v412
    %1040 = vmatprep.subr.mxu0 %v417
    %1041 = vmatpush1.msra.mxu0 %v416
    %1042 = vmatprep.subr.mxu0 %v421
    %1043 = vmatpush1.msra.mxu0 %v420
    %1044 = vmatprep.subr.mxu0 %v425
    %1045 = vmatpush1.msra.mxu0 %v424
    %1046 = vmatprep.subr.mxu0 %v429
    %1047 = vmatpush1.msra.mxu0 %v428
    %1048 = vmatprep.subr.mxu0 %v433
    %1049 = vmatpush1.msra.mxu0 %v432
    %1050 = vmatprep.mubr.f32.mxu0 %v983
    %1051 = vmatmul.mubr.f32.gmra.mrb[0].mxu0 %v982
    %v1052 = vpop.f32.mrb[0].mxu0
    %v1053 = vadd.f32 %v611, %v1052
    %v1054 = vpop.f32.mrb[0].mxu0
    %v1055 = vadd.f32 %v615, %v1054
    %1056 = vdwg.mxu0
    %1057 = vmatprep.subr.mxu0 %v311
    %1058 = vmatpush1.msra.mxu0 %v310
    %1059 = vmatprep.subr.mxu0 %v315
    %1060 = vmatpush1.msra.mxu0 %v314
    %1061 = vmatprep.subr.mxu0 %v319
    %1062 = vmatpush1.msra.mxu0 %v318
    %1063 = vmatprep.subr.mxu0 %v323
    %1064 = vmatpush1.msra.mxu0 %v322
    %1065 = vmatprep.subr.mxu0 %v327
    %1066 = vmatpush1.msra.mxu0 %v326
    %1067 = vmatprep.subr.mxu0 %v331
    %1068 = vmatpush1.msra.mxu0 %v330
    %1069 = vmatprep.subr.mxu0 %v335
    %1070 = vmatpush1.msra.mxu0 %v334
    %1071 = vmatprep.subr.mxu0 %v339
    %1072 = vmatpush1.msra.mxu0 %v338
    %1073 = vmatprep.subr.mxu0 %v343
    %1074 = vmatpush1.msra.mxu0 %v342
    %1075 = vmatprep.subr.mxu0 %v347
    %1076 = vmatpush1.msra.mxu0 %v346
    %1077 = vmatprep.subr.mxu0 %v351
    %1078 = vmatpush1.msra.mxu0 %v350
    %1079 = vmatprep.subr.mxu0 %v355
    %1080 = vmatpush1.msra.mxu0 %v354
    %1081 = vmatprep.subr.mxu0 %v359
    %1082 = vmatpush1.msra.mxu0 %v358
    %1083 = vmatprep.subr.mxu0 %v363
    %1084 = vmatpush1.msra.mxu0 %v362
    %1085 = vmatprep.subr.mxu0 %v367
    %1086 = vmatpush1.msra.mxu0 %v366
    %1087 = vmatprep.subr.mxu0 %v371
    %1088 = vmatpush1.msra.mxu0 %v370
    %1089 = vmatprep.subr.mxu0 %v375
    %1090 = vmatpush1.msra.mxu0 %v374
    %1091 = vmatprep.subr.mxu0 %v379
    %1092 = vmatpush1.msra.mxu0 %v378
    %1093 = vmatprep.subr.mxu0 %v383
    %1094 = vmatpush1.msra.mxu0 %v382
    %1095 = vmatprep.subr.mxu0 %v387
    %1096 = vmatpush1.msra.mxu0 %v386
    %1097 = vmatprep.subr.mxu0 %v391
    %1098 = vmatpush1.msra.mxu0 %v390
    %1099 = vmatprep.subr.mxu0 %v395
    %1100 = vmatpush1.msra.mxu0 %v394
    %1101 = vmatprep.subr.mxu0 %v399
    %1102 = vmatpush1.msra.mxu0 %v398
    %1103 = vmatprep.subr.mxu0 %v403
    %1104 = vmatpush1.msra.mxu0 %v402
    %1105 = vmatprep.subr.mxu0 %v407
    %1106 = vmatpush1.msra.mxu0 %v406
    %1107 = vmatprep.subr.mxu0 %v411
    %1108 = vmatpush1.msra.mxu0 %v410
    %1109 = vmatprep.subr.mxu0 %v415
    %1110 = vmatpush1.msra.mxu0 %v414
    %1111 = vmatprep.subr.mxu0 %v419
    %1112 = vmatpush1.msra.mxu0 %v418
    %1113 = vmatprep.subr.mxu0 %v423
    %1114 = vmatpush1.msra.mxu0 %v422
    %1115 = vmatprep.subr.mxu0 %v427
    %1116 = vmatpush1.msra.mxu0 %v426
    %1117 = vmatprep.subr.mxu0 %v431
    %1118 = vmatpush1.msra.mxu0 %v430
    %1119 = vmatprep.subr.mxu0 %v435
    %1120 = vmatpush1.msra.mxu0 %v434
    %1121 = vmatprep.mubr.f32.mxu0 %v983
    %1122 = vmatmul.mubr.f32.gmra.mrb[0].mxu0 %v982
    %v1123 = vpop.f32.mrb[0].mxu0
    %v1124 = vadd.f32 %v619, %v1123
    %v1125 = vpop.f32.mrb[0].mxu0
    %v1126 = vadd.f32 %v623, %v1125
    %1127 = vdwg.mxu0
    %v1128 = vxor.u32 %v1053, 2147483648
    %v1129 = vmul.f32 %v1128, 1.442695
    %v1130 = vpow.pop %v1129
    %v1131 = vadd.f32 %v1130, 1.0
    %v1132 = vrcp.pop %v1131
    %v1133 = vmul.f32 1.0, %v1132
    %v1134 = vxor.u32 %v1055, 2147483648
    %v1135 = vmul.f32 %v1134, 1.442695
    %v1136 = vpow.pop %v1135
    %v1137 = vadd.f32 %v1136, 1.0
    %v1138 = vrcp.pop %v1137
    %v1139 = vmul.f32 1.0, %v1138
    %v1140 = vtanh.pop %v1124
    %v1141 = vxor.u32 %v1126, 2147483648
    %v1142 = vmul.f32 %v1141, 1.442695
    %v1143 = vpow.pop %v1142
    %v1144 = vadd.f32 %v1143, 1.0
    %v1145 = vrcp.pop %v1144
    %v1146 = vmul.f32 1.0, %v1145
    %v1147 = vmul.f32 %v1139, %v791
    %v1148 = vmul.f32 %v1133, %v1140
    %v1149 = vadd.f32 %v1147, %v1148
    %v1150 = vtanh.pop %v1149
    %v1151 = vmul.f32 %v1146, %v1150
    %1152 = vmatprep.subr.mxu0 %v245
    %1153 = vmatpush1.msra.mxu0 %v244
    %1154 = vmatprep.subr.mxu0 %v249
    %1155 = vmatpush1.msra.mxu0 %v248
    %1156 = vmatprep.subr.mxu0 %v253
    %1157 = vmatpush1.msra.mxu0 %v252
    %1158 = vmatprep.subr.mxu0 %v257
    %1159 = vmatpush1.msra.mxu0 %v256
    %1160 = vmatprep.subr.mxu0 %v261
    %1161 = vmatpush1.msra.mxu0 %v260
    %1162 = vmatprep.subr.mxu0 %v265
    %1163 = vmatpush1.msra.mxu0 %v264
    %1164 = vmatprep.subr.mxu0 %v269
    %1165 = vmatpush1.msra.mxu0 %v268
    %1166 = vmatprep.subr.mxu0 %v273
    %1167 = vmatpush1.msra.mxu0 %v272
    %1168 = vmatprep.subr.mxu0 %v277
    %1169 = vmatpush1.msra.mxu0 %v276
    %1170 = vmatprep.subr.mxu0 %v281
    %1171 = vmatpush1.msra.mxu0 %v280
    %1172 = vmatprep.subr.mxu0 %v285
    %1173 = vmatpush1.msra.mxu0 %v284
    %1174 = vmatprep.subr.mxu0 %v289
    %1175 = vmatpush1.msra.mxu0 %v288
    %1176 = vmatprep.subr.mxu0 %v293
    %1177 = vmatpush1.msra.mxu0 %v292
    %1178 = vmatprep.subr.mxu0 %v297
    %1179 = vmatpush1.msra.mxu0 %v296
    %1180 = vmatprep.subr.mxu0 %v301
    %1181 = vmatpush1.msra.mxu0 %v300
    %1182 = vmatprep.subr.mxu0 %v305
    %1183 = vmatpush1.msra.mxu0 %v304
    %1184 = vmatprep.subr.mxu0 0.0
    %1185 = vmatpush1.msra.mxu0 0.0
    %1186 = vmatprep.subr.mxu0 0.0
    %1187 = vmatpush1.msra.mxu0 0.0
    %1188 = vmatprep.subr.mxu0 0.0
    %1189 = vmatpush1.msra.mxu0 0.0
    %1190 = vmatprep.subr.mxu0 0.0
    %1191 = vmatpush1.msra.mxu0 0.0
    %1192 = vmatprep.subr.mxu0 0.0
    %1193 = vmatpush1.msra.mxu0 0.0
    %1194 = vmatprep.subr.mxu0 0.0
    %1195 = vmatpush1.msra.mxu0 0.0
    %1196 = vmatprep.subr.mxu0 0.0
    %1197 = vmatpush1.msra.mxu0 0.0
    %1198 = vmatprep.subr.mxu0 0.0
    %1199 = vmatpush1.msra.mxu0 0.0
    %1200 = vmatprep.subr.mxu0 0.0
    %1201 = vmatpush1.msra.mxu0 0.0
    %1202 = vmatprep.subr.mxu0 0.0
    %1203 = vmatpush1.msra.mxu0 0.0
    %1204 = vmatprep.subr.mxu0 0.0
    %1205 = vmatpush1.msra.mxu0 0.0
    %1206 = vmatprep.subr.mxu0 0.0
    %1207 = vmatpush1.msra.mxu0 0.0
    %1208 = vmatprep.subr.mxu0 0.0
    %1209 = vmatpush1.msra.mxu0 0.0
    %1210 = vmatprep.subr.mxu0 0.0
    %1211 = vmatpush1.msra.mxu0 0.0
    %1212 = vmatprep.subr.mxu0 0.0
    %1213 = vmatpush1.msra.mxu0 0.0
    %1214 = vmatprep.subr.mxu0 0.0
    %1215 = vmatpush1.msra.mxu0 0.0
    %1216 = vmatprep.mubr.f32.mxu0 0.0
    %1217 = vmatmul.mubr.f32.gmra.mrb[0].mxu0 %v982
    %v1218 = vpop.f32.mrb[0].mxu0
    %v1219 = vadd.f32 0.0, %v1218
    %v1220 = vpop.f32.mrb[0].mxu0
    %v1221 = vadd.f32 0.0, %v1220
    %1222 = vdwg.mxu0
    %1223 = vmatprep.subr.mxu0 %v247
    %1224 = vmatpush1.msra.mxu0 %v246
    %1225 = vmatprep.subr.mxu0 %v251
    %1226 = vmatpush1.msra.mxu0 %v250
    %1227 = vmatprep.subr.mxu0 %v255
    %1228 = vmatpush1.msra.mxu0 %v254
    %1229 = vmatprep.subr.mxu0 %v259
    %1230 = vmatpush1.msra.mxu0 %v258
    %1231 = vmatprep.subr.mxu0 %v263
    %1232 = vmatpush1.msra.mxu0 %v262
    %1233 = vmatprep.subr.mxu0 %v267
    %1234 = vmatpush1.msra.mxu0 %v266
    %1235 = vmatprep.subr.mxu0 %v271
    %1236 = vmatpush1.msra.mxu0 %v270
    %1237 = vmatprep.subr.mxu0 %v275
    %1238 = vmatpush1.msra.mxu0 %v274
    %1239 = vmatprep.subr.mxu0 %v279
    %1240 = vmatpush1.msra.mxu0 %v278
    %1241 = vmatprep.subr.mxu0 %v283
    %1242 = vmatpush1.msra.mxu0 %v282
    %1243 = vmatprep.subr.mxu0 %v287
    %1244 = vmatpush1.msra.mxu0 %v286
    %1245 = vmatprep.subr.mxu0 %v291
    %1246 = vmatpush1.msra.mxu0 %v290
    %1247 = vmatprep.subr.mxu0 %v295
    %1248 = vmatpush1.msra.mxu0 %v294
    %1249 = vmatprep.subr.mxu0 %v299
    %1250 = vmatpush1.msra.mxu0 %v298
    %1251 = vmatprep.subr.mxu0 %v303
    %1252 = vmatpush1.msra.mxu0 %v302
    %1253 = vmatprep.subr.mxu0 %v307
    %1254 = vmatpush1.msra.mxu0 %v306
    %1255 = vmatprep.subr.mxu0 0.0
    %1256 = vmatpush1.msra.mxu0 0.0
    %1257 = vmatprep.subr.mxu0 0.0
    %1258 = vmatpush1.msra.mxu0 0.0
    %1259 = vmatprep.subr.mxu0 0.0
    %1260 = vmatpush1.msra.mxu0 0.0
    %1261 = vmatprep.subr.mxu0 0.0
    %1262 = vmatpush1.msra.mxu0 0.0
    %1263 = vmatprep.subr.mxu0 0.0
    %1264 = vmatpush1.msra.mxu0 0.0
    %1265 = vmatprep.subr.mxu0 0.0
    %1266 = vmatpush1.msra.mxu0 0.0
    %1267 = vmatprep.subr.mxu0 0.0
    %1268 = vmatpush1.msra.mxu0 0.0
    %1269 = vmatprep.subr.mxu0 0.0
    %1270 = vmatpush1.msra.mxu0 0.0
    %1271 = vmatprep.subr.mxu0 0.0
    %1272 = vmatpush1.msra.mxu0 0.0
    %1273 = vmatprep.subr.mxu0 0.0
    %1274 = vmatpush1.msra.mxu0 0.0
    %1275 = vmatprep.subr.mxu0 0.0
    %1276 = vmatpush1.msra.mxu0 0.0
    %1277 = vmatprep.subr.mxu0 0.0
    %1278 = vmatpush1.msra.mxu0 0.0
    %1279 = vmatprep.subr.mxu0 0.0
    %1280 = vmatpush1.msra.mxu0 0.0
    %1281 = vmatprep.subr.mxu0 0.0
    %1282 = vmatpush1.msra.mxu0 0.0
    %1283 = vmatprep.subr.mxu0 0.0
    %1284 = vmatpush1.msra.mxu0 0.0
    %1285 = vmatprep.subr.mxu0 0.0
    %1286 = vmatpush1.msra.mxu0 0.0
    %1287 = vmatprep.mubr.f32.mxu0 0.0
    %1288 = vmatmul.mubr.f32.gmra.mrb[0].mxu0 %v982
    %v1289 = vpop.f32.mrb[0].mxu0
    %v1290 = vadd.f32 0.0, %v1289
    %v1291 = vpop.f32.mrb[0].mxu0
    %v1292 = vadd.f32 0.0, %v1291
    %1293 = vdwg.mxu0
    %v1298 = vrot.slane %v1219, 6
    %v1299 = vrot.slane %v1221, 6
    %v1300 = vrot.slane %v1290, 6
    %v1301 = vrot.slane %v1292, 6
    %v1306 = vadd.f32 %v169, %v1298
    %v1307 = vadd.f32 %v171, %v1299
    %v1308 = vadd.f32 %v240, %v1300
    %v1309 = vadd.f32 %v242, %v1301
    %v1310 = vxor.u32 %v1306, 2147483648
    %v1311 = vmul.f32 %v1310, 1.442695
    %v1312 = vpow.pop %v1311
    %v1313 = vadd.f32 %v1312, 1.0
    %v1314 = vrcp.pop %v1313
    %v1315 = vmul.f32 1.0, %v1314
    %v1316 = vxor.u32 %v1307, 2147483648
    %v1317 = vmul.f32 %v1316, 1.442695
    %v1318 = vpow.pop %v1317
    %v1319 = vadd.f32 %v1318, 1.0
    %v1320 = vrcp.pop %v1319
    %v1321 = vmul.f32 1.0, %v1320
    %v1322 = vtanh.pop %v1308
    %v1323 = vxor.u32 %v1309, 2147483648
    %v1324 = vmul.f32 %v1323, 1.442695
    %v1325 = vpow.pop %v1324
    %v1326 = vadd.f32 %v1325, 1.0
    %v1327 = vrcp.pop %v1326
    %v1328 = vmul.f32 1.0, %v1327
    %v1330 = vrot.slane %v976, 7
    %v1332 = vmul.f32 %v1321, %v1330
    %v1333 = vmul.f32 %v1315, %v1322
    %v1334 = vadd.f32 %v1332, %v1333
    %v1335 = vtanh.pop %v1334
    %v1336 = vmul.f32 %v1328, %v1335
    %v1338 = vrot.slane %v1151, 6
    %v1340 = vrot.slane %v1336, 2
    %v1341 = vrot.slane %v1338, 2
    %1344 = vmatprep.subr.mxu0 %v309
    %1345 = vmatpush1.msra.mxu0 %v308
    %1346 = vmatprep.subr.mxu0 %v313
    %1347 = vmatpush1.msra.mxu0 %v312
    %1348 = vmatprep.subr.mxu0 %v317
    %1349 = vmatpush1.msra.mxu0 %v316
    %1350 = vmatprep.subr.mxu0 %v321
    %1351 = vmatpush1.msra.mxu0 %v320
    %1352 = vmatprep.subr.mxu0 %v325
    %1353 = vmatpush1.msra.mxu0 %v324
    %1354 = vmatprep.subr.mxu0 %v329
    %1355 = vmatpush1.msra.mxu0 %v328
    %1356 = vmatprep.subr.mxu0 %v333
    %1357 = vmatpush1.msra.mxu0 %v332
    %1358 = vmatprep.subr.mxu0 %v337
    %1359 = vmatpush1.msra.mxu0 %v336
    %1360 = vmatprep.subr.mxu0 %v341
    %1361 = vmatpush1.msra.mxu0 %v340
    %1362 = vmatprep.subr.mxu0 %v345
    %1363 = vmatpush1.msra.mxu0 %v344
    %1364 = vmatprep.subr.mxu0 %v349
    %1365 = vmatpush1.msra.mxu0 %v348
    %1366 = vmatprep.subr.mxu0 %v353
    %1367 = vmatpush1.msra.mxu0 %v352
    %1368 = vmatprep.subr.mxu0 %v357
    %1369 = vmatpush1.msra.mxu0 %v356
    %1370 = vmatprep.subr.mxu0 %v361
    %1371 = vmatpush1.msra.mxu0 %v360
    %1372 = vmatprep.subr.mxu0 %v365
    %1373 = vmatpush1.msra.mxu0 %v364
    %1374 = vmatprep.subr.mxu0 %v369
    %1375 = vmatpush1.msra.mxu0 %v368
    %1376 = vmatprep.subr.mxu0 %v373
    %1377 = vmatpush1.msra.mxu0 %v372
    %1378 = vmatprep.subr.mxu0 %v377
    %1379 = vmatpush1.msra.mxu0 %v376
    %1380 = vmatprep.subr.mxu0 %v381
    %1381 = vmatpush1.msra.mxu0 %v380
    %1382 = vmatprep.subr.mxu0 %v385
    %1383 = vmatpush1.msra.mxu0 %v384
    %1384 = vmatprep.subr.mxu0 %v389
    %1385 = vmatpush1.msra.mxu0 %v388
    %1386 = vmatprep.subr.mxu0 %v393
    %1387 = vmatpush1.msra.mxu0 %v392
    %1388 = vmatprep.subr.mxu0 %v397
    %1389 = vmatpush1.msra.mxu0 %v396
    %1390 = vmatprep.subr.mxu0 %v401
    %1391 = vmatpush1.msra.mxu0 %v400
    %1392 = vmatprep.subr.mxu0 %v405
    %1393 = vmatpush1.msra.mxu0 %v404
    %1394 = vmatprep.subr.mxu0 %v409
    %1395 = vmatpush1.msra.mxu0 %v408
    %1396 = vmatprep.subr.mxu0 %v413
    %1397 = vmatpush1.msra.mxu0 %v412
    %1398 = vmatprep.subr.mxu0 %v417
    %1399 = vmatpush1.msra.mxu0 %v416
    %1400 = vmatprep.subr.mxu0 %v421
    %1401 = vmatpush1.msra.mxu0 %v420
    %1402 = vmatprep.subr.mxu0 %v425
    %1403 = vmatpush1.msra.mxu0 %v424
    %1404 = vmatprep.subr.mxu0 %v429
    %1405 = vmatpush1.msra.mxu0 %v428
    %1406 = vmatprep.subr.mxu0 %v433
    %1407 = vmatpush1.msra.mxu0 %v432
    %1408 = vmatprep.mubr.f32.mxu0 %v1341
    %1409 = vmatmul.mubr.f32.gmra.mrb[0].mxu0 %v1340
    %v1410 = vpop.f32.mrb[0].mxu0
    %v1411 = vadd.f32 %v611, %v1410
    %v1412 = vpop.f32.mrb[0].mxu0
    %v1413 = vadd.f32 %v615, %v1412
    %1414 = vdwg.mxu0
    %1415 = vmatprep.subr.mxu0 %v311
    %1416 = vmatpush1.msra.mxu0 %v310
    %1417 = vmatprep.subr.mxu0 %v315
    %1418 = vmatpush1.msra.mxu0 %v314
    %1419 = vmatprep.subr.mxu0 %v319
    %1420 = vmatpush1.msra.mxu0 %v318
    %1421 = vmatprep.subr.mxu0 %v323
    %1422 = vmatpush1.msra.mxu0 %v322
    %1423 = vmatprep.subr.mxu0 %v327
    %1424 = vmatpush1.msra.mxu0 %v326
    %1425 = vmatprep.subr.mxu0 %v331
    %1426 = vmatpush1.msra.mxu0 %v330
    %1427 = vmatprep.subr.mxu0 %v335
    %1428 = vmatpush1.msra.mxu0 %v334
    %1429 = vmatprep.subr.mxu0 %v339
    %1430 = vmatpush1.msra.mxu0 %v338
    %1431 = vmatprep.subr.mxu0 %v343
    %1432 = vmatpush1.msra.mxu0 %v342
    %1433 = vmatprep.subr.mxu0 %v347
    %1434 = vmatpush1.msra.mxu0 %v346
    %1435 = vmatprep.subr.mxu0 %v351
    %1436 = vmatpush1.msra.mxu0 %v350
    %1437 = vmatprep.subr.mxu0 %v355
    %1438 = vmatpush1.msra.mxu0 %v354
    %1439 = vmatprep.subr.mxu0 %v359
    %1440 = vmatpush1.msra.mxu0 %v358
    %1441 = vmatprep.subr.mxu0 %v363
    %1442 = vmatpush1.msra.mxu0 %v362
    %1443 = vmatprep.subr.mxu0 %v367
    %1444 = vmatpush1.msra.mxu0 %v366
    %1445 = vmatprep.subr.mxu0 %v371
    %1446 = vmatpush1.msra.mxu0 %v370
    %1447 = vmatprep.subr.mxu0 %v375
    %1448 = vmatpush1.msra.mxu0 %v374
    %1449 = vmatprep.subr.mxu0 %v379
    %1450 = vmatpush1.msra.mxu0 %v378
    %1451 = vmatprep.subr.mxu0 %v383
    %1452 = vmatpush1.msra.mxu0 %v382
    %1453 = vmatprep.subr.mxu0 %v387
    %1454 = vmatpush1.msra.mxu0 %v386
    %1455 = vmatprep.subr.mxu0 %v391
    %1456 = vmatpush1.msra.mxu0 %v390
    %1457 = vmatprep.subr.mxu0 %v395
    %1458 = vmatpush1.msra.mxu0 %v394
    %1459 = vmatprep.subr.mxu0 %v399
    %1460 = vmatpush1.msra.mxu0 %v398
    %1461 = vmatprep.subr.mxu0 %v403
    %1462 = vmatpush1.msra.mxu0 %v402
    %1463 = vmatprep.subr.mxu0 %v407
    %1464 = vmatpush1.msra.mxu0 %v406
    %1465 = vmatprep.subr.mxu0 %v411
    %1466 = vmatpush1.msra.mxu0 %v410
    %1467 = vmatprep.subr.mxu0 %v415
    %1468 = vmatpush1.msra.mxu0 %v414
    %1469 = vmatprep.subr.mxu0 %v419
    %1470 = vmatpush1.msra.mxu0 %v418
    %1471 = vmatprep.subr.mxu0 %v423
    %1472 = vmatpush1.msra.mxu0 %v422
    %1473 = vmatprep.subr.mxu0 %v427
    %1474 = vmatpush1.msra.mxu0 %v426
    %1475 = vmatprep.subr.mxu0 %v431
    %1476 = vmatpush1.msra.mxu0 %v430
    %1477 = vmatprep.subr.mxu0 %v435
    %1478 = vmatpush1.msra.mxu0 %v434
    %1479 = vmatprep.mubr.f32.mxu0 %v1341
    %1480 = vmatmul.mubr.f32.gmra.mrb[0].mxu0 %v1340
    %v1481 = vpop.f32.mrb[0].mxu0
    %v1482 = vadd.f32 %v619, %v1481
    %v1483 = vpop.f32.mrb[0].mxu0
    %v1484 = vadd.f32 %v623, %v1483
    %1485 = vdwg.mxu0
    %v1486 = vxor.u32 %v1411, 2147483648
    %v1487 = vmul.f32 %v1486, 1.442695
    %v1488 = vpow.pop %v1487
    %v1489 = vadd.f32 %v1488, 1.0
    %v1490 = vrcp.pop %v1489
    %v1491 = vmul.f32 1.0, %v1490
    %v1492 = vxor.u32 %v1413, 2147483648
    %v1493 = vmul.f32 %v1492, 1.442695
    %v1494 = vpow.pop %v1493
    %v1495 = vadd.f32 %v1494, 1.0
    %v1496 = vrcp.pop %v1495
    %v1497 = vmul.f32 1.0, %v1496
    %v1498 = vtanh.pop %v1482
    %v1499 = vxor.u32 %v1484, 2147483648
    %v1500 = vmul.f32 %v1499, 1.442695
    %v1501 = vpow.pop %v1500
    %v1502 = vadd.f32 %v1501, 1.0
    %v1503 = vrcp.pop %v1502
    %v1504 = vmul.f32 1.0, %v1503
    %v1505 = vmul.f32 %v1497, %v1149
    %v1506 = vmul.f32 %v1491, %v1498
    %v1507 = vadd.f32 %v1505, %v1506
    %v1508 = vtanh.pop %v1507
    %v1509 = vmul.f32 %v1504, %v1508
    %1510 = vmatprep.subr.mxu0 %v245
    %1511 = vmatpush1.msra.mxu0 %v244
    %1512 = vmatprep.subr.mxu0 %v249
    %1513 = vmatpush1.msra.mxu0 %v248
    %1514 = vmatprep.subr.mxu0 %v253
    %1515 = vmatpush1.msra.mxu0 %v252
    %1516 = vmatprep.subr.mxu0 %v257
    %1517 = vmatpush1.msra.mxu0 %v256
    %1518 = vmatprep.subr.mxu0 %v261
    %1519 = vmatpush1.msra.mxu0 %v260
    %1520 = vmatprep.subr.mxu0 %v265
    %1521 = vmatpush1.msra.mxu0 %v264
    %1522 = vmatprep.subr.mxu0 %v269
    %1523 = vmatpush1.msra.mxu0 %v268
    %1524 = vmatprep.subr.mxu0 %v273
    %1525 = vmatpush1.msra.mxu0 %v272
    %1526 = vmatprep.subr.mxu0 %v277
    %1527 = vmatpush1.msra.mxu0 %v276
    %1528 = vmatprep.subr.mxu0 %v281
    %1529 = vmatpush1.msra.mxu0 %v280
    %1530 = vmatprep.subr.mxu0 %v285
    %1531 = vmatpush1.msra.mxu0 %v284
    %1532 = vmatprep.subr.mxu0 %v289
    %1533 = vmatpush1.msra.mxu0 %v288
    %1534 = vmatprep.subr.mxu0 %v293
    %1535 = vmatpush1.msra.mxu0 %v292
    %1536 = vmatprep.subr.mxu0 %v297
    %1537 = vmatpush1.msra.mxu0 %v296
    %1538 = vmatprep.subr.mxu0 %v301
    %1539 = vmatpush1.msra.mxu0 %v300
    %1540 = vmatprep.subr.mxu0 %v305
    %1541 = vmatpush1.msra.mxu0 %v304
    %1542 = vmatprep.subr.mxu0 0.0
    %1543 = vmatpush1.msra.mxu0 0.0
    %1544 = vmatprep.subr.mxu0 0.0
    %1545 = vmatpush1.msra.mxu0 0.0
    %1546 = vmatprep.subr.mxu0 0.0
    %1547 = vmatpush1.msra.mxu0 0.0
    %1548 = vmatprep.subr.mxu0 0.0
    %1549 = vmatpush1.msra.mxu0 0.0
    %1550 = vmatprep.subr.mxu0 0.0
    %1551 = vmatpush1.msra.mxu0 0.0
    %1552 = vmatprep.subr.mxu0 0.0
    %1553 = vmatpush1.msra.mxu0 0.0
    %1554 = vmatprep.subr.mxu0 0.0
    %1555 = vmatpush1.msra.mxu0 0.0
    %1556 = vmatprep.subr.mxu0 0.0
    %1557 = vmatpush1.msra.mxu0 0.0
    %1558 = vmatprep.subr.mxu0 0.0
    %1559 = vmatpush1.msra.mxu0 0.0
    %1560 = vmatprep.subr.mxu0 0.0
    %1561 = vmatpush1.msra.mxu0 0.0
    %1562 = vmatprep.subr.mxu0 0.0
    %1563 = vmatpush1.msra.mxu0 0.0
    %1564 = vmatprep.subr.mxu0 0.0
    %1565 = vmatpush1.msra.mxu0 0.0
    %1566 = vmatprep.subr.mxu0 0.0
    %1567 = vmatpush1.msra.mxu0 0.0
    %1568 = vmatprep.subr.mxu0 0.0
    %1569 = vmatpush1.msra.mxu0 0.0
    %1570 = vmatprep.subr.mxu0 0.0
    %1571 = vmatpush1.msra.mxu0 0.0
    %1572 = vmatprep.subr.mxu0 0.0
    %1573 = vmatpush1.msra.mxu0 0.0
    %1574 = vmatprep.mubr.f32.mxu0 0.0
    %1575 = vmatmul.mubr.f32.gmra.mrb[0].mxu0 %v1340
    %v1576 = vpop.f32.mrb[0].mxu0
    %v1577 = vadd.f32 0.0, %v1576
    %v1578 = vpop.f32.mrb[0].mxu0
    %v1579 = vadd.f32 0.0, %v1578
    %1580 = vdwg.mxu0
    %1581 = vmatprep.subr.mxu0 %v247
    %1582 = vmatpush1.msra.mxu0 %v246
    %1583 = vmatprep.subr.mxu0 %v251
    %1584 = vmatpush1.msra.mxu0 %v250
    %1585 = vmatprep.subr.mxu0 %v255
    %1586 = vmatpush1.msra.mxu0 %v254
    %1587 = vmatprep.subr.mxu0 %v259
    %1588 = vmatpush1.msra.mxu0 %v258
    %1589 = vmatprep.subr.mxu0 %v263
    %1590 = vmatpush1.msra.mxu0 %v262
    %1591 = vmatprep.subr.mxu0 %v267
    %1592 = vmatpush1.msra.mxu0 %v266
    %1593 = vmatprep.subr.mxu0 %v271
    %1594 = vmatpush1.msra.mxu0 %v270
    %1595 = vmatprep.subr.mxu0 %v275
    %1596 = vmatpush1.msra.mxu0 %v274
    %1597 = vmatprep.subr.mxu0 %v279
    %1598 = vmatpush1.msra.mxu0 %v278
    %1599 = vmatprep.subr.mxu0 %v283
    %1600 = vmatpush1.msra.mxu0 %v282
    %1601 = vmatprep.subr.mxu0 %v287
    %1602 = vmatpush1.msra.mxu0 %v286
    %1603 = vmatprep.subr.mxu0 %v291
    %1604 = vmatpush1.msra.mxu0 %v290
    %1605 = vmatprep.subr.mxu0 %v295
    %1606 = vmatpush1.msra.mxu0 %v294
    %1607 = vmatprep.subr.mxu0 %v299
    %1608 = vmatpush1.msra.mxu0 %v298
    %1609 = vmatprep.subr.mxu0 %v303
    %1610 = vmatpush1.msra.mxu0 %v302
    %1611 = vmatprep.subr.mxu0 %v307
    %1612 = vmatpush1.msra.mxu0 %v306
    %1613 = vmatprep.subr.mxu0 0.0
    %1614 = vmatpush1.msra.mxu0 0.0
    %1615 = vmatprep.subr.mxu0 0.0
    %1616 = vmatpush1.msra.mxu0 0.0
    %1617 = vmatprep.subr.mxu0 0.0
    %1618 = vmatpush1.msra.mxu0 0.0
    %1619 = vmatprep.subr.mxu0 0.0
    %1620 = vmatpush1.msra.mxu0 0.0
    %1621 = vmatprep.subr.mxu0 0.0
    %1622 = vmatpush1.msra.mxu0 0.0
    %1623 = vmatprep.subr.mxu0 0.0
    %1624 = vmatpush1.msra.mxu0 0.0
    %1625 = vmatprep.subr.mxu0 0.0
    %1626 = vmatpush1.msra.mxu0 0.0
    %1627 = vmatprep.subr.mxu0 0.0
    %1628 = vmatpush1.msra.mxu0 0.0
    %1629 = vmatprep.subr.mxu0 0.0
    %1630 = vmatpush1.msra.mxu0 0.0
    %1631 = vmatprep.subr.mxu0 0.0
    %1632 = vmatpush1.msra.mxu0 0.0
    %1633 = vmatprep.subr.mxu0 0.0
    %1634 = vmatpush1.msra.mxu0 0.0
    %1635 = vmatprep.subr.mxu0 0.0
    %1636 = vmatpush1.msra.mxu0 0.0
    %1637 = vmatprep.subr.mxu0 0.0
    %1638 = vmatpush1.msra.mxu0 0.0
    %1639 = vmatprep.subr.mxu0 0.0
    %1640 = vmatpush1.msra.mxu0 0.0
    %1641 = vmatprep.subr.mxu0 0.0
    %1642 = vmatpush1.msra.mxu0 0.0
    %1643 = vmatprep.subr.mxu0 0.0
    %1644 = vmatpush1.msra.mxu0 0.0
    %1645 = vmatprep.mubr.f32.mxu0 0.0
    %1646 = vmatmul.mubr.f32.gmra.mrb[0].mxu0 %v1340
    %v1647 = vpop.f32.mrb[0].mxu0
    %v1648 = vadd.f32 0.0, %v1647
    %v1649 = vpop.f32.mrb[0].mxu0
    %v1650 = vadd.f32 0.0, %v1649
    %1651 = vdwg.mxu0
    %v1656 = vrot.slane %v1577, 5
    %v1657 = vrot.slane %v1579, 5
    %v1658 = vrot.slane %v1648, 5
    %v1659 = vrot.slane %v1650, 5
    %v1664 = vadd.f32 %v169, %v1656
    %v1665 = vadd.f32 %v171, %v1657
    %v1666 = vadd.f32 %v240, %v1658
    %v1667 = vadd.f32 %v242, %v1659
    %v1668 = vxor.u32 %v1664, 2147483648
    %v1669 = vmul.f32 %v1668, 1.442695
    %v1670 = vpow.pop %v1669
    %v1671 = vadd.f32 %v1670, 1.0
    %v1672 = vrcp.pop %v1671
    %v1673 = vmul.f32 1.0, %v1672
    %v1674 = vxor.u32 %v1665, 2147483648
    %v1675 = vmul.f32 %v1674, 1.442695
    %v1676 = vpow.pop %v1675
    %v1677 = vadd.f32 %v1676, 1.0
    %v1678 = vrcp.pop %v1677
    %v1679 = vmul.f32 1.0, %v1678
    %v1680 = vtanh.pop %v1666
    %v1681 = vxor.u32 %v1667, 2147483648
    %v1682 = vmul.f32 %v1681, 1.442695
    %v1683 = vpow.pop %v1682
    %v1684 = vadd.f32 %v1683, 1.0
    %v1685 = vrcp.pop %v1684
    %v1686 = vmul.f32 1.0, %v1685
    %v1688 = vrot.slane %v1334, 7
    %v1690 = vmul.f32 %v1679, %v1688
    %v1691 = vmul.f32 %v1673, %v1680
    %v1692 = vadd.f32 %v1690, %v1691
    %v1693 = vtanh.pop %v1692
    %v1694 = vmul.f32 %v1686, %v1693
    %v1696 = vrot.slane %v1509, 5
    %v1698 = vrot.slane %v1694, 3
    %v1699 = vrot.slane %v1696, 3
    %1702 = vmatprep.subr.mxu0 %v309
    %1703 = vmatpush1.msra.mxu0 %v308
    %1704 = vmatprep.subr.mxu0 %v313
    %1705 = vmatpush1.msra.mxu0 %v312
    %1706 = vmatprep.subr.mxu0 %v317
    %1707 = vmatpush1.msra.mxu0 %v316
    %1708 = vmatprep.subr.mxu0 %v321
    %1709 = vmatpush1.msra.mxu0 %v320
    %1710 = vmatprep.subr.mxu0 %v325
    %1711 = vmatpush1.msra.mxu0 %v324
    %1712 = vmatprep.subr.mxu0 %v329
    %1713 = vmatpush1.msra.mxu0 %v328
    %1714 = vmatprep.subr.mxu0 %v333
    %1715 = vmatpush1.msra.mxu0 %v332
    %1716 = vmatprep.subr.mxu0 %v337
    %1717 = vmatpush1.msra.mxu0 %v336
    %1718 = vmatprep.subr.mxu0 %v341
    %1719 = vmatpush1.msra.mxu0 %v340
    %1720 = vmatprep.subr.mxu0 %v345
    %1721 = vmatpush1.msra.mxu0 %v344
    %1722 = vmatprep.subr.mxu0 %v349
    %1723 = vmatpush1.msra.mxu0 %v348
    %1724 = vmatprep.subr.mxu0 %v353
    %1725 = vmatpush1.msra.mxu0 %v352
    %1726 = vmatprep.subr.mxu0 %v357
    %1727 = vmatpush1.msra.mxu0 %v356
    %1728 = vmatprep.subr.mxu0 %v361
    %1729 = vmatpush1.msra.mxu0 %v360
    %1730 = vmatprep.subr.mxu0 %v365
    %1731 = vmatpush1.msra.mxu0 %v364
    %1732 = vmatprep.subr.mxu0 %v369
    %1733 = vmatpush1.msra.mxu0 %v368
    %1734 = vmatprep.subr.mxu0 %v373
    %1735 = vmatpush1.msra.mxu0 %v372
    %1736 = vmatprep.subr.mxu0 %v377
    %1737 = vmatpush1.msra.mxu0 %v376
    %1738 = vmatprep.subr.mxu0 %v381
    %1739 = vmatpush1.msra.mxu0 %v380
    %1740 = vmatprep.subr.mxu0 %v385
    %1741 = vmatpush1.msra.mxu0 %v384
    %1742 = vmatprep.subr.mxu0 %v389
    %1743 = vmatpush1.msra.mxu0 %v388
    %1744 = vmatprep.subr.mxu0 %v393
    %1745 = vmatpush1.msra.mxu0 %v392
    %1746 = vmatprep.subr.mxu0 %v397
    %1747 = vmatpush1.msra.mxu0 %v396
    %1748 = vmatprep.subr.mxu0 %v401
    %1749 = vmatpush1.msra.mxu0 %v400
    %1750 = vmatprep.subr.mxu0 %v405
    %1751 = vmatpush1.msra.mxu0 %v404
    %1752 = vmatprep.subr.mxu0 %v409
    %1753 = vmatpush1.msra.mxu0 %v408
    %1754 = vmatprep.subr.mxu0 %v413
    %1755 = vmatpush1.msra.mxu0 %v412
    %1756 = vmatprep.subr.mxu0 %v417
    %1757 = vmatpush1.msra.mxu0 %v416
    %1758 = vmatprep.subr.mxu0 %v421
    %1759 = vmatpush1.msra.mxu0 %v420
    %1760 = vmatprep.subr.mxu0 %v425
    %1761 = vmatpush1.msra.mxu0 %v424
    %1762 = vmatprep.subr.mxu0 %v429
    %1763 = vmatpush1.msra.mxu0 %v428
    %1764 = vmatprep.subr.mxu0 %v433
    %1765 = vmatpush1.msra.mxu0 %v432
    %1766 = vmatprep.mubr.f32.mxu0 %v1699
    %1767 = vmatmul.mubr.f32.gmra.mrb[0].mxu0 %v1698
    %v1768 = vpop.f32.mrb[0].mxu0
    %v1769 = vadd.f32 %v611, %v1768
    %v1770 = vpop.f32.mrb[0].mxu0
    %v1771 = vadd.f32 %v615, %v1770
    %1772 = vdwg.mxu0
    %1773 = vmatprep.subr.mxu0 %v311
    %1774 = vmatpush1.msra.mxu0 %v310
    %1775 = vmatprep.subr.mxu0 %v315
    %1776 = vmatpush1.msra.mxu0 %v314
    %1777 = vmatprep.subr.mxu0 %v319
    %1778 = vmatpush1.msra.mxu0 %v318
    %1779 = vmatprep.subr.mxu0 %v323
    %1780 = vmatpush1.msra.mxu0 %v322
    %1781 = vmatprep.subr.mxu0 %v327
    %1782 = vmatpush1.msra.mxu0 %v326
    %1783 = vmatprep.subr.mxu0 %v331
    %1784 = vmatpush1.msra.mxu0 %v330
    %1785 = vmatprep.subr.mxu0 %v335
    %1786 = vmatpush1.msra.mxu0 %v334
    %1787 = vmatprep.subr.mxu0 %v339
    %1788 = vmatpush1.msra.mxu0 %v338
    %1789 = vmatprep.subr.mxu0 %v343
    %1790 = vmatpush1.msra.mxu0 %v342
    %1791 = vmatprep.subr.mxu0 %v347
    %1792 = vmatpush1.msra.mxu0 %v346
    %1793 = vmatprep.subr.mxu0 %v351
    %1794 = vmatpush1.msra.mxu0 %v350
    %1795 = vmatprep.subr.mxu0 %v355
    %1796 = vmatpush1.msra.mxu0 %v354
    %1797 = vmatprep.subr.mxu0 %v359
    %1798 = vmatpush1.msra.mxu0 %v358
    %1799 = vmatprep.subr.mxu0 %v363
    %1800 = vmatpush1.msra.mxu0 %v362
    %1801 = vmatprep.subr.mxu0 %v367
    %1802 = vmatpush1.msra.mxu0 %v366
    %1803 = vmatprep.subr.mxu0 %v371
    %1804 = vmatpush1.msra.mxu0 %v370
    %1805 = vmatprep.subr.mxu0 %v375
    %1806 = vmatpush1.msra.mxu0 %v374
    %1807 = vmatprep.subr.mxu0 %v379
    %1808 = vmatpush1.msra.mxu0 %v378
    %1809 = vmatprep.subr.mxu0 %v383
    %1810 = vmatpush1.msra.mxu0 %v382
    %1811 = vmatprep.subr.mxu0 %v387
    %1812 = vmatpush1.msra.mxu0 %v386
    %1813 = vmatprep.subr.mxu0 %v391
    %1814 = vmatpush1.msra.mxu0 %v390
    %1815 = vmatprep.subr.mxu0 %v395
    %1816 = vmatpush1.msra.mxu0 %v394
    %1817 = vmatprep.subr.mxu0 %v399
    %1818 = vmatpush1.msra.mxu0 %v398
    %1819 = vmatprep.subr.mxu0 %v403
    %1820 = vmatpush1.msra.mxu0 %v402
    %1821 = vmatprep.subr.mxu0 %v407
    %1822 = vmatpush1.msra.mxu0 %v406
    %1823 = vmatprep.subr.mxu0 %v411
    %1824 = vmatpush1.msra.mxu0 %v410
    %1825 = vmatprep.subr.mxu0 %v415
    %1826 = vmatpush1.msra.mxu0 %v414
    %1827 = vmatprep.subr.mxu0 %v419
    %1828 = vmatpush1.msra.mxu0 %v418
    %1829 = vmatprep.subr.mxu0 %v423
    %1830 = vmatpush1.msra.mxu0 %v422
    %1831 = vmatprep.subr.mxu0 %v427
    %1832 = vmatpush1.msra.mxu0 %v426
    %1833 = vmatprep.subr.mxu0 %v431
    %1834 = vmatpush1.msra.mxu0 %v430
    %1835 = vmatprep.subr.mxu0 %v435
    %1836 = vmatpush1.msra.mxu0 %v434
    %1837 = vmatprep.mubr.f32.mxu0 %v1699
    %1838 = vmatmul.mubr.f32.gmra.mrb[0].mxu0 %v1698
    %v1839 = vpop.f32.mrb[0].mxu0
    %v1840 = vadd.f32 %v619, %v1839
    %v1841 = vpop.f32.mrb[0].mxu0
    %v1842 = vadd.f32 %v623, %v1841
    %1843 = vdwg.mxu0
    %v1844 = vxor.u32 %v1769, 2147483648
    %v1845 = vmul.f32 %v1844, 1.442695
    %v1846 = vpow.pop %v1845
    %v1847 = vadd.f32 %v1846, 1.0
    %v1848 = vrcp.pop %v1847
    %v1849 = vmul.f32 1.0, %v1848
    %v1850 = vxor.u32 %v1771, 2147483648
    %v1851 = vmul.f32 %v1850, 1.442695
    %v1852 = vpow.pop %v1851
    %v1853 = vadd.f32 %v1852, 1.0
    %v1854 = vrcp.pop %v1853
    %v1855 = vmul.f32 1.0, %v1854
    %v1856 = vtanh.pop %v1840
    %v1857 = vxor.u32 %v1842, 2147483648
    %v1858 = vmul.f32 %v1857, 1.442695
    %v1859 = vpow.pop %v1858
    %v1860 = vadd.f32 %v1859, 1.0
    %v1861 = vrcp.pop %v1860
    %v1862 = vmul.f32 1.0, %v1861
    %v1863 = vmul.f32 %v1855, %v1507
    %v1864 = vmul.f32 %v1849, %v1856
    %v1865 = vadd.f32 %v1863, %v1864
    %v1866 = vtanh.pop %v1865
    %v1867 = vmul.f32 %v1862, %v1866
    %1868 = vmatprep.subr.mxu0 %v245
    %1869 = vmatpush1.msra.mxu0 %v244
    %1870 = vmatprep.subr.mxu0 %v249
    %1871 = vmatpush1.msra.mxu0 %v248
    %1872 = vmatprep.subr.mxu0 %v253
    %1873 = vmatpush1.msra.mxu0 %v252
    %1874 = vmatprep.subr.mxu0 %v257
    %1875 = vmatpush1.msra.mxu0 %v256
    %1876 = vmatprep.subr.mxu0 %v261
    %1877 = vmatpush1.msra.mxu0 %v260
    %1878 = vmatprep.subr.mxu0 %v265
    %1879 = vmatpush1.msra.mxu0 %v264
    %1880 = vmatprep.subr.mxu0 %v269
    %1881 = vmatpush1.msra.mxu0 %v268
    %1882 = vmatprep.subr.mxu0 %v273
    %1883 = vmatpush1.msra.mxu0 %v272
    %1884 = vmatprep.subr.mxu0 %v277
    %1885 = vmatpush1.msra.mxu0 %v276
    %1886 = vmatprep.subr.mxu0 %v281
    %1887 = vmatpush1.msra.mxu0 %v280
    %1888 = vmatprep.subr.mxu0 %v285
    %1889 = vmatpush1.msra.mxu0 %v284
    %1890 = vmatprep.subr.mxu0 %v289
    %1891 = vmatpush1.msra.mxu0 %v288
    %1892 = vmatprep.subr.mxu0 %v293
    %1893 = vmatpush1.msra.mxu0 %v292
    %1894 = vmatprep.subr.mxu0 %v297
    %1895 = vmatpush1.msra.mxu0 %v296
    %1896 = vmatprep.subr.mxu0 %v301
    %1897 = vmatpush1.msra.mxu0 %v300
    %1898 = vmatprep.subr.mxu0 %v305
    %1899 = vmatpush1.msra.mxu0 %v304
    %1900 = vmatprep.subr.mxu0 0.0
    %1901 = vmatpush1.msra.mxu0 0.0
    %1902 = vmatprep.subr.mxu0 0.0
    %1903 = vmatpush1.msra.mxu0 0.0
    %1904 = vmatprep.subr.mxu0 0.0
    %1905 = vmatpush1.msra.mxu0 0.0
    %1906 = vmatprep.subr.mxu0 0.0
    %1907 = vmatpush1.msra.mxu0 0.0
    %1908 = vmatprep.subr.mxu0 0.0
    %1909 = vmatpush1.msra.mxu0 0.0
    %1910 = vmatprep.subr.mxu0 0.0
    %1911 = vmatpush1.msra.mxu0 0.0
    %1912 = vmatprep.subr.mxu0 0.0
    %1913 = vmatpush1.msra.mxu0 0.0
    %1914 = vmatprep.subr.mxu0 0.0
    %1915 = vmatpush1.msra.mxu0 0.0
    %1916 = vmatprep.subr.mxu0 0.0
    %1917 = vmatpush1.msra.mxu0 0.0
    %1918 = vmatprep.subr.mxu0 0.0
    %1919 = vmatpush1.msra.mxu0 0.0
    %1920 = vmatprep.subr.mxu0 0.0
    %1921 = vmatpush1.msra.mxu0 0.0
    %1922 = vmatprep.subr.mxu0 0.0
    %1923 = vmatpush1.msra.mxu0 0.0
    %1924 = vmatprep.subr.mxu0 0.0
    %1925 = vmatpush1.msra.mxu0 0.0
    %1926 = vmatprep.subr.mxu0 0.0
    %1927 = vmatpush1.msra.mxu0 0.0
    %1928 = vmatprep.subr.mxu0 0.0
    %1929 = vmatpush1.msra.mxu0 0.0
    %1930 = vmatprep.subr.mxu0 0.0
    %1931 = vmatpush1.msra.mxu0 0.0
    %1932 = vmatprep.mubr.f32.mxu0 0.0
    %1933 = vmatmul.mubr.f32.gmra.mrb[0].mxu0 %v1698
    %v1934 = vpop.f32.mrb[0].mxu0
    %v1935 = vadd.f32 0.0, %v1934
    %v1936 = vpop.f32.mrb[0].mxu0
    %v1937 = vadd.f32 0.0, %v1936
    %1938 = vdwg.mxu0
    %1939 = vmatprep.subr.mxu0 %v247
    %1940 = vmatpush1.msra.mxu0 %v246
    %1941 = vmatprep.subr.mxu0 %v251
    %1942 = vmatpush1.msra.mxu0 %v250
    %1943 = vmatprep.subr.mxu0 %v255
    %1944 = vmatpush1.msra.mxu0 %v254
    %1945 = vmatprep.subr.mxu0 %v259
    %1946 = vmatpush1.msra.mxu0 %v258
    %1947 = vmatprep.subr.mxu0 %v263
    %1948 = vmatpush1.msra.mxu0 %v262
    %1949 = vmatprep.subr.mxu0 %v267
    %1950 = vmatpush1.msra.mxu0 %v266
    %1951 = vmatprep.subr.mxu0 %v271
    %1952 = vmatpush1.msra.mxu0 %v270
    %1953 = vmatprep.subr.mxu0 %v275
    %1954 = vmatpush1.msra.mxu0 %v274
    %1955 = vmatprep.subr.mxu0 %v279
    %1956 = vmatpush1.msra.mxu0 %v278
    %1957 = vmatprep.subr.mxu0 %v283
    %1958 = vmatpush1.msra.mxu0 %v282
    %1959 = vmatprep.subr.mxu0 %v287
    %1960 = vmatpush1.msra.mxu0 %v286
    %1961 = vmatprep.subr.mxu0 %v291
    %1962 = vmatpush1.msra.mxu0 %v290
    %1963 = vmatprep.subr.mxu0 %v295
    %1964 = vmatpush1.msra.mxu0 %v294
    %1965 = vmatprep.subr.mxu0 %v299
    %1966 = vmatpush1.msra.mxu0 %v298
    %1967 = vmatprep.subr.mxu0 %v303
    %1968 = vmatpush1.msra.mxu0 %v302
    %1969 = vmatprep.subr.mxu0 %v307
    %1970 = vmatpush1.msra.mxu0 %v306
    %1971 = vmatprep.subr.mxu0 0.0
    %1972 = vmatpush1.msra.mxu0 0.0
    %1973 = vmatprep.subr.mxu0 0.0
    %1974 = vmatpush1.msra.mxu0 0.0
    %1975 = vmatprep.subr.mxu0 0.0
    %1976 = vmatpush1.msra.mxu0 0.0
    %1977 = vmatprep.subr.mxu0 0.0
    %1978 = vmatpush1.msra.mxu0 0.0
    %1979 = vmatprep.subr.mxu0 0.0
    %1980 = vmatpush1.msra.mxu0 0.0
    %1981 = vmatprep.subr.mxu0 0.0
    %1982 = vmatpush1.msra.mxu0 0.0
    %1983 = vmatprep.subr.mxu0 0.0
    %1984 = vmatpush1.msra.mxu0 0.0
    %1985 = vmatprep.subr.mxu0 0.0
    %1986 = vmatpush1.msra.mxu0 0.0
    %1987 = vmatprep.subr.mxu0 0.0
    %1988 = vmatpush1.msra.mxu0 0.0
    %1989 = vmatprep.subr.mxu0 0.0
    %1990 = vmatpush1.msra.mxu0 0.0
    %1991 = vmatprep.subr.mxu0 0.0
    %1992 = vmatpush1.msra.mxu0 0.0
    %1993 = vmatprep.subr.mxu0 0.0
    %1994 = vmatpush1.msra.mxu0 0.0
    %1995 = vmatprep.subr.mxu0 0.0
    %1996 = vmatpush1.msra.mxu0 0.0
    %1997 = vmatprep.subr.mxu0 0.0
    %1998 = vmatpush1.msra.mxu0 0.0
    %1999 = vmatprep.subr.mxu0 0.0
    %2000 = vmatpush1.msra.mxu0 0.0
    %2001 = vmatprep.subr.mxu0 0.0
    %2002 = vmatpush1.msra.mxu0 0.0
    %2003 = vmatprep.mubr.f32.mxu0 0.0
    %2004 = vmatmul.mubr.f32.gmra.mrb[0].mxu0 %v1698
    %v2005 = vpop.f32.mrb[0].mxu0
    %v2006 = vadd.f32 0.0, %v2005
    %v2007 = vpop.f32.mrb[0].mxu0
    %v2008 = vadd.f32 0.0, %v2007
    %2009 = vdwg.mxu0
    %v2014 = vrot.slane %v1935, 4
    %v2015 = vrot.slane %v1937, 4
    %v2016 = vrot.slane %v2006, 4
    %v2017 = vrot.slane %v2008, 4
    %v2022 = vadd.f32 %v169, %v2014
    %v2023 = vadd.f32 %v171, %v2015
    %v2024 = vadd.f32 %v240, %v2016
    %v2025 = vadd.f32 %v242, %v2017
    %v2026 = vxor.u32 %v2022, 2147483648
    %v2027 = vmul.f32 %v2026, 1.442695
    %v2028 = vpow.pop %v2027
    %v2029 = vadd.f32 %v2028, 1.0
    %v2030 = vrcp.pop %v2029
    %v2031 = vmul.f32 1.0, %v2030
    %v2032 = vxor.u32 %v2023, 2147483648
    %v2033 = vmul.f32 %v2032, 1.442695
    %v2034 = vpow.pop %v2033
    %v2035 = vadd.f32 %v2034, 1.0
    %v2036 = vrcp.pop %v2035
    %v2037 = vmul.f32 1.0, %v2036
    %v2038 = vtanh.pop %v2024
    %v2039 = vxor.u32 %v2025, 2147483648
    %v2040 = vmul.f32 %v2039, 1.442695
    %v2041 = vpow.pop %v2040
    %v2042 = vadd.f32 %v2041, 1.0
    %v2043 = vrcp.pop %v2042
    %v2044 = vmul.f32 1.0, %v2043
    %v2046 = vrot.slane %v1692, 7
    %v2048 = vmul.f32 %v2037, %v2046
    %v2049 = vmul.f32 %v2031, %v2038
    %v2050 = vadd.f32 %v2048, %v2049
    %v2051 = vtanh.pop %v2050
    %v2052 = vmul.f32 %v2044, %v2051
    %v2054 = vrot.slane %v1867, 4
    %v2056 = vrot.slane %v2052, 4
    %v2057 = vrot.slane %v2054, 4
    %2060 = vmatprep.subr.mxu0 %v309
    %2061 = vmatpush1.msra.mxu0 %v308
    %2062 = vmatprep.subr.mxu0 %v313
    %2063 = vmatpush1.msra.mxu0 %v312
    %2064 = vmatprep.subr.mxu0 %v317
    %2065 = vmatpush1.msra.mxu0 %v316
    %2066 = vmatprep.subr.mxu0 %v321
    %2067 = vmatpush1.msra.mxu0 %v320
    %2068 = vmatprep.subr.mxu0 %v325
    %2069 = vmatpush1.msra.mxu0 %v324
    %2070 = vmatprep.subr.mxu0 %v329
    %2071 = vmatpush1.msra.mxu0 %v328
    %2072 = vmatprep.subr.mxu0 %v333
    %2073 = vmatpush1.msra.mxu0 %v332
    %2074 = vmatprep.subr.mxu0 %v337
    %2075 = vmatpush1.msra.mxu0 %v336
    %2076 = vmatprep.subr.mxu0 %v341
    %2077 = vmatpush1.msra.mxu0 %v340
    %2078 = vmatprep.subr.mxu0 %v345
    %2079 = vmatpush1.msra.mxu0 %v344
    %2080 = vmatprep.subr.mxu0 %v349
    %2081 = vmatpush1.msra.mxu0 %v348
    %2082 = vmatprep.subr.mxu0 %v353
    %2083 = vmatpush1.msra.mxu0 %v352
    %2084 = vmatprep.subr.mxu0 %v357
    %2085 = vmatpush1.msra.mxu0 %v356
    %2086 = vmatprep.subr.mxu0 %v361
    %2087 = vmatpush1.msra.mxu0 %v360
    %2088 = vmatprep.subr.mxu0 %v365
    %2089 = vmatpush1.msra.mxu0 %v364
    %2090 = vmatprep.subr.mxu0 %v369
    %2091 = vmatpush1.msra.mxu0 %v368
    %2092 = vmatprep.subr.mxu0 %v373
    %2093 = vmatpush1.msra.mxu0 %v372
    %2094 = vmatprep.subr.mxu0 %v377
    %2095 = vmatpush1.msra.mxu0 %v376
    %2096 = vmatprep.subr.mxu0 %v381
    %2097 = vmatpush1.msra.mxu0 %v380
    %2098 = vmatprep.subr.mxu0 %v385
    %2099 = vmatpush1.msra.mxu0 %v384
    %2100 = vmatprep.subr.mxu0 %v389
    %2101 = vmatpush1.msra.mxu0 %v388
    %2102 = vmatprep.subr.mxu0 %v393
    %2103 = vmatpush1.msra.mxu0 %v392
    %2104 = vmatprep.subr.mxu0 %v397
    %2105 = vmatpush1.msra.mxu0 %v396
    %2106 = vmatprep.subr.mxu0 %v401
    %2107 = vmatpush1.msra.mxu0 %v400
    %2108 = vmatprep.subr.mxu0 %v405
    %2109 = vmatpush1.msra.mxu0 %v404
    %2110 = vmatprep.subr.mxu0 %v409
    %2111 = vmatpush1.msra.mxu0 %v408
    %2112 = vmatprep.subr.mxu0 %v413
    %2113 = vmatpush1.msra.mxu0 %v412
    %2114 = vmatprep.subr.mxu0 %v417
    %2115 = vmatpush1.msra.mxu0 %v416
    %2116 = vmatprep.subr.mxu0 %v421
    %2117 = vmatpush1.msra.mxu0 %v420
    %2118 = vmatprep.subr.mxu0 %v425
    %2119 = vmatpush1.msra.mxu0 %v424
    %2120 = vmatprep.subr.mxu0 %v429
    %2121 = vmatpush1.msra.mxu0 %v428
    %2122 = vmatprep.subr.mxu0 %v433
    %2123 = vmatpush1.msra.mxu0 %v432
    %2124 = vmatprep.mubr.f32.mxu0 %v2057
    %2125 = vmatmul.mubr.f32.gmra.mrb[0].mxu0 %v2056
    %v2126 = vpop.f32.mrb[0].mxu0
    %v2127 = vadd.f32 %v611, %v2126
    %v2128 = vpop.f32.mrb[0].mxu0
    %v2129 = vadd.f32 %v615, %v2128
    %2130 = vdwg.mxu0
    %2131 = vmatprep.subr.mxu0 %v311
    %2132 = vmatpush1.msra.mxu0 %v310
    %2133 = vmatprep.subr.mxu0 %v315
    %2134 = vmatpush1.msra.mxu0 %v314
    %2135 = vmatprep.subr.mxu0 %v319
    %2136 = vmatpush1.msra.mxu0 %v318
    %2137 = vmatprep.subr.mxu0 %v323
    %2138 = vmatpush1.msra.mxu0 %v322
    %2139 = vmatprep.subr.mxu0 %v327
    %2140 = vmatpush1.msra.mxu0 %v326
    %2141 = vmatprep.subr.mxu0 %v331
    %2142 = vmatpush1.msra.mxu0 %v330
    %2143 = vmatprep.subr.mxu0 %v335
    %2144 = vmatpush1.msra.mxu0 %v334
    %2145 = vmatprep.subr.mxu0 %v339
    %2146 = vmatpush1.msra.mxu0 %v338
    %2147 = vmatprep.subr.mxu0 %v343
    %2148 = vmatpush1.msra.mxu0 %v342
    %2149 = vmatprep.subr.mxu0 %v347
    %2150 = vmatpush1.msra.mxu0 %v346
    %2151 = vmatprep.subr.mxu0 %v351
    %2152 = vmatpush1.msra.mxu0 %v350
    %2153 = vmatprep.subr.mxu0 %v355
    %2154 = vmatpush1.msra.mxu0 %v354
    %2155 = vmatprep.subr.mxu0 %v359
    %2156 = vmatpush1.msra.mxu0 %v358
    %2157 = vmatprep.subr.mxu0 %v363
    %2158 = vmatpush1.msra.mxu0 %v362
    %2159 = vmatprep.subr.mxu0 %v367
    %2160 = vmatpush1.msra.mxu0 %v366
    %2161 = vmatprep.subr.mxu0 %v371
    %2162 = vmatpush1.msra.mxu0 %v370
    %2163 = vmatprep.subr.mxu0 %v375
    %2164 = vmatpush1.msra.mxu0 %v374
    %2165 = vmatprep.subr.mxu0 %v379
    %2166 = vmatpush1.msra.mxu0 %v378
    %2167 = vmatprep.subr.mxu0 %v383
    %2168 = vmatpush1.msra.mxu0 %v382
    %2169 = vmatprep.subr.mxu0 %v387
    %2170 = vmatpush1.msra.mxu0 %v386
    %2171 = vmatprep.subr.mxu0 %v391
    %2172 = vmatpush1.msra.mxu0 %v390
    %2173 = vmatprep.subr.mxu0 %v395
    %2174 = vmatpush1.msra.mxu0 %v394
    %2175 = vmatprep.subr.mxu0 %v399
    %2176 = vmatpush1.msra.mxu0 %v398
    %2177 = vmatprep.subr.mxu0 %v403
    %2178 = vmatpush1.msra.mxu0 %v402
    %2179 = vmatprep.subr.mxu0 %v407
    %2180 = vmatpush1.msra.mxu0 %v406
    %2181 = vmatprep.subr.mxu0 %v411
    %2182 = vmatpush1.msra.mxu0 %v410
    %2183 = vmatprep.subr.mxu0 %v415
    %2184 = vmatpush1.msra.mxu0 %v414
    %2185 = vmatprep.subr.mxu0 %v419
    %2186 = vmatpush1.msra.mxu0 %v418
    %2187 = vmatprep.subr.mxu0 %v423
    %2188 = vmatpush1.msra.mxu0 %v422
    %2189 = vmatprep.subr.mxu0 %v427
    %2190 = vmatpush1.msra.mxu0 %v426
    %2191 = vmatprep.subr.mxu0 %v431
    %2192 = vmatpush1.msra.mxu0 %v430
    %2193 = vmatprep.subr.mxu0 %v435
    %2194 = vmatpush1.msra.mxu0 %v434
    %2195 = vmatprep.mubr.f32.mxu0 %v2057
    %2196 = vmatmul.mubr.f32.gmra.mrb[0].mxu0 %v2056
    %v2197 = vpop.f32.mrb[0].mxu0
    %v2198 = vadd.f32 %v619, %v2197
    %v2199 = vpop.f32.mrb[0].mxu0
    %v2200 = vadd.f32 %v623, %v2199
    %2201 = vdwg.mxu0
    %v2202 = vxor.u32 %v2127, 2147483648
    %v2203 = vmul.f32 %v2202, 1.442695
    %v2204 = vpow.pop %v2203
    %v2205 = vadd.f32 %v2204, 1.0
    %v2206 = vrcp.pop %v2205
    %v2207 = vmul.f32 1.0, %v2206
    %v2208 = vxor.u32 %v2129, 2147483648
    %v2209 = vmul.f32 %v2208, 1.442695
    %v2210 = vpow.pop %v2209
    %v2211 = vadd.f32 %v2210, 1.0
    %v2212 = vrcp.pop %v2211
    %v2213 = vmul.f32 1.0, %v2212
    %v2214 = vtanh.pop %v2198
    %v2215 = vxor.u32 %v2200, 2147483648
    %v2216 = vmul.f32 %v2215, 1.442695
    %v2217 = vpow.pop %v2216
    %v2218 = vadd.f32 %v2217, 1.0
    %v2219 = vrcp.pop %v2218
    %v2220 = vmul.f32 1.0, %v2219
    %v2221 = vmul.f32 %v2213, %v1865
    %v2222 = vmul.f32 %v2207, %v2214
    %v2223 = vadd.f32 %v2221, %v2222
    %v2224 = vtanh.pop %v2223
    %v2225 = vmul.f32 %v2220, %v2224
    %2226 = vmatprep.subr.mxu0 %v245
    %2227 = vmatpush1.msra.mxu0 %v244
    %2228 = vmatprep.subr.mxu0 %v249
    %2229 = vmatpush1.msra.mxu0 %v248
    %2230 = vmatprep.subr.mxu0 %v253
    %2231 = vmatpush1.msra.mxu0 %v252
    %2232 = vmatprep.subr.mxu0 %v257
    %2233 = vmatpush1.msra.mxu0 %v256
    %2234 = vmatprep.subr.mxu0 %v261
    %2235 = vmatpush1.msra.mxu0 %v260
    %2236 = vmatprep.subr.mxu0 %v265
    %2237 = vmatpush1.msra.mxu0 %v264
    %2238 = vmatprep.subr.mxu0 %v269
    %2239 = vmatpush1.msra.mxu0 %v268
    %2240 = vmatprep.subr.mxu0 %v273
    %2241 = vmatpush1.msra.mxu0 %v272
    %2242 = vmatprep.subr.mxu0 %v277
    %2243 = vmatpush1.msra.mxu0 %v276
    %2244 = vmatprep.subr.mxu0 %v281
    %2245 = vmatpush1.msra.mxu0 %v280
    %2246 = vmatprep.subr.mxu0 %v285
    %2247 = vmatpush1.msra.mxu0 %v284
    %2248 = vmatprep.subr.mxu0 %v289
    %2249 = vmatpush1.msra.mxu0 %v288
    %2250 = vmatprep.subr.mxu0 %v293
    %2251 = vmatpush1.msra.mxu0 %v292
    %2252 = vmatprep.subr.mxu0 %v297
    %2253 = vmatpush1.msra.mxu0 %v296
    %2254 = vmatprep.subr.mxu0 %v301
    %2255 = vmatpush1.msra.mxu0 %v300
    %2256 = vmatprep.subr.mxu0 %v305
    %2257 = vmatpush1.msra.mxu0 %v304
    %2258 = vmatprep.subr.mxu0 0.0
    %2259 = vmatpush1.msra.mxu0 0.0
    %2260 = vmatprep.subr.mxu0 0.0
    %2261 = vmatpush1.msra.mxu0 0.0
    %2262 = vmatprep.subr.mxu0 0.0
    %2263 = vmatpush1.msra.mxu0 0.0
    %2264 = vmatprep.subr.mxu0 0.0
    %2265 = vmatpush1.msra.mxu0 0.0
    %2266 = vmatprep.subr.mxu0 0.0
    %2267 = vmatpush1.msra.mxu0 0.0
    %2268 = vmatprep.subr.mxu0 0.0
    %2269 = vmatpush1.msra.mxu0 0.0
    %2270 = vmatprep.subr.mxu0 0.0
    %2271 = vmatpush1.msra.mxu0 0.0
    %2272 = vmatprep.subr.mxu0 0.0
    %2273 = vmatpush1.msra.mxu0 0.0
    %2274 = vmatprep.subr.mxu0 0.0
    %2275 = vmatpush1.msra.mxu0 0.0
    %2276 = vmatprep.subr.mxu0 0.0
    %2277 = vmatpush1.msra.mxu0 0.0
    %2278 = vmatprep.subr.mxu0 0.0
    %2279 = vmatpush1.msra.mxu0 0.0
    %2280 = vmatprep.subr.mxu0 0.0
    %2281 = vmatpush1.msra.mxu0 0.0
    %2282 = vmatprep.subr.mxu0 0.0
    %2283 = vmatpush1.msra.mxu0 0.0
    %2284 = vmatprep.subr.mxu0 0.0
    %2285 = vmatpush1.msra.mxu0 0.0
    %2286 = vmatprep.subr.mxu0 0.0
    %2287 = vmatpush1.msra.mxu0 0.0
    %2288 = vmatprep.subr.mxu0 0.0
    %2289 = vmatpush1.msra.mxu0 0.0
    %2290 = vmatprep.mubr.f32.mxu0 0.0
    %2291 = vmatmul.mubr.f32.gmra.mrb[0].mxu0 %v2056
    %v2292 = vpop.f32.mrb[0].mxu0
    %v2293 = vadd.f32 0.0, %v2292
    %v2294 = vpop.f32.mrb[0].mxu0
    %v2295 = vadd.f32 0.0, %v2294
    %2296 = vdwg.mxu0
    %2297 = vmatprep.subr.mxu0 %v247
    %2298 = vmatpush1.msra.mxu0 %v246
    %2299 = vmatprep.subr.mxu0 %v251
    %2300 = vmatpush1.msra.mxu0 %v250
    %2301 = vmatprep.subr.mxu0 %v255
    %2302 = vmatpush1.msra.mxu0 %v254
    %2303 = vmatprep.subr.mxu0 %v259
    %2304 = vmatpush1.msra.mxu0 %v258
    %2305 = vmatprep.subr.mxu0 %v263
    %2306 = vmatpush1.msra.mxu0 %v262
    %2307 = vmatprep.subr.mxu0 %v267
    %2308 = vmatpush1.msra.mxu0 %v266
    %2309 = vmatprep.subr.mxu0 %v271
    %2310 = vmatpush1.msra.mxu0 %v270
    %2311 = vmatprep.subr.mxu0 %v275
    %2312 = vmatpush1.msra.mxu0 %v274
    %2313 = vmatprep.subr.mxu0 %v279
    %2314 = vmatpush1.msra.mxu0 %v278
    %2315 = vmatprep.subr.mxu0 %v283
    %2316 = vmatpush1.msra.mxu0 %v282
    %2317 = vmatprep.subr.mxu0 %v287
    %2318 = vmatpush1.msra.mxu0 %v286
    %2319 = vmatprep.subr.mxu0 %v291
    %2320 = vmatpush1.msra.mxu0 %v290
    %2321 = vmatprep.subr.mxu0 %v295
    %2322 = vmatpush1.msra.mxu0 %v294
    %2323 = vmatprep.subr.mxu0 %v299
    %2324 = vmatpush1.msra.mxu0 %v298
    %2325 = vmatprep.subr.mxu0 %v303
    %2326 = vmatpush1.msra.mxu0 %v302
    %2327 = vmatprep.subr.mxu0 %v307
    %2328 = vmatpush1.msra.mxu0 %v306
    %2329 = vmatprep.subr.mxu0 0.0
    %2330 = vmatpush1.msra.mxu0 0.0
    %2331 = vmatprep.subr.mxu0 0.0
    %2332 = vmatpush1.msra.mxu0 0.0
    %2333 = vmatprep.subr.mxu0 0.0
    %2334 = vmatpush1.msra.mxu0 0.0
    %2335 = vmatprep.subr.mxu0 0.0
    %2336 = vmatpush1.msra.mxu0 0.0
    %2337 = vmatprep.subr.mxu0 0.0
    %2338 = vmatpush1.msra.mxu0 0.0
    %2339 = vmatprep.subr.mxu0 0.0
    %2340 = vmatpush1.msra.mxu0 0.0
    %2341 = vmatprep.subr.mxu0 0.0
    %2342 = vmatpush1.msra.mxu0 0.0
    %2343 = vmatprep.subr.mxu0 0.0
    %2344 = vmatpush1.msra.mxu0 0.0
    %2345 = vmatprep.subr.mxu0 0.0
    %2346 = vmatpush1.msra.mxu0 0.0
    %2347 = vmatprep.subr.mxu0 0.0
    %2348 = vmatpush1.msra.mxu0 0.0
    %2349 = vmatprep.subr.mxu0 0.0
    %2350 = vmatpush1.msra.mxu0 0.0
    %2351 = vmatprep.subr.mxu0 0.0
    %2352 = vmatpush1.msra.mxu0 0.0
    %2353 = vmatprep.subr.mxu0 0.0
    %2354 = vmatpush1.msra.mxu0 0.0
    %2355 = vmatprep.subr.mxu0 0.0
    %2356 = vmatpush1.msra.mxu0 0.0
    %2357 = vmatprep.subr.mxu0 0.0
    %2358 = vmatpush1.msra.mxu0 0.0
    %2359 = vmatprep.subr.mxu0 0.0
    %2360 = vmatpush1.msra.mxu0 0.0
    %2361 = vmatprep.mubr.f32.mxu0 0.0
    %2362 = vmatmul.mubr.f32.gmra.mrb[0].mxu0 %v2056
    %v2363 = vpop.f32.mrb[0].mxu0
    %v2364 = vadd.f32 0.0, %v2363
    %v2365 = vpop.f32.mrb[0].mxu0
    %v2366 = vadd.f32 0.0, %v2365
    %2367 = vdwg.mxu0
    %v2372 = vrot.slane %v2293, 3
    %v2373 = vrot.slane %v2295, 3
    %v2374 = vrot.slane %v2364, 3
    %v2375 = vrot.slane %v2366, 3
    %v2380 = vadd.f32 %v169, %v2372
    %v2381 = vadd.f32 %v171, %v2373
    %v2382 = vadd.f32 %v240, %v2374
    %v2383 = vadd.f32 %v242, %v2375
    %v2384 = vxor.u32 %v2380, 2147483648
    %v2385 = vmul.f32 %v2384, 1.442695
    %v2386 = vpow.pop %v2385
    %v2387 = vadd.f32 %v2386, 1.0
    %v2388 = vrcp.pop %v2387
    %v2389 = vmul.f32 1.0, %v2388
    %v2390 = vxor.u32 %v2381, 2147483648
    %v2391 = vmul.f32 %v2390, 1.442695
    %v2392 = vpow.pop %v2391
    %v2393 = vadd.f32 %v2392, 1.0
    %v2394 = vrcp.pop %v2393
    %v2395 = vmul.f32 1.0, %v2394
    %v2396 = vtanh.pop %v2382
    %v2397 = vxor.u32 %v2383, 2147483648
    %v2398 = vmul.f32 %v2397, 1.442695
    %v2399 = vpow.pop %v2398
    %v2400 = vadd.f32 %v2399, 1.0
    %v2401 = vrcp.pop %v2400
    %v2402 = vmul.f32 1.0, %v2401
    %v2404 = vrot.slane %v2050, 7
    %v2406 = vmul.f32 %v2395, %v2404
    %v2407 = vmul.f32 %v2389, %v2396
    %v2408 = vadd.f32 %v2406, %v2407
    %v2409 = vtanh.pop %v2408
    %v2410 = vmul.f32 %v2402, %v2409
    %v2412 = vrot.slane %v2225, 3
    %v2414 = vrot.slane %v2410, 5
    %v2415 = vrot.slane %v2412, 5
    %2418 = vmatprep.subr.mxu0 %v309
    %2419 = vmatpush1.msra.mxu0 %v308
    %2420 = vmatprep.subr.mxu0 %v313
    %2421 = vmatpush1.msra.mxu0 %v312
    %2422 = vmatprep.subr.mxu0 %v317
    %2423 = vmatpush1.msra.mxu0 %v316
    %2424 = vmatprep.subr.mxu0 %v321
    %2425 = vmatpush1.msra.mxu0 %v320
    %2426 = vmatprep.subr.mxu0 %v325
    %2427 = vmatpush1.msra.mxu0 %v324
    %2428 = vmatprep.subr.mxu0 %v329
    %2429 = vmatpush1.msra.mxu0 %v328
    %2430 = vmatprep.subr.mxu0 %v333
    %2431 = vmatpush1.msra.mxu0 %v332
    %2432 = vmatprep.subr.mxu0 %v337
    %2433 = vmatpush1.msra.mxu0 %v336
    %2434 = vmatprep.subr.mxu0 %v341
    %2435 = vmatpush1.msra.mxu0 %v340
    %2436 = vmatprep.subr.mxu0 %v345
    %2437 = vmatpush1.msra.mxu0 %v344
    %2438 = vmatprep.subr.mxu0 %v349
    %2439 = vmatpush1.msra.mxu0 %v348
    %2440 = vmatprep.subr.mxu0 %v353
    %2441 = vmatpush1.msra.mxu0 %v352
    %2442 = vmatprep.subr.mxu0 %v357
    %2443 = vmatpush1.msra.mxu0 %v356
    %2444 = vmatprep.subr.mxu0 %v361
    %2445 = vmatpush1.msra.mxu0 %v360
    %2446 = vmatprep.subr.mxu0 %v365
    %2447 = vmatpush1.msra.mxu0 %v364
    %2448 = vmatprep.subr.mxu0 %v369
    %2449 = vmatpush1.msra.mxu0 %v368
    %2450 = vmatprep.subr.mxu0 %v373
    %2451 = vmatpush1.msra.mxu0 %v372
    %2452 = vmatprep.subr.mxu0 %v377
    %2453 = vmatpush1.msra.mxu0 %v376
    %2454 = vmatprep.subr.mxu0 %v381
    %2455 = vmatpush1.msra.mxu0 %v380
    %2456 = vmatprep.subr.mxu0 %v385
    %2457 = vmatpush1.msra.mxu0 %v384
    %2458 = vmatprep.subr.mxu0 %v389
    %2459 = vmatpush1.msra.mxu0 %v388
    %2460 = vmatprep.subr.mxu0 %v393
    %2461 = vmatpush1.msra.mxu0 %v392
    %2462 = vmatprep.subr.mxu0 %v397
    %2463 = vmatpush1.msra.mxu0 %v396
    %2464 = vmatprep.subr.mxu0 %v401
    %2465 = vmatpush1.msra.mxu0 %v400
    %2466 = vmatprep.subr.mxu0 %v405
    %2467 = vmatpush1.msra.mxu0 %v404
    %2468 = vmatprep.subr.mxu0 %v409
    %2469 = vmatpush1.msra.mxu0 %v408
    %2470 = vmatprep.subr.mxu0 %v413
    %2471 = vmatpush1.msra.mxu0 %v412
    %2472 = vmatprep.subr.mxu0 %v417
    %2473 = vmatpush1.msra.mxu0 %v416
    %2474 = vmatprep.subr.mxu0 %v421
    %2475 = vmatpush1.msra.mxu0 %v420
    %2476 = vmatprep.subr.mxu0 %v425
    %2477 = vmatpush1.msra.mxu0 %v424
    %2478 = vmatprep.subr.mxu0 %v429
    %2479 = vmatpush1.msra.mxu0 %v428
    %2480 = vmatprep.subr.mxu0 %v433
    %2481 = vmatpush1.msra.mxu0 %v432
    %2482 = vmatprep.mubr.f32.mxu0 %v2415
    %2483 = vmatmul.mubr.f32.gmra.mrb[0].mxu0 %v2414
    %v2484 = vpop.f32.mrb[0].mxu0
    %v2485 = vadd.f32 %v611, %v2484
    %v2486 = vpop.f32.mrb[0].mxu0
    %v2487 = vadd.f32 %v615, %v2486
    %2488 = vdwg.mxu0
    %2489 = vmatprep.subr.mxu0 %v311
    %2490 = vmatpush1.msra.mxu0 %v310
    %2491 = vmatprep.subr.mxu0 %v315
    %2492 = vmatpush1.msra.mxu0 %v314
    %2493 = vmatprep.subr.mxu0 %v319
    %2494 = vmatpush1.msra.mxu0 %v318
    %2495 = vmatprep.subr.mxu0 %v323
    %2496 = vmatpush1.msra.mxu0 %v322
    %2497 = vmatprep.subr.mxu0 %v327
    %2498 = vmatpush1.msra.mxu0 %v326
    %2499 = vmatprep.subr.mxu0 %v331
    %2500 = vmatpush1.msra.mxu0 %v330
    %2501 = vmatprep.subr.mxu0 %v335
    %2502 = vmatpush1.msra.mxu0 %v334
    %2503 = vmatprep.subr.mxu0 %v339
    %2504 = vmatpush1.msra.mxu0 %v338
    %2505 = vmatprep.subr.mxu0 %v343
    %2506 = vmatpush1.msra.mxu0 %v342
    %2507 = vmatprep.subr.mxu0 %v347
    %2508 = vmatpush1.msra.mxu0 %v346
    %2509 = vmatprep.subr.mxu0 %v351
    %2510 = vmatpush1.msra.mxu0 %v350
    %2511 = vmatprep.subr.mxu0 %v355
    %2512 = vmatpush1.msra.mxu0 %v354
    %2513 = vmatprep.subr.mxu0 %v359
    %2514 = vmatpush1.msra.mxu0 %v358
    %2515 = vmatprep.subr.mxu0 %v363
    %2516 = vmatpush1.msra.mxu0 %v362
    %2517 = vmatprep.subr.mxu0 %v367
    %2518 = vmatpush1.msra.mxu0 %v366
    %2519 = vmatprep.subr.mxu0 %v371
    %2520 = vmatpush1.msra.mxu0 %v370
    %2521 = vmatprep.subr.mxu0 %v375
    %2522 = vmatpush1.msra.mxu0 %v374
    %2523 = vmatprep.subr.mxu0 %v379
    %2524 = vmatpush1.msra.mxu0 %v378
    %2525 = vmatprep.subr.mxu0 %v383
    %2526 = vmatpush1.msra.mxu0 %v382
    %2527 = vmatprep.subr.mxu0 %v387
    %2528 = vmatpush1.msra.mxu0 %v386
    %2529 = vmatprep.subr.mxu0 %v391
    %2530 = vmatpush1.msra.mxu0 %v390
    %2531 = vmatprep.subr.mxu0 %v395
    %2532 = vmatpush1.msra.mxu0 %v394
    %2533 = vmatprep.subr.mxu0 %v399
    %2534 = vmatpush1.msra.mxu0 %v398
    %2535 = vmatprep.subr.mxu0 %v403
    %2536 = vmatpush1.msra.mxu0 %v402
    %2537 = vmatprep.subr.mxu0 %v407
    %2538 = vmatpush1.msra.mxu0 %v406
    %2539 = vmatprep.subr.mxu0 %v411
    %2540 = vmatpush1.msra.mxu0 %v410
    %2541 = vmatprep.subr.mxu0 %v415
    %2542 = vmatpush1.msra.mxu0 %v414
    %2543 = vmatprep.subr.mxu0 %v419
    %2544 = vmatpush1.msra.mxu0 %v418
    %2545 = vmatprep.subr.mxu0 %v423
    %2546 = vmatpush1.msra.mxu0 %v422
    %2547 = vmatprep.subr.mxu0 %v427
    %2548 = vmatpush1.msra.mxu0 %v426
    %2549 = vmatprep.subr.mxu0 %v431
    %2550 = vmatpush1.msra.mxu0 %v430
    %2551 = vmatprep.subr.mxu0 %v435
    %2552 = vmatpush1.msra.mxu0 %v434
    %2553 = vmatprep.mubr.f32.mxu0 %v2415
    %2554 = vmatmul.mubr.f32.gmra.mrb[0].mxu0 %v2414
    %v2555 = vpop.f32.mrb[0].mxu0
    %v2556 = vadd.f32 %v619, %v2555
    %v2557 = vpop.f32.mrb[0].mxu0
    %v2558 = vadd.f32 %v623, %v2557
    %2559 = vdwg.mxu0
    %v2560 = vxor.u32 %v2485, 2147483648
    %v2561 = vmul.f32 %v2560, 1.442695
    %v2562 = vpow.pop %v2561
    %v2563 = vadd.f32 %v2562, 1.0
    %v2564 = vrcp.pop %v2563
    %v2565 = vmul.f32 1.0, %v2564
    %v2566 = vxor.u32 %v2487, 2147483648
    %v2567 = vmul.f32 %v2566, 1.442695
    %v2568 = vpow.pop %v2567
    %v2569 = vadd.f32 %v2568, 1.0
    %v2570 = vrcp.pop %v2569
    %v2571 = vmul.f32 1.0, %v2570
    %v2572 = vtanh.pop %v2556
    %v2573 = vxor.u32 %v2558, 2147483648
    %v2574 = vmul.f32 %v2573, 1.442695
    %v2575 = vpow.pop %v2574
    %v2576 = vadd.f32 %v2575, 1.0
    %v2577 = vrcp.pop %v2576
    %v2578 = vmul.f32 1.0, %v2577
    %v2579 = vmul.f32 %v2571, %v2223
    %v2580 = vmul.f32 %v2565, %v2572
    %v2581 = vadd.f32 %v2579, %v2580
    %v2582 = vtanh.pop %v2581
    %v2583 = vmul.f32 %v2578, %v2582
    %2584 = vmatprep.subr.mxu0 %v245
    %2585 = vmatpush1.msra.mxu0 %v244
    %2586 = vmatprep.subr.mxu0 %v249
    %2587 = vmatpush1.msra.mxu0 %v248
    %2588 = vmatprep.subr.mxu0 %v253
    %2589 = vmatpush1.msra.mxu0 %v252
    %2590 = vmatprep.subr.mxu0 %v257
    %2591 = vmatpush1.msra.mxu0 %v256
    %2592 = vmatprep.subr.mxu0 %v261
    %2593 = vmatpush1.msra.mxu0 %v260
    %2594 = vmatprep.subr.mxu0 %v265
    %2595 = vmatpush1.msra.mxu0 %v264
    %2596 = vmatprep.subr.mxu0 %v269
    %2597 = vmatpush1.msra.mxu0 %v268
    %2598 = vmatprep.subr.mxu0 %v273
    %2599 = vmatpush1.msra.mxu0 %v272
    %2600 = vmatprep.subr.mxu0 %v277
    %2601 = vmatpush1.msra.mxu0 %v276
    %2602 = vmatprep.subr.mxu0 %v281
    %2603 = vmatpush1.msra.mxu0 %v280
    %2604 = vmatprep.subr.mxu0 %v285
    %2605 = vmatpush1.msra.mxu0 %v284
    %2606 = vmatprep.subr.mxu0 %v289
    %2607 = vmatpush1.msra.mxu0 %v288
    %2608 = vmatprep.subr.mxu0 %v293
    %2609 = vmatpush1.msra.mxu0 %v292
    %2610 = vmatprep.subr.mxu0 %v297
    %2611 = vmatpush1.msra.mxu0 %v296
    %2612 = vmatprep.subr.mxu0 %v301
    %2613 = vmatpush1.msra.mxu0 %v300
    %2614 = vmatprep.subr.mxu0 %v305
    %2615 = vmatpush1.msra.mxu0 %v304
    %2616 = vmatprep.subr.mxu0 0.0
    %2617 = vmatpush1.msra.mxu0 0.0
    %2618 = vmatprep.subr.mxu0 0.0
    %2619 = vmatpush1.msra.mxu0 0.0
    %2620 = vmatprep.subr.mxu0 0.0
    %2621 = vmatpush1.msra.mxu0 0.0
    %2622 = vmatprep.subr.mxu0 0.0
    %2623 = vmatpush1.msra.mxu0 0.0
    %2624 = vmatprep.subr.mxu0 0.0
    %2625 = vmatpush1.msra.mxu0 0.0
    %2626 = vmatprep.subr.mxu0 0.0
    %2627 = vmatpush1.msra.mxu0 0.0
    %2628 = vmatprep.subr.mxu0 0.0
    %2629 = vmatpush1.msra.mxu0 0.0
    %2630 = vmatprep.subr.mxu0 0.0
    %2631 = vmatpush1.msra.mxu0 0.0
    %2632 = vmatprep.subr.mxu0 0.0
    %2633 = vmatpush1.msra.mxu0 0.0
    %2634 = vmatprep.subr.mxu0 0.0
    %2635 = vmatpush1.msra.mxu0 0.0
    %2636 = vmatprep.subr.mxu0 0.0
    %2637 = vmatpush1.msra.mxu0 0.0
    %2638 = vmatprep.subr.mxu0 0.0
    %2639 = vmatpush1.msra.mxu0 0.0
    %2640 = vmatprep.subr.mxu0 0.0
    %2641 = vmatpush1.msra.mxu0 0.0
    %2642 = vmatprep.subr.mxu0 0.0
    %2643 = vmatpush1.msra.mxu0 0.0
    %2644 = vmatprep.subr.mxu0 0.0
    %2645 = vmatpush1.msra.mxu0 0.0
    %2646 = vmatprep.subr.mxu0 0.0
    %2647 = vmatpush1.msra.mxu0 0.0
    %2648 = vmatprep.mubr.f32.mxu0 0.0
    %2649 = vmatmul.mubr.f32.gmra.mrb[0].mxu0 %v2414
    %v2650 = vpop.f32.mrb[0].mxu0
    %v2651 = vadd.f32 0.0, %v2650
    %v2652 = vpop.f32.mrb[0].mxu0
    %v2653 = vadd.f32 0.0, %v2652
    %2654 = vdwg.mxu0
    %2655 = vmatprep.subr.mxu0 %v247
    %2656 = vmatpush1.msra.mxu0 %v246
    %2657 = vmatprep.subr.mxu0 %v251
    %2658 = vmatpush1.msra.mxu0 %v250
    %2659 = vmatprep.subr.mxu0 %v255
    %2660 = vmatpush1.msra.mxu0 %v254
    %2661 = vmatprep.subr.mxu0 %v259
    %2662 = vmatpush1.msra.mxu0 %v258
    %2663 = vmatprep.subr.mxu0 %v263
    %2664 = vmatpush1.msra.mxu0 %v262
    %2665 = vmatprep.subr.mxu0 %v267
    %2666 = vmatpush1.msra.mxu0 %v266
    %2667 = vmatprep.subr.mxu0 %v271
    %2668 = vmatpush1.msra.mxu0 %v270
    %2669 = vmatprep.subr.mxu0 %v275
    %2670 = vmatpush1.msra.mxu0 %v274
    %2671 = vmatprep.subr.mxu0 %v279
    %2672 = vmatpush1.msra.mxu0 %v278
    %2673 = vmatprep.subr.mxu0 %v283
    %2674 = vmatpush1.msra.mxu0 %v282
    %2675 = vmatprep.subr.mxu0 %v287
    %2676 = vmatpush1.msra.mxu0 %v286
    %2677 = vmatprep.subr.mxu0 %v291
    %2678 = vmatpush1.msra.mxu0 %v290
    %2679 = vmatprep.subr.mxu0 %v295
    %2680 = vmatpush1.msra.mxu0 %v294
    %2681 = vmatprep.subr.mxu0 %v299
    %2682 = vmatpush1.msra.mxu0 %v298
    %2683 = vmatprep.subr.mxu0 %v303
    %2684 = vmatpush1.msra.mxu0 %v302
    %2685 = vmatprep.subr.mxu0 %v307
    %2686 = vmatpush1.msra.mxu0 %v306
    %2687 = vmatprep.subr.mxu0 0.0
    %2688 = vmatpush1.msra.mxu0 0.0
    %2689 = vmatprep.subr.mxu0 0.0
    %2690 = vmatpush1.msra.mxu0 0.0
    %2691 = vmatprep.subr.mxu0 0.0
    %2692 = vmatpush1.msra.mxu0 0.0
    %2693 = vmatprep.subr.mxu0 0.0
    %2694 = vmatpush1.msra.mxu0 0.0
    %2695 = vmatprep.subr.mxu0 0.0
    %2696 = vmatpush1.msra.mxu0 0.0
    %2697 = vmatprep.subr.mxu0 0.0
    %2698 = vmatpush1.msra.mxu0 0.0
    %2699 = vmatprep.subr.mxu0 0.0
    %2700 = vmatpush1.msra.mxu0 0.0
    %2701 = vmatprep.subr.mxu0 0.0
    %2702 = vmatpush1.msra.mxu0 0.0
    %2703 = vmatprep.subr.mxu0 0.0
    %2704 = vmatpush1.msra.mxu0 0.0
    %2705 = vmatprep.subr.mxu0 0.0
    %2706 = vmatpush1.msra.mxu0 0.0
    %2707 = vmatprep.subr.mxu0 0.0
    %2708 = vmatpush1.msra.mxu0 0.0
    %2709 = vmatprep.subr.mxu0 0.0
    %2710 = vmatpush1.msra.mxu0 0.0
    %2711 = vmatprep.subr.mxu0 0.0
    %2712 = vmatpush1.msra.mxu0 0.0
    %2713 = vmatprep.subr.mxu0 0.0
    %2714 = vmatpush1.msra.mxu0 0.0
    %2715 = vmatprep.subr.mxu0 0.0
    %2716 = vmatpush1.msra.mxu0 0.0
    %2717 = vmatprep.subr.mxu0 0.0
    %2718 = vmatpush1.msra.mxu0 0.0
    %2719 = vmatprep.mubr.f32.mxu0 0.0
    %2720 = vmatmul.mubr.f32.gmra.mrb[0].mxu0 %v2414
    %v2721 = vpop.f32.mrb[0].mxu0
    %v2722 = vadd.f32 0.0, %v2721
    %v2723 = vpop.f32.mrb[0].mxu0
    %v2724 = vadd.f32 0.0, %v2723
    %2725 = vdwg.mxu0
    %v2730 = vrot.slane %v2651, 2
    %v2731 = vrot.slane %v2653, 2
    %v2732 = vrot.slane %v2722, 2
    %v2733 = vrot.slane %v2724, 2
    %v2738 = vadd.f32 %v169, %v2730
    %v2739 = vadd.f32 %v171, %v2731
    %v2740 = vadd.f32 %v240, %v2732
    %v2741 = vadd.f32 %v242, %v2733
    %v2742 = vxor.u32 %v2738, 2147483648
    %v2743 = vmul.f32 %v2742, 1.442695
    %v2744 = vpow.pop %v2743
    %v2745 = vadd.f32 %v2744, 1.0
    %v2746 = vrcp.pop %v2745
    %v2747 = vmul.f32 1.0, %v2746
    %v2748 = vxor.u32 %v2739, 2147483648
    %v2749 = vmul.f32 %v2748, 1.442695
    %v2750 = vpow.pop %v2749
    %v2751 = vadd.f32 %v2750, 1.0
    %v2752 = vrcp.pop %v2751
    %v2753 = vmul.f32 1.0, %v2752
    %v2754 = vtanh.pop %v2740
    %v2755 = vxor.u32 %v2741, 2147483648
    %v2756 = vmul.f32 %v2755, 1.442695
    %v2757 = vpow.pop %v2756
    %v2758 = vadd.f32 %v2757, 1.0
    %v2759 = vrcp.pop %v2758
    %v2760 = vmul.f32 1.0, %v2759
    %v2762 = vrot.slane %v2408, 7
    %v2764 = vmul.f32 %v2753, %v2762
    %v2765 = vmul.f32 %v2747, %v2754
    %v2766 = vadd.f32 %v2764, %v2765
    %v2767 = vtanh.pop %v2766
    %v2768 = vmul.f32 %v2760, %v2767
    %v2770 = vrot.slane %v2583, 2
    %v2772 = vrot.slane %v2768, 6
    %v2773 = vrot.slane %v2770, 6
    %2776 = vmatprep.subr.mxu0 %v309
    %2777 = vmatpush1.msra.mxu0 %v308
    %2778 = vmatprep.subr.mxu0 %v313
    %2779 = vmatpush1.msra.mxu0 %v312
    %2780 = vmatprep.subr.mxu0 %v317
    %2781 = vmatpush1.msra.mxu0 %v316
    %2782 = vmatprep.subr.mxu0 %v321
    %2783 = vmatpush1.msra.mxu0 %v320
    %2784 = vmatprep.subr.mxu0 %v325
    %2785 = vmatpush1.msra.mxu0 %v324
    %2786 = vmatprep.subr.mxu0 %v329
    %2787 = vmatpush1.msra.mxu0 %v328
    %2788 = vmatprep.subr.mxu0 %v333
    %2789 = vmatpush1.msra.mxu0 %v332
    %2790 = vmatprep.subr.mxu0 %v337
    %2791 = vmatpush1.msra.mxu0 %v336
    %2792 = vmatprep.subr.mxu0 %v341
    %2793 = vmatpush1.msra.mxu0 %v340
    %2794 = vmatprep.subr.mxu0 %v345
    %2795 = vmatpush1.msra.mxu0 %v344
    %2796 = vmatprep.subr.mxu0 %v349
    %2797 = vmatpush1.msra.mxu0 %v348
    %2798 = vmatprep.subr.mxu0 %v353
    %2799 = vmatpush1.msra.mxu0 %v352
    %2800 = vmatprep.subr.mxu0 %v357
    %2801 = vmatpush1.msra.mxu0 %v356
    %2802 = vmatprep.subr.mxu0 %v361
    %2803 = vmatpush1.msra.mxu0 %v360
    %2804 = vmatprep.subr.mxu0 %v365
    %2805 = vmatpush1.msra.mxu0 %v364
    %2806 = vmatprep.subr.mxu0 %v369
    %2807 = vmatpush1.msra.mxu0 %v368
    %2808 = vmatprep.subr.mxu0 %v373
    %2809 = vmatpush1.msra.mxu0 %v372
    %2810 = vmatprep.subr.mxu0 %v377
    %2811 = vmatpush1.msra.mxu0 %v376
    %2812 = vmatprep.subr.mxu0 %v381
    %2813 = vmatpush1.msra.mxu0 %v380
    %2814 = vmatprep.subr.mxu0 %v385
    %2815 = vmatpush1.msra.mxu0 %v384
    %2816 = vmatprep.subr.mxu0 %v389
    %2817 = vmatpush1.msra.mxu0 %v388
    %2818 = vmatprep.subr.mxu0 %v393
    %2819 = vmatpush1.msra.mxu0 %v392
    %2820 = vmatprep.subr.mxu0 %v397
    %2821 = vmatpush1.msra.mxu0 %v396
    %2822 = vmatprep.subr.mxu0 %v401
    %2823 = vmatpush1.msra.mxu0 %v400
    %2824 = vmatprep.subr.mxu0 %v405
    %2825 = vmatpush1.msra.mxu0 %v404
    %2826 = vmatprep.subr.mxu0 %v409
    %2827 = vmatpush1.msra.mxu0 %v408
    %2828 = vmatprep.subr.mxu0 %v413
    %2829 = vmatpush1.msra.mxu0 %v412
    %2830 = vmatprep.subr.mxu0 %v417
    %2831 = vmatpush1.msra.mxu0 %v416
    %2832 = vmatprep.subr.mxu0 %v421
    %2833 = vmatpush1.msra.mxu0 %v420
    %2834 = vmatprep.subr.mxu0 %v425
    %2835 = vmatpush1.msra.mxu0 %v424
    %2836 = vmatprep.subr.mxu0 %v429
    %2837 = vmatpush1.msra.mxu0 %v428
    %2838 = vmatprep.subr.mxu0 %v433
    %2839 = vmatpush1.msra.mxu0 %v432
    %2840 = vmatprep.mubr.f32.mxu0 %v2773
    %2841 = vmatmul.mubr.f32.gmra.mrb[0].mxu0 %v2772
    %v2842 = vpop.f32.mrb[0].mxu0
    %v2843 = vadd.f32 %v611, %v2842
    %v2844 = vpop.f32.mrb[0].mxu0
    %v2845 = vadd.f32 %v615, %v2844
    %2846 = vdwg.mxu0
    %2847 = vmatprep.subr.mxu0 %v311
    %2848 = vmatpush1.msra.mxu0 %v310
    %2849 = vmatprep.subr.mxu0 %v315
    %2850 = vmatpush1.msra.mxu0 %v314
    %2851 = vmatprep.subr.mxu0 %v319
    %2852 = vmatpush1.msra.mxu0 %v318
    %2853 = vmatprep.subr.mxu0 %v323
    %2854 = vmatpush1.msra.mxu0 %v322
    %2855 = vmatprep.subr.mxu0 %v327
    %2856 = vmatpush1.msra.mxu0 %v326
    %2857 = vmatprep.subr.mxu0 %v331
    %2858 = vmatpush1.msra.mxu0 %v330
    %2859 = vmatprep.subr.mxu0 %v335
    %2860 = vmatpush1.msra.mxu0 %v334
    %2861 = vmatprep.subr.mxu0 %v339
    %2862 = vmatpush1.msra.mxu0 %v338
    %2863 = vmatprep.subr.mxu0 %v343
    %2864 = vmatpush1.msra.mxu0 %v342
    %2865 = vmatprep.subr.mxu0 %v347
    %2866 = vmatpush1.msra.mxu0 %v346
    %2867 = vmatprep.subr.mxu0 %v351
    %2868 = vmatpush1.msra.mxu0 %v350
    %2869 = vmatprep.subr.mxu0 %v355
    %2870 = vmatpush1.msra.mxu0 %v354
    %2871 = vmatprep.subr.mxu0 %v359
    %2872 = vmatpush1.msra.mxu0 %v358
    %2873 = vmatprep.subr.mxu0 %v363
    %2874 = vmatpush1.msra.mxu0 %v362
    %2875 = vmatprep.subr.mxu0 %v367
    %2876 = vmatpush1.msra.mxu0 %v366
    %2877 = vmatprep.subr.mxu0 %v371
    %2878 = vmatpush1.msra.mxu0 %v370
    %2879 = vmatprep.subr.mxu0 %v375
    %2880 = vmatpush1.msra.mxu0 %v374
    %2881 = vmatprep.subr.mxu0 %v379
    %2882 = vmatpush1.msra.mxu0 %v378
    %2883 = vmatprep.subr.mxu0 %v383
    %2884 = vmatpush1.msra.mxu0 %v382
    %2885 = vmatprep.subr.mxu0 %v387
    %2886 = vmatpush1.msra.mxu0 %v386
    %2887 = vmatprep.subr.mxu0 %v391
    %2888 = vmatpush1.msra.mxu0 %v390
    %2889 = vmatprep.subr.mxu0 %v395
    %2890 = vmatpush1.msra.mxu0 %v394
    %2891 = vmatprep.subr.mxu0 %v399
    %2892 = vmatpush1.msra.mxu0 %v398
    %2893 = vmatprep.subr.mxu0 %v403
    %2894 = vmatpush1.msra.mxu0 %v402
    %2895 = vmatprep.subr.mxu0 %v407
    %2896 = vmatpush1.msra.mxu0 %v406
    %2897 = vmatprep.subr.mxu0 %v411
    %2898 = vmatpush1.msra.mxu0 %v410
    %2899 = vmatprep.subr.mxu0 %v415
    %2900 = vmatpush1.msra.mxu0 %v414
    %2901 = vmatprep.subr.mxu0 %v419
    %2902 = vmatpush1.msra.mxu0 %v418
    %2903 = vmatprep.subr.mxu0 %v423
    %2904 = vmatpush1.msra.mxu0 %v422
    %2905 = vmatprep.subr.mxu0 %v427
    %2906 = vmatpush1.msra.mxu0 %v426
    %2907 = vmatprep.subr.mxu0 %v431
    %2908 = vmatpush1.msra.mxu0 %v430
    %2909 = vmatprep.subr.mxu0 %v435
    %2910 = vmatpush1.msra.mxu0 %v434
    %2911 = vmatprep.mubr.f32.mxu0 %v2773
    %2912 = vmatmul.mubr.f32.gmra.mrb[0].mxu0 %v2772
    %v2913 = vpop.f32.mrb[0].mxu0
    %v2914 = vadd.f32 %v619, %v2913
    %v2915 = vpop.f32.mrb[0].mxu0
    %v2916 = vadd.f32 %v623, %v2915
    %2917 = vdwg.mxu0
    %v2918 = vxor.u32 %v2843, 2147483648
    %v2919 = vmul.f32 %v2918, 1.442695
    %v2920 = vpow.pop %v2919
    %v2921 = vadd.f32 %v2920, 1.0
    %v2922 = vrcp.pop %v2921
    %v2923 = vmul.f32 1.0, %v2922
    %v2924 = vxor.u32 %v2845, 2147483648
    %v2925 = vmul.f32 %v2924, 1.442695
    %v2926 = vpow.pop %v2925
    %v2927 = vadd.f32 %v2926, 1.0
    %v2928 = vrcp.pop %v2927
    %v2929 = vmul.f32 1.0, %v2928
    %v2930 = vtanh.pop %v2914
    %v2931 = vxor.u32 %v2916, 2147483648
    %v2932 = vmul.f32 %v2931, 1.442695
    %v2933 = vpow.pop %v2932
    %v2934 = vadd.f32 %v2933, 1.0
    %v2935 = vrcp.pop %v2934
    %v2936 = vmul.f32 1.0, %v2935
    %v2937 = vmul.f32 %v2929, %v2581
    %v2938 = vmul.f32 %v2923, %v2930
    %v2939 = vadd.f32 %v2937, %v2938
    %v2940 = vtanh.pop %v2939
    %v2941 = vmul.f32 %v2936, %v2940
    %2942 = vmatprep.subr.mxu0 %v245
    %2943 = vmatpush1.msra.mxu0 %v244
    %2944 = vmatprep.subr.mxu0 %v249
    %2945 = vmatpush1.msra.mxu0 %v248
    %2946 = vmatprep.subr.mxu0 %v253
    %2947 = vmatpush1.msra.mxu0 %v252
    %2948 = vmatprep.subr.mxu0 %v257
    %2949 = vmatpush1.msra.mxu0 %v256
    %2950 = vmatprep.subr.mxu0 %v261
    %2951 = vmatpush1.msra.mxu0 %v260
    %2952 = vmatprep.subr.mxu0 %v265
    %2953 = vmatpush1.msra.mxu0 %v264
    %2954 = vmatprep.subr.mxu0 %v269
    %2955 = vmatpush1.msra.mxu0 %v268
    %2956 = vmatprep.subr.mxu0 %v273
    %2957 = vmatpush1.msra.mxu0 %v272
    %2958 = vmatprep.subr.mxu0 %v277
    %2959 = vmatpush1.msra.mxu0 %v276
    %2960 = vmatprep.subr.mxu0 %v281
    %2961 = vmatpush1.msra.mxu0 %v280
    %2962 = vmatprep.subr.mxu0 %v285
    %2963 = vmatpush1.msra.mxu0 %v284
    %2964 = vmatprep.subr.mxu0 %v289
    %2965 = vmatpush1.msra.mxu0 %v288
    %2966 = vmatprep.subr.mxu0 %v293
    %2967 = vmatpush1.msra.mxu0 %v292
    %2968 = vmatprep.subr.mxu0 %v297
    %2969 = vmatpush1.msra.mxu0 %v296
    %2970 = vmatprep.subr.mxu0 %v301
    %2971 = vmatpush1.msra.mxu0 %v300
    %2972 = vmatprep.subr.mxu0 %v305
    %2973 = vmatpush1.msra.mxu0 %v304
    %2974 = vmatprep.subr.mxu0 0.0
    %2975 = vmatpush1.msra.mxu0 0.0
    %2976 = vmatprep.subr.mxu0 0.0
    %2977 = vmatpush1.msra.mxu0 0.0
    %2978 = vmatprep.subr.mxu0 0.0
    %2979 = vmatpush1.msra.mxu0 0.0
    %2980 = vmatprep.subr.mxu0 0.0
    %2981 = vmatpush1.msra.mxu0 0.0
    %2982 = vmatprep.subr.mxu0 0.0
    %2983 = vmatpush1.msra.mxu0 0.0
    %2984 = vmatprep.subr.mxu0 0.0
    %2985 = vmatpush1.msra.mxu0 0.0
    %2986 = vmatprep.subr.mxu0 0.0
    %2987 = vmatpush1.msra.mxu0 0.0
    %2988 = vmatprep.subr.mxu0 0.0
    %2989 = vmatpush1.msra.mxu0 0.0
    %2990 = vmatprep.subr.mxu0 0.0
    %2991 = vmatpush1.msra.mxu0 0.0
    %2992 = vmatprep.subr.mxu0 0.0
    %2993 = vmatpush1.msra.mxu0 0.0
    %2994 = vmatprep.subr.mxu0 0.0
    %2995 = vmatpush1.msra.mxu0 0.0
    %2996 = vmatprep.subr.mxu0 0.0
    %2997 = vmatpush1.msra.mxu0 0.0
    %2998 = vmatprep.subr.mxu0 0.0
    %2999 = vmatpush1.msra.mxu0 0.0
    %3000 = vmatprep.subr.mxu0 0.0
    %3001 = vmatpush1.msra.mxu0 0.0
    %3002 = vmatprep.subr.mxu0 0.0
    %3003 = vmatpush1.msra.mxu0 0.0
    %3004 = vmatprep.subr.mxu0 0.0
    %3005 = vmatpush1.msra.mxu0 0.0
    %3006 = vmatprep.mubr.f32.mxu0 0.0
    %3007 = vmatmul.mubr.f32.gmra.mrb[0].mxu0 %v2772
    %v3008 = vpop.f32.mrb[0].mxu0
    %v3009 = vadd.f32 0.0, %v3008
    %v3010 = vpop.f32.mrb[0].mxu0
    %v3011 = vadd.f32 0.0, %v3010
    %3012 = vdwg.mxu0
    %3013 = vmatprep.subr.mxu0 %v247
    %3014 = vmatpush1.msra.mxu0 %v246
    %3015 = vmatprep.subr.mxu0 %v251
    %3016 = vmatpush1.msra.mxu0 %v250
    %3017 = vmatprep.subr.mxu0 %v255
    %3018 = vmatpush1.msra.mxu0 %v254
    %3019 = vmatprep.subr.mxu0 %v259
    %3020 = vmatpush1.msra.mxu0 %v258
    %3021 = vmatprep.subr.mxu0 %v263
    %3022 = vmatpush1.msra.mxu0 %v262
    %3023 = vmatprep.subr.mxu0 %v267
    %3024 = vmatpush1.msra.mxu0 %v266
    %3025 = vmatprep.subr.mxu0 %v271
    %3026 = vmatpush1.msra.mxu0 %v270
    %3027 = vmatprep.subr.mxu0 %v275
    %3028 = vmatpush1.msra.mxu0 %v274
    %3029 = vmatprep.subr.mxu0 %v279
    %3030 = vmatpush1.msra.mxu0 %v278
    %3031 = vmatprep.subr.mxu0 %v283
    %3032 = vmatpush1.msra.mxu0 %v282
    %3033 = vmatprep.subr.mxu0 %v287
    %3034 = vmatpush1.msra.mxu0 %v286
    %3035 = vmatprep.subr.mxu0 %v291
    %3036 = vmatpush1.msra.mxu0 %v290
    %3037 = vmatprep.subr.mxu0 %v295
    %3038 = vmatpush1.msra.mxu0 %v294
    %3039 = vmatprep.subr.mxu0 %v299
    %3040 = vmatpush1.msra.mxu0 %v298
    %3041 = vmatprep.subr.mxu0 %v303
    %3042 = vmatpush1.msra.mxu0 %v302
    %3043 = vmatprep.subr.mxu0 %v307
    %3044 = vmatpush1.msra.mxu0 %v306
    %3045 = vmatprep.subr.mxu0 0.0
    %3046 = vmatpush1.msra.mxu0 0.0
    %3047 = vmatprep.subr.mxu0 0.0
    %3048 = vmatpush1.msra.mxu0 0.0
    %3049 = vmatprep.subr.mxu0 0.0
    %3050 = vmatpush1.msra.mxu0 0.0
    %3051 = vmatprep.subr.mxu0 0.0
    %3052 = vmatpush1.msra.mxu0 0.0
    %3053 = vmatprep.subr.mxu0 0.0
    %3054 = vmatpush1.msra.mxu0 0.0
    %3055 = vmatprep.subr.mxu0 0.0
    %3056 = vmatpush1.msra.mxu0 0.0
    %3057 = vmatprep.subr.mxu0 0.0
    %3058 = vmatpush1.msra.mxu0 0.0
    %3059 = vmatprep.subr.mxu0 0.0
    %3060 = vmatpush1.msra.mxu0 0.0
    %3061 = vmatprep.subr.mxu0 0.0
    %3062 = vmatpush1.msra.mxu0 0.0
    %3063 = vmatprep.subr.mxu0 0.0
    %3064 = vmatpush1.msra.mxu0 0.0
    %3065 = vmatprep.subr.mxu0 0.0
    %3066 = vmatpush1.msra.mxu0 0.0
    %3067 = vmatprep.subr.mxu0 0.0
    %3068 = vmatpush1.msra.mxu0 0.0
    %3069 = vmatprep.subr.mxu0 0.0
    %3070 = vmatpush1.msra.mxu0 0.0
    %3071 = vmatprep.subr.mxu0 0.0
    %3072 = vmatpush1.msra.mxu0 0.0
    %3073 = vmatprep.subr.mxu0 0.0
    %3074 = vmatpush1.msra.mxu0 0.0
    %3075 = vmatprep.subr.mxu0 0.0
    %3076 = vmatpush1.msra.mxu0 0.0
    %3077 = vmatprep.mubr.f32.mxu0 0.0
    %3078 = vmatmul.mubr.f32.gmra.mrb[0].mxu0 %v2772
    %v3079 = vpop.f32.mrb[0].mxu0
    %v3080 = vadd.f32 0.0, %v3079
    %v3081 = vpop.f32.mrb[0].mxu0
    %v3082 = vadd.f32 0.0, %v3081
    %3083 = vdwg.mxu0
    %v3088 = vrot.slane %v3009, 1
    %v3089 = vrot.slane %v3011, 1
    %v3090 = vrot.slane %v3080, 1
    %v3091 = vrot.slane %v3082, 1
    %v3096 = vadd.f32 %v169, %v3088
    %v3097 = vadd.f32 %v171, %v3089
    %v3098 = vadd.f32 %v240, %v3090
    %v3099 = vadd.f32 %v242, %v3091
    %v3100 = vxor.u32 %v3096, 2147483648
    %v3101 = vmul.f32 %v3100, 1.442695
    %v3102 = vpow.pop %v3101
    %v3103 = vadd.f32 %v3102, 1.0
    %v3104 = vrcp.pop %v3103
    %v3105 = vmul.f32 1.0, %v3104
    %v3106 = vxor.u32 %v3097, 2147483648
    %v3107 = vmul.f32 %v3106, 1.442695
    %v3108 = vpow.pop %v3107
    %v3109 = vadd.f32 %v3108, 1.0
    %v3110 = vrcp.pop %v3109
    %v3111 = vmul.f32 1.0, %v3110
    %v3112 = vtanh.pop %v3098
    %v3113 = vxor.u32 %v3099, 2147483648
    %v3114 = vmul.f32 %v3113, 1.442695
    %v3115 = vpow.pop %v3114
    %v3116 = vadd.f32 %v3115, 1.0
    %v3117 = vrcp.pop %v3116
    %v3118 = vmul.f32 1.0, %v3117
    %v3120 = vrot.slane %v2766, 7
    %v3122 = vmul.f32 %v3111, %v3120
    %v3123 = vmul.f32 %v3105, %v3112
    %v3124 = vadd.f32 %v3122, %v3123
    %v3125 = vtanh.pop %v3124
    %v3126 = vmul.f32 %v3118, %v3125
    %v3128 = vrot.slane %v2941, 1
    %v3130 = vrot.slane %v3126, 7
    %v3131 = vrot.slane %v3128, 7
    %3134 = vmatprep.subr.mxu0 %v309
    %3135 = vmatpush1.msra.mxu0 %v308
    %3136 = vmatprep.subr.mxu0 %v313
    %3137 = vmatpush1.msra.mxu0 %v312
    %3138 = vmatprep.subr.mxu0 %v317
    %3139 = vmatpush1.msra.mxu0 %v316
    %3140 = vmatprep.subr.mxu0 %v321
    %3141 = vmatpush1.msra.mxu0 %v320
    %3142 = vmatprep.subr.mxu0 %v325
    %3143 = vmatpush1.msra.mxu0 %v324
    %3144 = vmatprep.subr.mxu0 %v329
    %3145 = vmatpush1.msra.mxu0 %v328
    %3146 = vmatprep.subr.mxu0 %v333
    %3147 = vmatpush1.msra.mxu0 %v332
    %3148 = vmatprep.subr.mxu0 %v337
    %3149 = vmatpush1.msra.mxu0 %v336
    %3150 = vmatprep.subr.mxu0 %v341
    %3151 = vmatpush1.msra.mxu0 %v340
    %3152 = vmatprep.subr.mxu0 %v345
    %3153 = vmatpush1.msra.mxu0 %v344
    %3154 = vmatprep.subr.mxu0 %v349
    %3155 = vmatpush1.msra.mxu0 %v348
    %3156 = vmatprep.subr.mxu0 %v353
    %3157 = vmatpush1.msra.mxu0 %v352
    %3158 = vmatprep.subr.mxu0 %v357
    %3159 = vmatpush1.msra.mxu0 %v356
    %3160 = vmatprep.subr.mxu0 %v361
    %3161 = vmatpush1.msra.mxu0 %v360
    %3162 = vmatprep.subr.mxu0 %v365
    %3163 = vmatpush1.msra.mxu0 %v364
    %3164 = vmatprep.subr.mxu0 %v369
    %3165 = vmatpush1.msra.mxu0 %v368
    %3166 = vmatprep.subr.mxu0 %v373
    %3167 = vmatpush1.msra.mxu0 %v372
    %3168 = vmatprep.subr.mxu0 %v377
    %3169 = vmatpush1.msra.mxu0 %v376
    %3170 = vmatprep.subr.mxu0 %v381
    %3171 = vmatpush1.msra.mxu0 %v380
    %3172 = vmatprep.subr.mxu0 %v385
    %3173 = vmatpush1.msra.mxu0 %v384
    %3174 = vmatprep.subr.mxu0 %v389
    %3175 = vmatpush1.msra.mxu0 %v388
    %3176 = vmatprep.subr.mxu0 %v393
    %3177 = vmatpush1.msra.mxu0 %v392
    %3178 = vmatprep.subr.mxu0 %v397
    %3179 = vmatpush1.msra.mxu0 %v396
    %3180 = vmatprep.subr.mxu0 %v401
    %3181 = vmatpush1.msra.mxu0 %v400
    %3182 = vmatprep.subr.mxu0 %v405
    %3183 = vmatpush1.msra.mxu0 %v404
    %3184 = vmatprep.subr.mxu0 %v409
    %3185 = vmatpush1.msra.mxu0 %v408
    %3186 = vmatprep.subr.mxu0 %v413
    %3187 = vmatpush1.msra.mxu0 %v412
    %3188 = vmatprep.subr.mxu0 %v417
    %3189 = vmatpush1.msra.mxu0 %v416
    %3190 = vmatprep.subr.mxu0 %v421
    %3191 = vmatpush1.msra.mxu0 %v420
    %3192 = vmatprep.subr.mxu0 %v425
    %3193 = vmatpush1.msra.mxu0 %v424
    %3194 = vmatprep.subr.mxu0 %v429
    %3195 = vmatpush1.msra.mxu0 %v428
    %3196 = vmatprep.subr.mxu0 %v433
    %3197 = vmatpush1.msra.mxu0 %v432
    %3198 = vmatprep.mubr.f32.mxu0 %v3131
    %3199 = vmatmul.mubr.f32.gmra.mrb[0].mxu0 %v3130
    %v3200 = vpop.f32.mrb[0].mxu0
    %v3201 = vadd.f32 %v611, %v3200
    %v3202 = vpop.f32.mrb[0].mxu0
    %v3203 = vadd.f32 %v615, %v3202
    %3204 = vdwg.mxu0
    %3205 = vmatprep.subr.mxu0 %v311
    %3206 = vmatpush1.msra.mxu0 %v310
    %3207 = vmatprep.subr.mxu0 %v315
    %3208 = vmatpush1.msra.mxu0 %v314
    %3209 = vmatprep.subr.mxu0 %v319
    %3210 = vmatpush1.msra.mxu0 %v318
    %3211 = vmatprep.subr.mxu0 %v323
    %3212 = vmatpush1.msra.mxu0 %v322
    %3213 = vmatprep.subr.mxu0 %v327
    %3214 = vmatpush1.msra.mxu0 %v326
    %3215 = vmatprep.subr.mxu0 %v331
    %3216 = vmatpush1.msra.mxu0 %v330
    %3217 = vmatprep.subr.mxu0 %v335
    %3218 = vmatpush1.msra.mxu0 %v334
    %3219 = vmatprep.subr.mxu0 %v339
    %3220 = vmatpush1.msra.mxu0 %v338
    %3221 = vmatprep.subr.mxu0 %v343
    %3222 = vmatpush1.msra.mxu0 %v342
    %3223 = vmatprep.subr.mxu0 %v347
    %3224 = vmatpush1.msra.mxu0 %v346
    %3225 = vmatprep.subr.mxu0 %v351
    %3226 = vmatpush1.msra.mxu0 %v350
    %3227 = vmatprep.subr.mxu0 %v355
    %3228 = vmatpush1.msra.mxu0 %v354
    %3229 = vmatprep.subr.mxu0 %v359
    %3230 = vmatpush1.msra.mxu0 %v358
    %3231 = vmatprep.subr.mxu0 %v363
    %3232 = vmatpush1.msra.mxu0 %v362
    %3233 = vmatprep.subr.mxu0 %v367
    %3234 = vmatpush1.msra.mxu0 %v366
    %3235 = vmatprep.subr.mxu0 %v371
    %3236 = vmatpush1.msra.mxu0 %v370
    %3237 = vmatprep.subr.mxu0 %v375
    %3238 = vmatpush1.msra.mxu0 %v374
    %3239 = vmatprep.subr.mxu0 %v379
    %3240 = vmatpush1.msra.mxu0 %v378
    %3241 = vmatprep.subr.mxu0 %v383
    %3242 = vmatpush1.msra.mxu0 %v382
    %3243 = vmatprep.subr.mxu0 %v387
    %3244 = vmatpush1.msra.mxu0 %v386
    %3245 = vmatprep.subr.mxu0 %v391
    %3246 = vmatpush1.msra.mxu0 %v390
    %3247 = vmatprep.subr.mxu0 %v395
    %3248 = vmatpush1.msra.mxu0 %v394
    %3249 = vmatprep.subr.mxu0 %v399
    %3250 = vmatpush1.msra.mxu0 %v398
    %3251 = vmatprep.subr.mxu0 %v403
    %3252 = vmatpush1.msra.mxu0 %v402
    %3253 = vmatprep.subr.mxu0 %v407
    %3254 = vmatpush1.msra.mxu0 %v406
    %3255 = vmatprep.subr.mxu0 %v411
    %3256 = vmatpush1.msra.mxu0 %v410
    %3257 = vmatprep.subr.mxu0 %v415
    %3258 = vmatpush1.msra.mxu0 %v414
    %3259 = vmatprep.subr.mxu0 %v419
    %3260 = vmatpush1.msra.mxu0 %v418
    %3261 = vmatprep.subr.mxu0 %v423
    %3262 = vmatpush1.msra.mxu0 %v422
    %3263 = vmatprep.subr.mxu0 %v427
    %3264 = vmatpush1.msra.mxu0 %v426
    %3265 = vmatprep.subr.mxu0 %v431
    %3266 = vmatpush1.msra.mxu0 %v430
    %3267 = vmatprep.subr.mxu0 %v435
    %3268 = vmatpush1.msra.mxu0 %v434
    %3269 = vmatprep.mubr.f32.mxu0 %v3131
    %3270 = vmatmul.mubr.f32.gmra.mrb[0].mxu0 %v3130
    %v3271 = vpop.f32.mrb[0].mxu0
    %v3272 = vadd.f32 %v619, %v3271
    %v3273 = vpop.f32.mrb[0].mxu0
    %v3274 = vadd.f32 %v623, %v3273
    %3275 = vdwg.mxu0
    %v3276 = vxor.u32 %v3201, 2147483648
    %v3277 = vmul.f32 %v3276, 1.442695
    %v3278 = vpow.pop %v3277
    %v3279 = vadd.f32 %v3278, 1.0
    %v3280 = vrcp.pop %v3279
    %v3281 = vmul.f32 1.0, %v3280
    %v3282 = vxor.u32 %v3203, 2147483648
    %v3283 = vmul.f32 %v3282, 1.442695
    %v3284 = vpow.pop %v3283
    %v3285 = vadd.f32 %v3284, 1.0
    %v3286 = vrcp.pop %v3285
    %v3287 = vmul.f32 1.0, %v3286
    %v3288 = vtanh.pop %v3272
    %v3289 = vxor.u32 %v3274, 2147483648
    %v3290 = vmul.f32 %v3289, 1.442695
    %v3291 = vpow.pop %v3290
    %v3292 = vadd.f32 %v3291, 1.0
    %v3293 = vrcp.pop %v3292
    %v3294 = vmul.f32 1.0, %v3293
    %v3295 = vmul.f32 %v3287, %v2939
    %v3296 = vmul.f32 %v3281, %v3288
    %v3297 = vadd.f32 %v3295, %v3296
    %v3298 = vtanh.pop %v3297
    %v3299 = vmul.f32 %v3294, %v3298
    %v3300 = vld [vmem:[%s6] sm:$0xff]
    %v3301 = vld [vmem:[%s6 + $0x8] sm:$0xff]
    %v3302 = vld [vmem:[%s6 + $0x10] sm:$0xff]
    %v3303 = vld [vmem:[%s6 + $0x18] sm:$0xff]
    %v3304 = vld [vmem:[%s6 + $0x20] sm:$0xff]
    %v3305 = vld [vmem:[%s6 + $0x28] sm:$0xff]
    %v3306 = vld [vmem:[%s6 + $0x30] sm:$0xff]
    %v3307 = vld [vmem:[%s6 + $0x38] sm:$0xff]
    %v3308 = vld [vmem:[%s6 + $0x40] sm:$0xff]
    %v3309 = vld [vmem:[%s6 + $0x48] sm:$0xff]
    %v3310 = vld [vmem:[%s6 + $0x50] sm:$0xff]
    %v3311 = vld [vmem:[%s6 + $0x58] sm:$0xff]
    %v3312 = vld [vmem:[%s6 + $0x60] sm:$0xff]
    %v3313 = vld [vmem:[%s6 + $0x68] sm:$0xff]
    %v3314 = vld [vmem:[%s6 + $0x70] sm:$0xff]
    %v3315 = vld [vmem:[%s6 + $0x78] sm:$0xff]
    %v3316 = vld [vmem:[#allocation2] sm:$0x1]
    %3317 = vmatprep.subr.mxu0 0.0
    %3318 = vmatpush1.msra.mxu0 %v3300
    %3319 = vmatprep.subr.mxu0 0.0
    %3320 = vmatpush1.msra.mxu0 %v3301
    %3321 = vmatprep.subr.mxu0 0.0
    %3322 = vmatpush1.msra.mxu0 %v3302
    %3323 = vmatprep.subr.mxu0 0.0
    %3324 = vmatpush1.msra.mxu0 %v3303
    %3325 = vmatprep.subr.mxu0 0.0
    %3326 = vmatpush1.msra.mxu0 %v3304
    %3327 = vmatprep.subr.mxu0 0.0
    %3328 = vmatpush1.msra.mxu0 %v3305
    %3329 = vmatprep.subr.mxu0 0.0
    %3330 = vmatpush1.msra.mxu0 %v3306
    %3331 = vmatprep.subr.mxu0 0.0
    %3332 = vmatpush1.msra.mxu0 %v3307
    %3333 = vmatprep.subr.mxu0 0.0
    %3334 = vmatpush1.msra.mxu0 %v3308
    %3335 = vmatprep.subr.mxu0 0.0
    %3336 = vmatpush1.msra.mxu0 %v3309
    %3337 = vmatprep.subr.mxu0 0.0
    %3338 = vmatpush1.msra.mxu0 %v3310
    %3339 = vmatprep.subr.mxu0 0.0
    %3340 = vmatpush1.msra.mxu0 %v3311
    %3341 = vmatprep.subr.mxu0 0.0
    %3342 = vmatpush1.msra.mxu0 %v3312
    %3343 = vmatprep.subr.mxu0 0.0
    %3344 = vmatpush1.msra.mxu0 %v3313
    %3345 = vmatprep.subr.mxu0 0.0
    %3346 = vmatpush1.msra.mxu0 %v3314
    %3347 = vmatprep.subr.mxu0 0.0
    %3348 = vmatpush1.msra.mxu0 %v3315
    %3349 = vmatprep.subr.mxu0 0.0
    %3350 = vmatpush1.msra.mxu0 0.0
    %3351 = vmatprep.subr.mxu0 0.0
    %3352 = vmatpush1.msra.mxu0 0.0
    %3353 = vmatprep.subr.mxu0 0.0
    %3354 = vmatpush1.msra.mxu0 0.0
    %3355 = vmatprep.subr.mxu0 0.0
    %3356 = vmatpush1.msra.mxu0 0.0
    %3357 = vmatprep.subr.mxu0 0.0
    %3358 = vmatpush1.msra.mxu0 0.0
    %3359 = vmatprep.subr.mxu0 0.0
    %3360 = vmatpush1.msra.mxu0 0.0
    %3361 = vmatprep.subr.mxu0 0.0
    %3362 = vmatpush1.msra.mxu0 0.0
    %3363 = vmatprep.subr.mxu0 0.0
    %3364 = vmatpush1.msra.mxu0 0.0
    %3365 = vmatprep.subr.mxu0 0.0
    %3366 = vmatpush1.msra.mxu0 0.0
    %3367 = vmatprep.subr.mxu0 0.0
    %3368 = vmatpush1.msra.mxu0 0.0
    %3369 = vmatprep.subr.mxu0 0.0
    %3370 = vmatpush1.msra.mxu0 0.0
    %3371 = vmatprep.subr.mxu0 0.0
    %3372 = vmatpush1.msra.mxu0 0.0
    %3373 = vmatprep.subr.mxu0 0.0
    %3374 = vmatpush1.msra.mxu0 0.0
    %3375 = vmatprep.subr.mxu0 0.0
    %3376 = vmatpush1.msra.mxu0 0.0
    %3377 = vmatprep.subr.mxu0 0.0
    %3378 = vmatpush1.msra.mxu0 0.0
    %3379 = vmatprep.subr.mxu0 0.0
    %3380 = vmatpush1.msra.mxu0 0.0
    %3381 = vmatprep.mubr.f32.mxu0 0.0
    %3382 = vmatmul.mubr.f32.gmra.mrb[0].mxu0 %v3299
    %v3383 = vpop.f32.mrb[0].mxu0
    %v3384 = vadd.f32 %v3316, %v3383
    %v3385 = vpop.f32.mrb[0].mxu0
    %3386 = vdwg.mxu0
    %vm3387 = vcmask 0
    %3388 = vst.msk [vmem:[#allocation8] sm:$0x1] %vm3387, %v3384
    // Predicated region
    $region42: #{tpu_custom_call.1} parent=1 // pred_check
      _
    $region43: #{tpu_custom_call.1} parent=1 // pred_check_branch
      %3390 = sbr.rel (0) target = $region45
    $region44: #{tpu_custom_call.1} parent=1 // pred_region
      %s3392 = ssub.s32 16, 16
      %3393 = vsyncadd [#allocation5], %s3392
      %s3395 = sshll.u32 [#allocation8], 4
      %s3396 = int_to_ptr.vmem [resolvable:$true] %s3395
      %3398 = dma.vmem_to_hbm [thread:$0]  %s3396, 16, %s8, [#allocation5]
    $region45: #{tpu_custom_call.1} parent=1 // pred_fallthru
      _
    // Predicated region
    $region46: #{tpu_custom_call.1} parent=1 // pred_check
      _
    $region47: #{tpu_custom_call.1} parent=1 // pred_check_branch
      %3400 = sbr.rel (0) target = $region49
    $region48: #{tpu_custom_call.1} parent=1 // pred_region
      %3401 = dma.done [#allocation5], 16
    $region49: #{tpu_custom_call.1} parent=1 // pred_fallthru
      _
    %3402 = vsyncpa [#allocation4], 1
    %3403 = vsyncpa [#allocation7], 1
    %3404 = vsyncpa [#allocation5], 1

</llo_original>
